<compile_context>
chip_gen: v7x
topology: tpu7x:2x2x1
jax: 0.10.0
libtpu: 0.0.40
codegen_flags: <defaults>
</compile_context>

<pallas_src>
import jax
import jax.numpy as jnp
from jax.experimental import pallas as pl
from jax.experimental.pallas import tpu as pltpu  # noqa: F401


REFS_PER_LAYER = 8  # w, att_mat, S, S^T, eye_tiled, counts_tiled, scale, shift


def _gat_bn_layer(x, w_ref, a_ref, s_ref, st_ref, eyet_ref, cnt_ref,
                  scale_ref, shift_ref, *, heads, out_dim, apply_relu):
    """One GATConv(concat=False) + BatchNorm1d(eval) [+ ReLU] layer on VMEM values."""
    n = x.shape[0]
    f32 = jnp.float32

    # 1) Linear transform for all heads at once (MXU, bf16 in / f32 accumulate).
    xw = jnp.dot(x.astype(jnp.bfloat16), w_ref[...],
                 preferred_element_type=f32)                         # (N, H*Dh)

    # 2) All per-head attention coefficients with one tiny matmul against the
    #    block-diagonal [att_src | att_dst] matrix.
    alphas = jnp.dot(xw, a_ref[...], preferred_element_type=f32)     # (N, 2H)
    alpha_src = alphas[:, :heads]                                    # (N, H)
    alpha_dst = alphas[:, heads:]                                    # (N, H)

    s_mat = s_ref[...]                                               # (H, H*N), 0/1
    # dst term, lane-packed: [i, h*N+j] = alpha_dst[i, h]  (MXU broadcast, no XLU).
    dst_packed = jnp.dot(alpha_dst, s_mat, preferred_element_type=f32)   # (N, H*N)
    # src term as one packed row: [0, h*N+j] = alpha_src[j, h]. Scatter alpha_src
    # onto the per-head block diagonal, then collapse rows — all MXU/VPU, no
    # transpose / reshape / lane-concat.
    diag_src = eyet_ref[...] * jnp.dot(alpha_src, s_mat,
                                       preferred_element_type=f32)   # (N, H*N)
    src_row = jnp.dot(jnp.ones((1, n), f32), diag_src,
                      preferred_element_type=f32)                    # (1, H*N)

    # 3) Packed scores: e[i, h*N+j] = LeakyReLU(alpha_dst[i,h] + alpha_src[j,h]).
    e = dst_packed + src_row
    e = jnp.where(e > 0, e, 0.2 * e)                                 # LeakyReLU(0.2)

    # 4) Per-head softmax over in-neighbours, packed on lanes. Subtracting the
    #    packed-row max is softmax-invariant within each head block (numerics only).
    e = e - jnp.max(e, axis=-1, keepdims=True)
    # Edge-multiplicity weights: 0 = no edge, k = k parallel edges, 1 = self-loop.
    p = cnt_ref[...] * jnp.exp(e)                                    # (N, H*N)
    denom = jnp.dot(p, st_ref[...], preferred_element_type=f32)      # (N, H)
    inv = pl.reciprocal(denom, approx=True)                          # EUP slot
    p = p * jnp.dot(inv, s_mat, preferred_element_type=f32)          # normalized

    # 5) Aggregation of all heads with one matmul:
    #    [p_0 .. p_{H-1}] (N, H*N) @ [xw_0; ..; xw_{H-1}] (H*N, Dh) = sum_h p_h @ xw_h
    if heads > 1:
        xh = jnp.concatenate(
            [xw[:, h * out_dim:(h + 1) * out_dim] for h in range(heads)], axis=0)
    else:
        xh = xw                                                      # (N, Dh)
    agg = jnp.dot(p.astype(jnp.bfloat16), xh.astype(jnp.bfloat16),
                  preferred_element_type=f32)                        # (N, Dh)

    # 6) Folded (mean over heads) + bias + BatchNorm1d(eval), then optional ReLU.
    out = agg * scale_ref[...] + shift_ref[...]
    if apply_relu:
        out = jnp.maximum(out, 0.0)
    return out


def make_fused_gnn_kernel(layer_cfgs, out_dim):
    """layer_cfgs: tuple of (heads, apply_relu) per layer."""

    def kernel(*refs):
        x_ref = refs[0]
        o_ref = refs[-1]
        layer_refs = refs[1:-1]
        x = x_ref[...]                                               # (N, Din) f32
        for li, (heads, apply_relu) in enumerate(layer_cfgs):
            r = layer_refs[li * REFS_PER_LAYER:(li + 1) * REFS_PER_LAYER]
            x = _gat_bn_layer(x, *r, heads=heads, out_dim=out_dim,
                              apply_relu=apply_relu)
        o_ref[...] = x

    return kernel


# ----------------------------- host-side helpers -----------------------------

def build_edge_counts(edge_index, num_nodes):
    """counts[i, j] = multiplicity of edge j -> i. Existing self-loops removed,
    exactly one self-loop per node added (matches PyG GATConv add_self_loops)."""
    src, dst = edge_index[0], edge_index[1]
    counts = jnp.zeros((num_nodes, num_nodes), jnp.float32).at[dst, src].add(1.0)
    eye = jnp.eye(num_nodes, dtype=jnp.float32)
    return counts * (1.0 - eye) + eye


def _build_alpha_matrix(att_src, att_dst):
    """Block-diagonal (H*Dh, 2H) matrix so that xw @ A = [alpha_src | alpha_dst]."""
    heads, dh = att_src.shape
    a = jnp.zeros((heads * dh, 2 * heads), jnp.float32)
    for h in range(heads):
        a = a.at[h * dh:(h + 1) * dh, h].set(att_src[h])
        a = a.at[h * dh:(h + 1) * dh, heads + h].set(att_dst[h])
    return a


def _layer_operands(params, heads, out_dim, counts, n):
    w_bf16 = params["w"].astype(jnp.bfloat16)                        # (Din, H*Dh)
    a_mat = _build_alpha_matrix(params["att_src"], params["att_dst"])
    # S[h, h*N:(h+1)*N] = 1 : block-wise lane broadcast / per-head row sums.
    s_mat = jnp.kron(jnp.eye(heads, dtype=jnp.float32),
                     jnp.ones((1, n), jnp.float32))                  # (H, H*N)
    st_mat = s_mat.T                                                 # (H*N, H)
    eye_tiled = jnp.tile(jnp.eye(n, dtype=jnp.float32), (1, heads))  # (N, H*N)
    cnt_tiled = jnp.tile(counts, (1, heads))                         # (N, H*N)
    # Fold mean-over-heads + GAT bias + BatchNorm1d(eval) into scale/shift.
    eps = jnp.float32(1e-5)
    bn_scale = params["bn_gamma"] / jnp.sqrt(params["bn_var"] + eps)
    bn_shift = params["bn_beta"] - params["bn_mean"] * bn_scale
    scale = bn_scale / jnp.float32(heads)
    shift = params["bias"] * bn_scale + bn_shift
    return [w_bf16, a_mat, s_mat, st_mat, eye_tiled, cnt_tiled, scale, shift]


def graph_neural_network_forward(x, edge_index, layer_params, heads_per_layer,
                                 hidden_dim):
    n = x.shape[0]
    counts = build_edge_counts(edge_index, n)
    operands = []
    cfgs = []
    num = len(layer_params)
    for i, (params, heads) in enumerate(zip(layer_params, heads_per_layer)):
        operands += _layer_operands(params, heads, hidden_dim, counts, n)
        cfgs.append((heads, i < num - 1))

    kernel = make_fused_gnn_kernel(tuple(cfgs), hidden_dim)
    return pl.pallas_call(
        kernel,
        out_shape=jax.ShapeDtypeStruct((n, hidden_dim), jnp.float32),
    )(x, *operands)


# --------------------------------- params ------------------------------------

def init_gat_params(key, in_dim, out_dim, heads):
    k1, k2, k3 = jax.random.split(key, 3)
    scale = 1.0 / jnp.sqrt(jnp.float32(in_dim))
    return {
        "w": (jax.random.normal(k1, (in_dim, heads * out_dim), jnp.float32)
              * scale),
        "att_src": jax.random.normal(k2, (heads, out_dim), jnp.float32) * 0.1,
        "att_dst": jax.random.normal(k3, (heads, out_dim), jnp.float32) * 0.1,
        "bias": jnp.zeros((1, out_dim), jnp.float32),
        # BatchNorm1d defaults: weight=1, bias=0, running_mean=0, running_var=1
        "bn_gamma": jnp.ones((1, out_dim), jnp.float32),
        "bn_beta": jnp.zeros((1, out_dim), jnp.float32),
        "bn_mean": jnp.zeros((1, out_dim), jnp.float32),
        "bn_var": jnp.ones((1, out_dim), jnp.float32),
    }


def init_gnn_params(key, node_feature_dim, hidden_dim, num_layers):
    keys = jax.random.split(key, num_layers)
    params, heads = [], []
    params.append(init_gat_params(keys[0], node_feature_dim, hidden_dim, 4))
    heads.append(4)
    for li in range(num_layers - 2):
        params.append(init_gat_params(keys[1 + li], hidden_dim, hidden_dim, 4))
        heads.append(4)
    params.append(init_gat_params(keys[num_layers - 1], hidden_dim, hidden_dim, 1))
    heads.append(1)
    return params, tuple(heads)


if __name__ == "__main__":
    NODE_FEATURE_DIM = 128
    HIDDEN_DIM = 128
    NUM_LAYERS = 3
    N_NODES = 16
    N_EDGES = 40

    key = jax.random.PRNGKey(0)
    kx, ke, kp = jax.random.split(key, 3)

    x = jax.random.normal(kx, (N_NODES, NODE_FEATURE_DIM), jnp.float32)
    edge_index = jax.random.randint(ke, (2, N_EDGES), 0, N_NODES, jnp.int32)

    layer_params, heads_per_layer = init_gnn_params(
        kp, NODE_FEATURE_DIM, HIDDEN_DIM, NUM_LAYERS)

    fwd = jax.jit(graph_neural_network_forward, static_argnums=(3, 4))
    out = fwd(x, edge_index, layer_params, heads_per_layer, HIDDEN_DIM)
    out = jax.block_until_ready(out)

    assert out.shape == (N_NODES, HIDDEN_DIM)
    assert bool(jnp.all(jnp.isfinite(out)))
    print("KERNEL_OK")
</pallas_src>

<mosaic_0001>
module attributes {stable_mosaic.version = 11 : i64} {
  func.func @kernel(%arg0: memref<16x128xf32, #tpu.memory_space<vmem>>, %arg1: memref<128x512xbf16, #tpu.memory_space<vmem>>, %arg2: memref<512x8xf32, #tpu.memory_space<vmem>>, %arg3: memref<4x64xf32, #tpu.memory_space<vmem>>, %arg4: memref<64x4xf32, #tpu.memory_space<vmem>>, %arg5: memref<16x64xf32, #tpu.memory_space<vmem>>, %arg6: memref<16x64xf32, #tpu.memory_space<vmem>>, %arg7: memref<1x128xf32, #tpu.memory_space<vmem>>, %arg8: memref<1x128xf32, #tpu.memory_space<vmem>>, %arg9: memref<128x512xbf16, #tpu.memory_space<vmem>>, %arg10: memref<512x8xf32, #tpu.memory_space<vmem>>, %arg11: memref<4x64xf32, #tpu.memory_space<vmem>>, %arg12: memref<64x4xf32, #tpu.memory_space<vmem>>, %arg13: memref<16x64xf32, #tpu.memory_space<vmem>>, %arg14: memref<16x64xf32, #tpu.memory_space<vmem>>, %arg15: memref<1x128xf32, #tpu.memory_space<vmem>>, %arg16: memref<1x128xf32, #tpu.memory_space<vmem>>, %arg17: memref<128x128xbf16, #tpu.memory_space<vmem>>, %arg18: memref<128x2xf32, #tpu.memory_space<vmem>>, %arg19: memref<1x16xf32, #tpu.memory_space<vmem>>, %arg20: memref<16x1xf32, #tpu.memory_space<vmem>>, %arg21: memref<16x16xf32, #tpu.memory_space<vmem>>, %arg22: memref<16x16xf32, #tpu.memory_space<vmem>>, %arg23: memref<1x128xf32, #tpu.memory_space<vmem>>, %arg24: memref<1x128xf32, #tpu.memory_space<vmem>>, %arg25: memref<16x128xf32, #tpu.memory_space<vmem>>) attributes {dimension_semantics = [], scalar_prefetch = 0 : i64, scratch_operands = 0 : i64, tpu.core_type = #tpu.core_type<tc>} {
    %c0 = arith.constant 0 : index
    %c0_0 = arith.constant 0 : index
    %0 = vector.load %arg0[%c0, %c0_0] : memref<16x128xf32, #tpu.memory_space<vmem>>, vector<16x128xf32>
    %1 = arith.truncf %0 : vector<16x128xf32> to vector<16x128xbf16>
    %c0_1 = arith.constant 0 : index
    %c0_2 = arith.constant 0 : index
    %2 = vector.load %arg1[%c0_1, %c0_2] : memref<128x512xbf16, #tpu.memory_space<vmem>>, vector<128x512xbf16>
    %cst = arith.constant dense<0.000000e+00> : vector<16x512xf32>
    %3 = tpu.matmul %1, %2, %cst {dimension_numbers = #tpu.dot_dimension_numbers<[1], [0], [0], [1], [0, 0, 1, 1], [], []>} : vector<16x128xbf16>, vector<128x512xbf16>, vector<16x512xf32> -> vector<16x512xf32>
    %c0_3 = arith.constant 0 : index
    %c0_4 = arith.constant 0 : index
    %4 = vector.load %arg2[%c0_3, %c0_4] : memref<512x8xf32, #tpu.memory_space<vmem>>, vector<512x8xf32>
    %cst_5 = arith.constant dense<0.000000e+00> : vector<16x8xf32>
    %5 = tpu.matmul %3, %4, %cst_5 {dimension_numbers = #tpu.dot_dimension_numbers<[1], [0], [0], [1], [0, 0, 1, 1], [], []>} : vector<16x512xf32>, vector<512x8xf32>, vector<16x8xf32> -> vector<16x8xf32>
    %6 = vector.extract_strided_slice %5 {offsets = [0, 0], sizes = [16, 4], strides = [1, 1]} : vector<16x8xf32> to vector<16x4xf32>
    %7 = vector.extract_strided_slice %5 {offsets = [0, 4], sizes = [16, 4], strides = [1, 1]} : vector<16x8xf32> to vector<16x4xf32>
    %c0_6 = arith.constant 0 : index
    %c0_7 = arith.constant 0 : index
    %8 = vector.load %arg3[%c0_6, %c0_7] : memref<4x64xf32, #tpu.memory_space<vmem>>, vector<4x64xf32>
    %cst_8 = arith.constant dense<0.000000e+00> : vector<16x64xf32>
    %9 = tpu.matmul %7, %8, %cst_8 {dimension_numbers = #tpu.dot_dimension_numbers<[1], [0], [0], [1], [0, 0, 1, 1], [], []>} : vector<16x4xf32>, vector<4x64xf32>, vector<16x64xf32> -> vector<16x64xf32>
    %c0_9 = arith.constant 0 : index
    %c0_10 = arith.constant 0 : index
    %10 = vector.load %arg5[%c0_9, %c0_10] : memref<16x64xf32, #tpu.memory_space<vmem>>, vector<16x64xf32>
    %cst_11 = arith.constant dense<0.000000e+00> : vector<16x64xf32>
    %11 = tpu.matmul %6, %8, %cst_11 {dimension_numbers = #tpu.dot_dimension_numbers<[1], [0], [0], [1], [0, 0, 1, 1], [], []>} : vector<16x4xf32>, vector<4x64xf32>, vector<16x64xf32> -> vector<16x64xf32>
    %12 = arith.mulf %10, %11 : vector<16x64xf32>
    %cst_12 = arith.constant 1.000000e+00 : f32
    %13 = vector.broadcast %cst_12 : f32 to vector<1x16xf32>
    %cst_13 = arith.constant dense<0.000000e+00> : vector<1x64xf32>
    %14 = tpu.matmul %13, %12, %cst_13 {dimension_numbers = #tpu.dot_dimension_numbers<[1], [0], [0], [1], [0, 0, 1, 1], [], []>} : vector<1x16xf32>, vector<16x64xf32>, vector<1x64xf32> -> vector<1x64xf32>
    %15 = vector.broadcast %14 : vector<1x64xf32> to vector<16x64xf32>
    %16 = arith.addf %9, %15 : vector<16x64xf32>
    %cst_14 = arith.constant 0.000000e+00 : f32
    %17 = vector.broadcast %cst_14 : f32 to vector<16x64xf32>
    %18 = arith.cmpf ogt, %16, %17 : vector<16x64xf32>
    %cst_15 = arith.constant 2.000000e-01 : f32
    %19 = vector.broadcast %cst_15 : f32 to vector<16x64xf32>
    %20 = arith.mulf %19, %16 : vector<16x64xf32>
    %21 = arith.select %18, %16, %20 : vector<16x64xi1>, vector<16x64xf32>
    %cst_16 = arith.constant dense<0xFF800000> : vector<16xf32>
    %22 = vector.multi_reduction <maximumf>, %21, %cst_16 [1] : vector<16x64xf32> to vector<16xf32>
    %23 = vector.shape_cast %22 : vector<16xf32> to vector<16x1xf32>
    %24 = vector.broadcast %23 : vector<16x1xf32> to vector<16x64xf32>
    %25 = arith.subf %21, %24 : vector<16x64xf32>
    %c0_17 = arith.constant 0 : index
    %c0_18 = arith.constant 0 : index
    %26 = vector.load %arg6[%c0_17, %c0_18] : memref<16x64xf32, #tpu.memory_space<vmem>>, vector<16x64xf32>
    %27 = math.exp %25 : vector<16x64xf32>
    %28 = arith.mulf %26, %27 : vector<16x64xf32>
    %c0_19 = arith.constant 0 : index
    %c0_20 = arith.constant 0 : index
    %29 = vector.load %arg4[%c0_19, %c0_20] : memref<64x4xf32, #tpu.memory_space<vmem>>, vector<64x4xf32>
    %cst_21 = arith.constant dense<0.000000e+00> : vector<16x4xf32>
    %30 = tpu.matmul %28, %29, %cst_21 {dimension_numbers = #tpu.dot_dimension_numbers<[1], [0], [0], [1], [0, 0, 1, 1], [], []>} : vector<16x64xf32>, vector<64x4xf32>, vector<16x4xf32> -> vector<16x4xf32>
    %31 = tpu.reciprocal %30 {approx = true} : vector<16x4xf32> -> vector<16x4xf32>
    %cst_22 = arith.constant dense<0.000000e+00> : vector<16x64xf32>
    %32 = tpu.matmul %31, %8, %cst_22 {dimension_numbers = #tpu.dot_dimension_numbers<[1], [0], [0], [1], [0, 0, 1, 1], [], []>} : vector<16x4xf32>, vector<4x64xf32>, vector<16x64xf32> -> vector<16x64xf32>
    %33 = arith.mulf %28, %32 : vector<16x64xf32>
    %34 = vector.extract_strided_slice %3 {offsets = [0, 0], sizes = [16, 128], strides = [1, 1]} : vector<16x512xf32> to vector<16x128xf32>
    %35 = vector.extract_strided_slice %3 {offsets = [0, 128], sizes = [16, 128], strides = [1, 1]} : vector<16x512xf32> to vector<16x128xf32>
    %36 = vector.extract_strided_slice %3 {offsets = [0, 256], sizes = [16, 128], strides = [1, 1]} : vector<16x512xf32> to vector<16x128xf32>
    %37 = vector.extract_strided_slice %3 {offsets = [0, 384], sizes = [16, 128], strides = [1, 1]} : vector<16x512xf32> to vector<16x128xf32>
    %38 = tpu.concatenate %34, %35, %36, %37 in 0 : vector<16x128xf32>, vector<16x128xf32>, vector<16x128xf32>, vector<16x128xf32> -> vector<64x128xf32>
    %39 = arith.truncf %33 : vector<16x64xf32> to vector<16x64xbf16>
    %40 = arith.truncf %38 : vector<64x128xf32> to vector<64x128xbf16>
    %cst_23 = arith.constant dense<0.000000e+00> : vector<16x128xf32>
    %41 = tpu.matmul %39, %40, %cst_23 {dimension_numbers = #tpu.dot_dimension_numbers<[1], [0], [0], [1], [0, 0, 1, 1], [], []>} : vector<16x64xbf16>, vector<64x128xbf16>, vector<16x128xf32> -> vector<16x128xf32>
    %c0_24 = arith.constant 0 : index
    %c0_25 = arith.constant 0 : index
    %42 = vector.load %arg7[%c0_24, %c0_25] : memref<1x128xf32, #tpu.memory_space<vmem>>, vector<1x128xf32>
    %43 = vector.broadcast %42 : vector<1x128xf32> to vector<16x128xf32>
    %44 = arith.mulf %41, %43 : vector<16x128xf32>
    %c0_26 = arith.constant 0 : index
    %c0_27 = arith.constant 0 : index
    %45 = vector.load %arg8[%c0_26, %c0_27] : memref<1x128xf32, #tpu.memory_space<vmem>>, vector<1x128xf32>
    %46 = vector.broadcast %45 : vector<1x128xf32> to vector<16x128xf32>
    %47 = arith.addf %44, %46 : vector<16x128xf32>
    %cst_28 = arith.constant 0.000000e+00 : f32
    %48 = vector.broadcast %cst_28 : f32 to vector<16x128xf32>
    %49 = arith.maximumf %47, %48 : vector<16x128xf32>
    %50 = arith.truncf %49 : vector<16x128xf32> to vector<16x128xbf16>
    %c0_29 = arith.constant 0 : index
    %c0_30 = arith.constant 0 : index
    %51 = vector.load %arg9[%c0_29, %c0_30] : memref<128x512xbf16, #tpu.memory_space<vmem>>, vector<128x512xbf16>
    %cst_31 = arith.constant dense<0.000000e+00> : vector<16x512xf32>
    %52 = tpu.matmul %50, %51, %cst_31 {dimension_numbers = #tpu.dot_dimension_numbers<[1], [0], [0], [1], [0, 0, 1, 1], [], []>} : vector<16x128xbf16>, vector<128x512xbf16>, vector<16x512xf32> -> vector<16x512xf32>
    %c0_32 = arith.constant 0 : index
    %c0_33 = arith.constant 0 : index
    %53 = vector.load %arg10[%c0_32, %c0_33] : memref<512x8xf32, #tpu.memory_space<vmem>>, vector<512x8xf32>
    %cst_34 = arith.constant dense<0.000000e+00> : vector<16x8xf32>
    %54 = tpu.matmul %52, %53, %cst_34 {dimension_numbers = #tpu.dot_dimension_numbers<[1], [0], [0], [1], [0, 0, 1, 1], [], []>} : vector<16x512xf32>, vector<512x8xf32>, vector<16x8xf32> -> vector<16x8xf32>
    %55 = vector.extract_strided_slice %54 {offsets = [0, 0], sizes = [16, 4], strides = [1, 1]} : vector<16x8xf32> to vector<16x4xf32>
    %56 = vector.extract_strided_slice %54 {offsets = [0, 4], sizes = [16, 4], strides = [1, 1]} : vector<16x8xf32> to vector<16x4xf32>
    %c0_35 = arith.constant 0 : index
    %c0_36 = arith.constant 0 : index
    %57 = vector.load %arg11[%c0_35, %c0_36] : memref<4x64xf32, #tpu.memory_space<vmem>>, vector<4x64xf32>
    %cst_37 = arith.constant dense<0.000000e+00> : vector<16x64xf32>
    %58 = tpu.matmul %56, %57, %cst_37 {dimension_numbers = #tpu.dot_dimension_numbers<[1], [0], [0], [1], [0, 0, 1, 1], [], []>} : vector<16x4xf32>, vector<4x64xf32>, vector<16x64xf32> -> vector<16x64xf32>
    %c0_38 = arith.constant 0 : index
    %c0_39 = arith.constant 0 : index
    %59 = vector.load %arg13[%c0_38, %c0_39] : memref<16x64xf32, #tpu.memory_space<vmem>>, vector<16x64xf32>
    %cst_40 = arith.constant dense<0.000000e+00> : vector<16x64xf32>
    %60 = tpu.matmul %55, %57, %cst_40 {dimension_numbers = #tpu.dot_dimension_numbers<[1], [0], [0], [1], [0, 0, 1, 1], [], []>} : vector<16x4xf32>, vector<4x64xf32>, vector<16x64xf32> -> vector<16x64xf32>
    %61 = arith.mulf %59, %60 : vector<16x64xf32>
    %cst_41 = arith.constant 1.000000e+00 : f32
    %62 = vector.broadcast %cst_41 : f32 to vector<1x16xf32>
    %cst_42 = arith.constant dense<0.000000e+00> : vector<1x64xf32>
    %63 = tpu.matmul %62, %61, %cst_42 {dimension_numbers = #tpu.dot_dimension_numbers<[1], [0], [0], [1], [0, 0, 1, 1], [], []>} : vector<1x16xf32>, vector<16x64xf32>, vector<1x64xf32> -> vector<1x64xf32>
    %64 = vector.broadcast %63 : vector<1x64xf32> to vector<16x64xf32>
    %65 = arith.addf %58, %64 : vector<16x64xf32>
    %cst_43 = arith.constant 0.000000e+00 : f32
    %66 = vector.broadcast %cst_43 : f32 to vector<16x64xf32>
    %67 = arith.cmpf ogt, %65, %66 : vector<16x64xf32>
    %cst_44 = arith.constant 2.000000e-01 : f32
    %68 = vector.broadcast %cst_44 : f32 to vector<16x64xf32>
    %69 = arith.mulf %68, %65 : vector<16x64xf32>
    %70 = arith.select %67, %65, %69 : vector<16x64xi1>, vector<16x64xf32>
    %cst_45 = arith.constant dense<0xFF800000> : vector<16xf32>
    %71 = vector.multi_reduction <maximumf>, %70, %cst_45 [1] : vector<16x64xf32> to vector<16xf32>
    %72 = vector.shape_cast %71 : vector<16xf32> to vector<16x1xf32>
    %73 = vector.broadcast %72 : vector<16x1xf32> to vector<16x64xf32>
    %74 = arith.subf %70, %73 : vector<16x64xf32>
    %c0_46 = arith.constant 0 : index
    %c0_47 = arith.constant 0 : index
    %75 = vector.load %arg14[%c0_46, %c0_47] : memref<16x64xf32, #tpu.memory_space<vmem>>, vector<16x64xf32>
    %76 = math.exp %74 : vector<16x64xf32>
    %77 = arith.mulf %75, %76 : vector<16x64xf32>
    %c0_48 = arith.constant 0 : index
    %c0_49 = arith.constant 0 : index
    %78 = vector.load %arg12[%c0_48, %c0_49] : memref<64x4xf32, #tpu.memory_space<vmem>>, vector<64x4xf32>
    %cst_50 = arith.constant dense<0.000000e+00> : vector<16x4xf32>
    %79 = tpu.matmul %77, %78, %cst_50 {dimension_numbers = #tpu.dot_dimension_numbers<[1], [0], [0], [1], [0, 0, 1, 1], [], []>} : vector<16x64xf32>, vector<64x4xf32>, vector<16x4xf32> -> vector<16x4xf32>
    %80 = tpu.reciprocal %79 {approx = true} : vector<16x4xf32> -> vector<16x4xf32>
    %cst_51 = arith.constant dense<0.000000e+00> : vector<16x64xf32>
    %81 = tpu.matmul %80, %57, %cst_51 {dimension_numbers = #tpu.dot_dimension_numbers<[1], [0], [0], [1], [0, 0, 1, 1], [], []>} : vector<16x4xf32>, vector<4x64xf32>, vector<16x64xf32> -> vector<16x64xf32>
    %82 = arith.mulf %77, %81 : vector<16x64xf32>
    %83 = vector.extract_strided_slice %52 {offsets = [0, 0], sizes = [16, 128], strides = [1, 1]} : vector<16x512xf32> to vector<16x128xf32>
    %84 = vector.extract_strided_slice %52 {offsets = [0, 128], sizes = [16, 128], strides = [1, 1]} : vector<16x512xf32> to vector<16x128xf32>
    %85 = vector.extract_strided_slice %52 {offsets = [0, 256], sizes = [16, 128], strides = [1, 1]} : vector<16x512xf32> to vector<16x128xf32>
    %86 = vector.extract_strided_slice %52 {offsets = [0, 384], sizes = [16, 128], strides = [1, 1]} : vector<16x512xf32> to vector<16x128xf32>
    %87 = tpu.concatenate %83, %84, %85, %86 in 0 : vector<16x128xf32>, vector<16x128xf32>, vector<16x128xf32>, vector<16x128xf32> -> vector<64x128xf32>
    %88 = arith.truncf %82 : vector<16x64xf32> to vector<16x64xbf16>
    %89 = arith.truncf %87 : vector<64x128xf32> to vector<64x128xbf16>
    %cst_52 = arith.constant dense<0.000000e+00> : vector<16x128xf32>
    %90 = tpu.matmul %88, %89, %cst_52 {dimension_numbers = #tpu.dot_dimension_numbers<[1], [0], [0], [1], [0, 0, 1, 1], [], []>} : vector<16x64xbf16>, vector<64x128xbf16>, vector<16x128xf32> -> vector<16x128xf32>
    %c0_53 = arith.constant 0 : index
    %c0_54 = arith.constant 0 : index
    %91 = vector.load %arg15[%c0_53, %c0_54] : memref<1x128xf32, #tpu.memory_space<vmem>>, vector<1x128xf32>
    %92 = vector.broadcast %91 : vector<1x128xf32> to vector<16x128xf32>
    %93 = arith.mulf %90, %92 : vector<16x128xf32>
    %c0_55 = arith.constant 0 : index
    %c0_56 = arith.constant 0 : index
    %94 = vector.load %arg16[%c0_55, %c0_56] : memref<1x128xf32, #tpu.memory_space<vmem>>, vector<1x128xf32>
    %95 = vector.broadcast %94 : vector<1x128xf32> to vector<16x128xf32>
    %96 = arith.addf %93, %95 : vector<16x128xf32>
    %cst_57 = arith.constant 0.000000e+00 : f32
    %97 = vector.broadcast %cst_57 : f32 to vector<16x128xf32>
    %98 = arith.maximumf %96, %97 : vector<16x128xf32>
    %99 = arith.truncf %98 : vector<16x128xf32> to vector<16x128xbf16>
    %c0_58 = arith.constant 0 : index
    %c0_59 = arith.constant 0 : index
    %100 = vector.load %arg17[%c0_58, %c0_59] : memref<128x128xbf16, #tpu.memory_space<vmem>>, vector<128x128xbf16>
    %cst_60 = arith.constant dense<0.000000e+00> : vector<16x128xf32>
    %101 = tpu.matmul %99, %100, %cst_60 {dimension_numbers = #tpu.dot_dimension_numbers<[1], [0], [0], [1], [0, 0, 1, 1], [], []>} : vector<16x128xbf16>, vector<128x128xbf16>, vector<16x128xf32> -> vector<16x128xf32>
    %c0_61 = arith.constant 0 : index
    %c0_62 = arith.constant 0 : index
    %102 = vector.load %arg18[%c0_61, %c0_62] : memref<128x2xf32, #tpu.memory_space<vmem>>, vector<128x2xf32>
    %cst_63 = arith.constant dense<0.000000e+00> : vector<16x2xf32>
    %103 = tpu.matmul %101, %102, %cst_63 {dimension_numbers = #tpu.dot_dimension_numbers<[1], [0], [0], [1], [0, 0, 1, 1], [], []>} : vector<16x128xf32>, vector<128x2xf32>, vector<16x2xf32> -> vector<16x2xf32>
    %104 = vector.extract_strided_slice %103 {offsets = [0, 0], sizes = [16, 1], strides = [1, 1]} : vector<16x2xf32> to vector<16x1xf32>
    %105 = vector.extract_strided_slice %103 {offsets = [0, 1], sizes = [16, 1], strides = [1, 1]} : vector<16x2xf32> to vector<16x1xf32>
    %c0_64 = arith.constant 0 : index
    %c0_65 = arith.constant 0 : index
    %106 = vector.load %arg19[%c0_64, %c0_65] : memref<1x16xf32, #tpu.memory_space<vmem>>, vector<1x16xf32>
    %cst_66 = arith.constant dense<0.000000e+00> : vector<16x16xf32>
    %107 = tpu.matmul %105, %106, %cst_66 {dimension_numbers = #tpu.dot_dimension_numbers<[1], [0], [0], [1], [0, 0, 1, 1], [], []>} : vector<16x1xf32>, vector<1x16xf32>, vector<16x16xf32> -> vector<16x16xf32>
    %c0_67 = arith.constant 0 : index
    %c0_68 = arith.constant 0 : index
    %108 = vector.load %arg21[%c0_67, %c0_68] : memref<16x16xf32, #tpu.memory_space<vmem>>, vector<16x16xf32>
    %cst_69 = arith.constant dense<0.000000e+00> : vector<16x16xf32>
    %109 = tpu.matmul %104, %106, %cst_69 {dimension_numbers = #tpu.dot_dimension_numbers<[1], [0], [0], [1], [0, 0, 1, 1], [], []>} : vector<16x1xf32>, vector<1x16xf32>, vector<16x16xf32> -> vector<16x16xf32>
    %110 = arith.mulf %108, %109 : vector<16x16xf32>
    %cst_70 = arith.constant 1.000000e+00 : f32
    %111 = vector.broadcast %cst_70 : f32 to vector<1x16xf32>
    %cst_71 = arith.constant dense<0.000000e+00> : vector<1x16xf32>
    %112 = tpu.matmul %111, %110, %cst_71 {dimension_numbers = #tpu.dot_dimension_numbers<[1], [0], [0], [1], [0, 0, 1, 1], [], []>} : vector<1x16xf32>, vector<16x16xf32>, vector<1x16xf32> -> vector<1x16xf32>
    %113 = vector.broadcast %112 : vector<1x16xf32> to vector<16x16xf32>
    %114 = arith.addf %107, %113 : vector<16x16xf32>
    %cst_72 = arith.constant 0.000000e+00 : f32
    %115 = vector.broadcast %cst_72 : f32 to vector<16x16xf32>
    %116 = arith.cmpf ogt, %114, %115 : vector<16x16xf32>
    %cst_73 = arith.constant 2.000000e-01 : f32
    %117 = vector.broadcast %cst_73 : f32 to vector<16x16xf32>
    %118 = arith.mulf %117, %114 : vector<16x16xf32>
    %119 = arith.select %116, %114, %118 : vector<16x16xi1>, vector<16x16xf32>
    %cst_74 = arith.constant dense<0xFF800000> : vector<16xf32>
    %120 = vector.multi_reduction <maximumf>, %119, %cst_74 [1] : vector<16x16xf32> to vector<16xf32>
    %121 = vector.shape_cast %120 : vector<16xf32> to vector<16x1xf32>
    %122 = vector.broadcast %121 : vector<16x1xf32> to vector<16x16xf32>
    %123 = arith.subf %119, %122 : vector<16x16xf32>
    %c0_75 = arith.constant 0 : index
    %c0_76 = arith.constant 0 : index
    %124 = vector.load %arg22[%c0_75, %c0_76] : memref<16x16xf32, #tpu.memory_space<vmem>>, vector<16x16xf32>
    %125 = math.exp %123 : vector<16x16xf32>
    %126 = arith.mulf %124, %125 : vector<16x16xf32>
    %c0_77 = arith.constant 0 : index
    %c0_78 = arith.constant 0 : index
    %127 = vector.load %arg20[%c0_77, %c0_78] : memref<16x1xf32, #tpu.memory_space<vmem>>, vector<16x1xf32>
    %cst_79 = arith.constant dense<0.000000e+00> : vector<16x1xf32>
    %128 = tpu.matmul %126, %127, %cst_79 {dimension_numbers = #tpu.dot_dimension_numbers<[1], [0], [0], [1], [0, 0, 1, 1], [], []>} : vector<16x16xf32>, vector<16x1xf32>, vector<16x1xf32> -> vector<16x1xf32>
    %129 = tpu.reciprocal %128 {approx = true} : vector<16x1xf32> -> vector<16x1xf32>
    %cst_80 = arith.constant dense<0.000000e+00> : vector<16x16xf32>
    %130 = tpu.matmul %129, %106, %cst_80 {dimension_numbers = #tpu.dot_dimension_numbers<[1], [0], [0], [1], [0, 0, 1, 1], [], []>} : vector<16x1xf32>, vector<1x16xf32>, vector<16x16xf32> -> vector<16x16xf32>
    %131 = arith.mulf %126, %130 : vector<16x16xf32>
    %132 = arith.truncf %131 : vector<16x16xf32> to vector<16x16xbf16>
    %133 = arith.truncf %101 : vector<16x128xf32> to vector<16x128xbf16>
    %cst_81 = arith.constant dense<0.000000e+00> : vector<16x128xf32>
    %134 = tpu.matmul %132, %133, %cst_81 {dimension_numbers = #tpu.dot_dimension_numbers<[1], [0], [0], [1], [0, 0, 1, 1], [], []>} : vector<16x16xbf16>, vector<16x128xbf16>, vector<16x128xf32> -> vector<16x128xf32>
    %c0_82 = arith.constant 0 : index
    %c0_83 = arith.constant 0 : index
    %135 = vector.load %arg23[%c0_82, %c0_83] : memref<1x128xf32, #tpu.memory_space<vmem>>, vector<1x128xf32>
    %136 = vector.broadcast %135 : vector<1x128xf32> to vector<16x128xf32>
    %137 = arith.mulf %134, %136 : vector<16x128xf32>
    %c0_84 = arith.constant 0 : index
    %c0_85 = arith.constant 0 : index
    %138 = vector.load %arg24[%c0_84, %c0_85] : memref<1x128xf32, #tpu.memory_space<vmem>>, vector<1x128xf32>
    %139 = vector.broadcast %138 : vector<1x128xf32> to vector<16x128xf32>
    %140 = arith.addf %137, %139 : vector<16x128xf32>
    %c0_86 = arith.constant 0 : index
    %c0_87 = arith.constant 0 : index
    %141 = vector.load %arg25[%c0_86, %c0_87] : memref<16x128xf32, #tpu.memory_space<vmem>>, vector<16x128xf32>
    tpu.vector_store %arg25[%c0_86, %c0_87], %140 {strides = array<i32>} : memref<16x128xf32, #tpu.memory_space<vmem>>, vector<16x128xf32>,
    return
  }
}

</mosaic_0001>

<llo_original>
// kernel: tile.29
$region0: #{tile.29}
  %s0 = inlined_call_operand.vmem [shape: f32[16,4,16], index: 0, kind: input, shape index: {}]
  %s1 = inlined_call_operand.vmem [shape: f32[16,64], index: 1, kind: output, shape index: {}]
  $region1: #{tile.29} parent=0
    #allocation0 [shape = 'u8[65536]{0}', space=vmem, size = 0x10000, scoped, tag = 'scoped mem for input reshape']
    %s3 = sshllo.u32 0, 4
    %s4 = smul.addr 4, 15
    %s5 = scalar_lea.vmem %s0, %s4
    %v6 = vld [vmem:[%s5] sm:%s3]
    %s7 = scalar_lea.vmem [#allocation0], 120
    %8 = vst [vmem:[%s7] sm:%s3] %v6
    %s9 = smul.addr 4, 14
    %s10 = scalar_lea.vmem %s0, %s9
    %v11 = vld [vmem:[%s10] sm:%s3]
    %s12 = scalar_lea.vmem [#allocation0], 112
    %13 = vst [vmem:[%s12] sm:%s3] %v11
    %s14 = smul.addr 4, 13
    %s15 = scalar_lea.vmem %s0, %s14
    %v16 = vld [vmem:[%s15] sm:%s3]
    %s17 = scalar_lea.vmem [#allocation0], 104
    %18 = vst [vmem:[%s17] sm:%s3] %v16
    %s19 = smul.addr 4, 12
    %s20 = scalar_lea.vmem %s0, %s19
    %v21 = vld [vmem:[%s20] sm:%s3]
    %s22 = scalar_lea.vmem [#allocation0], 96
    %23 = vst [vmem:[%s22] sm:%s3] %v21
    %s24 = smul.addr 4, 11
    %s25 = scalar_lea.vmem %s0, %s24
    %v26 = vld [vmem:[%s25] sm:%s3]
    %s27 = scalar_lea.vmem [#allocation0], 88
    %28 = vst [vmem:[%s27] sm:%s3] %v26
    %s29 = smul.addr 4, 10
    %s30 = scalar_lea.vmem %s0, %s29
    %v31 = vld [vmem:[%s30] sm:%s3]
    %s32 = scalar_lea.vmem [#allocation0], 80
    %33 = vst [vmem:[%s32] sm:%s3] %v31
    %s34 = smul.addr 4, 9
    %s35 = scalar_lea.vmem %s0, %s34
    %v36 = vld [vmem:[%s35] sm:%s3]
    %s37 = scalar_lea.vmem [#allocation0], 72
    %38 = vst [vmem:[%s37] sm:%s3] %v36
    %s39 = smul.addr 4, 8
    %s40 = scalar_lea.vmem %s0, %s39
    %v41 = vld [vmem:[%s40] sm:%s3]
    %s42 = scalar_lea.vmem [#allocation0], 64
    %43 = vst [vmem:[%s42] sm:%s3] %v41
    %s44 = smul.addr 4, 7
    %s45 = scalar_lea.vmem %s0, %s44
    %v46 = vld [vmem:[%s45] sm:%s3]
    %s47 = scalar_lea.vmem [#allocation0], 56
    %48 = vst [vmem:[%s47] sm:%s3] %v46
    %s49 = smul.addr 4, 6
    %s50 = scalar_lea.vmem %s0, %s49
    %v51 = vld [vmem:[%s50] sm:%s3]
    %s52 = scalar_lea.vmem [#allocation0], 48
    %53 = vst [vmem:[%s52] sm:%s3] %v51
    %s54 = smul.addr 4, 5
    %s55 = scalar_lea.vmem %s0, %s54
    %v56 = vld [vmem:[%s55] sm:%s3]
    %s57 = scalar_lea.vmem [#allocation0], 40
    %58 = vst [vmem:[%s57] sm:%s3] %v56
    %s59 = smul.addr 4, 4
    %s60 = scalar_lea.vmem %s0, %s59
    %v61 = vld [vmem:[%s60] sm:%s3]
    %s62 = scalar_lea.vmem [#allocation0], 32
    %63 = vst [vmem:[%s62] sm:%s3] %v61
    %s64 = smul.addr 4, 3
    %s65 = scalar_lea.vmem %s0, %s64
    %v66 = vld [vmem:[%s65] sm:%s3]
    %s67 = scalar_lea.vmem [#allocation0], 24
    %68 = vst [vmem:[%s67] sm:%s3] %v66
    %s69 = smul.addr 4, 2
    %s70 = scalar_lea.vmem %s0, %s69
    %v71 = vld [vmem:[%s70] sm:%s3]
    %s72 = scalar_lea.vmem [#allocation0], 16
    %73 = vst [vmem:[%s72] sm:%s3] %v71
    %s74 = scalar_lea.vmem %s0, 4
    %v75 = vld [vmem:[%s74] sm:%s3]
    %s76 = scalar_lea.vmem [#allocation0], 8
    %77 = vst [vmem:[%s76] sm:%s3] %v75
    %v78 = vld [vmem:[%s0] sm:%s3]
    %79 = vst [vmem:[#allocation0] sm:%s3] %v78
    %v80 = vld [vmem:[#allocation0] ss:$8 sm:$0xf]
    %v81 = vld [vmem:[#allocation0] ss:$8 sm:$0xf0]
    %vm82 = vcmask 1047556
    %v83 = vsel %vm82, %v81, %v80
    %vm84 = vcmask 130048
    %85 = vst.msk [vmem:[%s1] sm:$0xff] %vm84, %v83
    %s86 = scalar_lea.vmem [#allocation0], 64
    %v87 = vld [vmem:[%s86] ss:$8 sm:$0xf]
    %s88 = scalar_lea.vmem [#allocation0], 64
    %v89 = vld [vmem:[%s88] ss:$8 sm:$0xf0]
    %vm90 = vcmask 1047556
    %v91 = vsel %vm90, %v89, %v87
    %vm92 = vcmask 130048
    %s93 = scalar_lea.vmem %s1, 8
    %94 = vst.msk [vmem:[%s93] sm:$0xff] %vm92, %v91
    %s95 = scalar_lea.vmem [#allocation0], 3
    %v96 = vld [vmem:[%s95] ss:$8 sm:$0xf]
    %s97 = scalar_lea.vmem [#allocation0], 3
    %v98 = vld [vmem:[%s97] ss:$8 sm:$0xf0]
    %vm99 = vcmask 1047556
    %v100 = vsel %vm99, %v98, %v96
    %101 = vrot.lane.b32.xlu0 %v100, 48
    %v102 = vpop.permute.xlu0 %101
    %vm103 = vcmask 523648
    %104 = vst.msk [vmem:[%s1] sm:$0xff] %vm103, %v102
    %s105 = scalar_lea.vmem [#allocation0], 67
    %v106 = vld [vmem:[%s105] ss:$8 sm:$0xf]
    %s107 = scalar_lea.vmem [#allocation0], 67
    %v108 = vld [vmem:[%s107] ss:$8 sm:$0xf0]
    %vm109 = vcmask 1047556
    %v110 = vsel %vm109, %v108, %v106
    %111 = vrot.lane.b32.xlu0 %v110, 48
    %v112 = vpop.permute.xlu0 %111
    %vm113 = vcmask 523648
    %s114 = scalar_lea.vmem %s1, 8
    %115 = vst.msk [vmem:[%s114] sm:$0xff] %vm113, %v112
    %s116 = scalar_lea.vmem [#allocation0], 2
    %v117 = vld [vmem:[%s116] ss:$8 sm:$0xf]
    %s118 = scalar_lea.vmem [#allocation0], 2
    %v119 = vld [vmem:[%s118] ss:$8 sm:$0xf0]
    %vm120 = vcmask 1047556
    %v121 = vsel %vm120, %v119, %v117
    %122 = vrot.lane.b32.xlu0 %v121, 32
    %v123 = vpop.permute.xlu0 %122
    %vm124 = vcmask 392448
    %125 = vst.msk [vmem:[%s1] sm:$0xff] %vm124, %v123
    %s126 = scalar_lea.vmem [#allocation0], 66
    %v127 = vld [vmem:[%s126] ss:$8 sm:$0xf]
    %s128 = scalar_lea.vmem [#allocation0], 66
    %v129 = vld [vmem:[%s128] ss:$8 sm:$0xf0]
    %vm130 = vcmask 1047556
    %v131 = vsel %vm130, %v129, %v127
    %132 = vrot.lane.b32.xlu0 %v131, 32
    %v133 = vpop.permute.xlu0 %132
    %vm134 = vcmask 392448
    %s135 = scalar_lea.vmem %s1, 8
    %136 = vst.msk [vmem:[%s135] sm:$0xff] %vm134, %v133
    %s137 = scalar_lea.vmem [#allocation0], 1
    %v138 = vld [vmem:[%s137] ss:$8 sm:$0xf]
    %s139 = scalar_lea.vmem [#allocation0], 1
    %v140 = vld [vmem:[%s139] ss:$8 sm:$0xf0]
    %vm141 = vcmask 1047556
    %v142 = vsel %vm141, %v140, %v138
    %143 = vrot.lane.b32.xlu0 %v142, 16
    %v144 = vpop.permute.xlu0 %143
    %vm145 = vcmask 261248
    %146 = vst.msk [vmem:[%s1] sm:$0xff] %vm145, %v144
    %s147 = scalar_lea.vmem [#allocation0], 65
    %v148 = vld [vmem:[%s147] ss:$8 sm:$0xf]
    %s149 = scalar_lea.vmem [#allocation0], 65
    %v150 = vld [vmem:[%s149] ss:$8 sm:$0xf0]
    %vm151 = vcmask 1047556
    %v152 = vsel %vm151, %v150, %v148
    %153 = vrot.lane.b32.xlu0 %v152, 16
    %v154 = vpop.permute.xlu0 %153
    %vm155 = vcmask 261248
    %s156 = scalar_lea.vmem %s1, 8
    %157 = vst.msk [vmem:[%s156] sm:$0xff] %vm155, %v154

// kernel: graph_neural_network_forward.1
$region0: #{graph_neural_network_forward.1}
  #allocation0 [shape = 'u32[]', space=smem, size = 0x4, offset = 0x4, fixed_abs, tag = 'smem constant byte address 0x4 - core index']
  #allocation1 [shape = 'u32[144,128]{1,0:T(1,128)}', space=vmem, size = 0x12000, scoped, tag = 'internal scratch']
  %s0 = inlined_call_operand.vmem [shape: f32[16,128], index: 0, kind: input, shape index: {}]
  %s1 = inlined_call_operand.vmem [shape: bf16[128,512], index: 1, kind: input, shape index: {}]
  %s2 = inlined_call_operand.vmem [shape: f32[512,8], index: 2, kind: input, shape index: {}]
  %s3 = inlined_call_operand.vmem [shape: f32[4,64], index: 3, kind: input, shape index: {}, may-alias: {3,11}]
  %s4 = inlined_call_operand.vmem [shape: f32[64,4], index: 4, kind: input, shape index: {}, may-alias: {4,12}]
  %s5 = inlined_call_operand.vmem [shape: f32[16,64], index: 5, kind: input, shape index: {}, may-alias: {5,13}]
  %s6 = inlined_call_operand.vmem [shape: f32[16,64], index: 6, kind: input, shape index: {}, may-alias: {6,14}]
  %s7 = inlined_call_operand.vmem [shape: f32[1,128], index: 7, kind: input, shape index: {}]
  %s8 = inlined_call_operand.vmem [shape: f32[1,128], index: 8, kind: input, shape index: {}]
  %s9 = inlined_call_operand.vmem [shape: bf16[128,512], index: 9, kind: input, shape index: {}]
  %s10 = inlined_call_operand.vmem [shape: f32[512,8], index: 10, kind: input, shape index: {}]
  %s11 = inlined_call_operand.vmem [shape: f32[4,64], index: 11, kind: input, shape index: {}, may-alias: {3,11}]
  %s12 = inlined_call_operand.vmem [shape: f32[64,4], index: 12, kind: input, shape index: {}, may-alias: {4,12}]
  %s13 = inlined_call_operand.vmem [shape: f32[16,64], index: 13, kind: input, shape index: {}, may-alias: {5,13}]
  %s14 = inlined_call_operand.vmem [shape: f32[16,64], index: 14, kind: input, shape index: {}, may-alias: {6,14}]
  %s15 = inlined_call_operand.vmem [shape: f32[1,128], index: 15, kind: input, shape index: {}]
  %s16 = inlined_call_operand.vmem [shape: f32[1,128], index: 16, kind: input, shape index: {}]
  %s17 = inlined_call_operand.vmem [shape: bf16[128,128], index: 17, kind: input, shape index: {}]
  %s18 = inlined_call_operand.vmem [shape: f32[128,2], index: 18, kind: input, shape index: {}]
  %s19 = inlined_call_operand.vmem [shape: f32[1,16], index: 19, kind: input, shape index: {}]
  %s20 = inlined_call_operand.vmem [shape: f32[16,1], index: 20, kind: input, shape index: {}]
  %s21 = inlined_call_operand.vmem [shape: f32[16,16], index: 21, kind: input, shape index: {}]
  %s22 = inlined_call_operand.vmem [shape: f32[16,16], index: 22, kind: input, shape index: {}]
  %s23 = inlined_call_operand.vmem [shape: f32[1,128], index: 23, kind: input, shape index: {}]
  %s24 = inlined_call_operand.vmem [shape: f32[1,128], index: 24, kind: input, shape index: {}]
  %s25 = inlined_call_operand.hbm [shape: f32[16,128], index: 25, kind: output, shape index: {}]
  %s26 = sld [smem:[#allocation0]]
  $region110: #{graph_neural_network_forward.1} parent=0
    _
  %s28 = ssub.s32 1, %s26
  %s29 = scalar_select 0, %s28, %s26
  $region1: #{graph_neural_network_forward.1} parent=0
    #allocation2 [shape = 'u8[8192]{0}', space=vmem, size = 0x2000, scoped, tag = 'output window, operand 0, single buffered']
    #allocation3 [shape = 's32[1]{0}', space=sflag, size = 0x4, scoped, tag = 'scoped memory for graph_neural_network_forward.1']
    %30 = vsyncpa [#allocation3], 0
    // Predicated region
    $region2: #{graph_neural_network_forward.1} parent=1 // pred_check
      _
    $region3: #{graph_neural_network_forward.1} parent=1 // pred_check_branch
      %32 = sbr.rel (0) target = $region5
    $region4: #{graph_neural_network_forward.1} parent=1 // pred_region
      _
    $region5: #{graph_neural_network_forward.1} parent=1 // pred_fallthru
      _
    // Predicated region
    $region6: #{graph_neural_network_forward.1} parent=1 // pred_check
      _
    $region7: #{graph_neural_network_forward.1} parent=1 // pred_check_branch
      %34 = sbr.rel (0) target = $region9
    $region8: #{graph_neural_network_forward.1} parent=1 // pred_region
      _
    $region9: #{graph_neural_network_forward.1} parent=1 // pred_fallthru
      _
    // Predicated region
    $region10: #{graph_neural_network_forward.1} parent=1 // pred_check
      _
    $region11: #{graph_neural_network_forward.1} parent=1 // pred_check_branch
      %36 = sbr.rel (0) target = $region13
    $region12: #{graph_neural_network_forward.1} parent=1 // pred_region
      _
    $region13: #{graph_neural_network_forward.1} parent=1 // pred_fallthru
      _
    // Predicated region
    $region14: #{graph_neural_network_forward.1} parent=1 // pred_check
      _
    $region15: #{graph_neural_network_forward.1} parent=1 // pred_check_branch
      %38 = sbr.rel (0) target = $region17
    $region16: #{graph_neural_network_forward.1} parent=1 // pred_region
      _
    $region17: #{graph_neural_network_forward.1} parent=1 // pred_fallthru
      _
    // Predicated region
    $region18: #{graph_neural_network_forward.1} parent=1 // pred_check
      _
    $region19: #{graph_neural_network_forward.1} parent=1 // pred_check_branch
      %40 = sbr.rel (0) target = $region21
    $region20: #{graph_neural_network_forward.1} parent=1 // pred_region
      _
    $region21: #{graph_neural_network_forward.1} parent=1 // pred_fallthru
      _
    // Predicated region
    $region22: #{graph_neural_network_forward.1} parent=1 // pred_check
      _
    $region23: #{graph_neural_network_forward.1} parent=1 // pred_check_branch
      %42 = sbr.rel (0) target = $region25
    $region24: #{graph_neural_network_forward.1} parent=1 // pred_region
      _
    $region25: #{graph_neural_network_forward.1} parent=1 // pred_fallthru
      _
    // Predicated region
    $region26: #{graph_neural_network_forward.1} parent=1 // pred_check
      _
    $region27: #{graph_neural_network_forward.1} parent=1 // pred_check_branch
      %44 = sbr.rel (0) target = $region29
    $region28: #{graph_neural_network_forward.1} parent=1 // pred_region
      _
    $region29: #{graph_neural_network_forward.1} parent=1 // pred_fallthru
      _
    // Predicated region
    $region30: #{graph_neural_network_forward.1} parent=1 // pred_check
      _
    $region31: #{graph_neural_network_forward.1} parent=1 // pred_check_branch
      %46 = sbr.rel (0) target = $region33
    $region32: #{graph_neural_network_forward.1} parent=1 // pred_region
      _
    $region33: #{graph_neural_network_forward.1} parent=1 // pred_fallthru
      _
    // Predicated region
    $region34: #{graph_neural_network_forward.1} parent=1 // pred_check
      _
    $region35: #{graph_neural_network_forward.1} parent=1 // pred_check_branch
      %48 = sbr.rel (0) target = $region37
    $region36: #{graph_neural_network_forward.1} parent=1 // pred_region
      _
    $region37: #{graph_neural_network_forward.1} parent=1 // pred_fallthru
      _
    // Predicated region
    $region38: #{graph_neural_network_forward.1} parent=1 // pred_check
      _
    $region39: #{graph_neural_network_forward.1} parent=1 // pred_check_branch
      %50 = sbr.rel (0) target = $region41
    $region40: #{graph_neural_network_forward.1} parent=1 // pred_region
      _
    $region41: #{graph_neural_network_forward.1} parent=1 // pred_fallthru
      _
    // Predicated region
    $region42: #{graph_neural_network_forward.1} parent=1 // pred_check
      _
    $region43: #{graph_neural_network_forward.1} parent=1 // pred_check_branch
      %52 = sbr.rel (0) target = $region45
    $region44: #{graph_neural_network_forward.1} parent=1 // pred_region
      _
    $region45: #{graph_neural_network_forward.1} parent=1 // pred_fallthru
      _
    // Predicated region
    $region46: #{graph_neural_network_forward.1} parent=1 // pred_check
      _
    $region47: #{graph_neural_network_forward.1} parent=1 // pred_check_branch
      %54 = sbr.rel (0) target = $region49
    $region48: #{graph_neural_network_forward.1} parent=1 // pred_region
      _
    $region49: #{graph_neural_network_forward.1} parent=1 // pred_fallthru
      _
    // Predicated region
    $region50: #{graph_neural_network_forward.1} parent=1 // pred_check
      _
    $region51: #{graph_neural_network_forward.1} parent=1 // pred_check_branch
      %56 = sbr.rel (0) target = $region53
    $region52: #{graph_neural_network_forward.1} parent=1 // pred_region
      _
    $region53: #{graph_neural_network_forward.1} parent=1 // pred_fallthru
      _
    // Predicated region
    $region54: #{graph_neural_network_forward.1} parent=1 // pred_check
      _
    $region55: #{graph_neural_network_forward.1} parent=1 // pred_check_branch
      %58 = sbr.rel (0) target = $region57
    $region56: #{graph_neural_network_forward.1} parent=1 // pred_region
      _
    $region57: #{graph_neural_network_forward.1} parent=1 // pred_fallthru
      _
    // Predicated region
    $region58: #{graph_neural_network_forward.1} parent=1 // pred_check
      _
    $region59: #{graph_neural_network_forward.1} parent=1 // pred_check_branch
      %60 = sbr.rel (0) target = $region61
    $region60: #{graph_neural_network_forward.1} parent=1 // pred_region
      _
    $region61: #{graph_neural_network_forward.1} parent=1 // pred_fallthru
      _
    // Predicated region
    $region62: #{graph_neural_network_forward.1} parent=1 // pred_check
      _
    $region63: #{graph_neural_network_forward.1} parent=1 // pred_check_branch
      %62 = sbr.rel (0) target = $region65
    $region64: #{graph_neural_network_forward.1} parent=1 // pred_region
      _
    $region65: #{graph_neural_network_forward.1} parent=1 // pred_fallthru
      _
    // Predicated region
    $region66: #{graph_neural_network_forward.1} parent=1 // pred_check
      _
    $region67: #{graph_neural_network_forward.1} parent=1 // pred_check_branch
      %64 = sbr.rel (0) target = $region69
    $region68: #{graph_neural_network_forward.1} parent=1 // pred_region
      _
    $region69: #{graph_neural_network_forward.1} parent=1 // pred_fallthru
      _
    // Predicated region
    $region70: #{graph_neural_network_forward.1} parent=1 // pred_check
      _
    $region71: #{graph_neural_network_forward.1} parent=1 // pred_check_branch
      %66 = sbr.rel (0) target = $region73
    $region72: #{graph_neural_network_forward.1} parent=1 // pred_region
      _
    $region73: #{graph_neural_network_forward.1} parent=1 // pred_fallthru
      _
    // Predicated region
    $region74: #{graph_neural_network_forward.1} parent=1 // pred_check
      _
    $region75: #{graph_neural_network_forward.1} parent=1 // pred_check_branch
      %68 = sbr.rel (0) target = $region77
    $region76: #{graph_neural_network_forward.1} parent=1 // pred_region
      _
    $region77: #{graph_neural_network_forward.1} parent=1 // pred_fallthru
      _
    // Predicated region
    $region78: #{graph_neural_network_forward.1} parent=1 // pred_check
      _
    $region79: #{graph_neural_network_forward.1} parent=1 // pred_check_branch
      %70 = sbr.rel (0) target = $region81
    $region80: #{graph_neural_network_forward.1} parent=1 // pred_region
      _
    $region81: #{graph_neural_network_forward.1} parent=1 // pred_fallthru
      _
    // Predicated region
    $region82: #{graph_neural_network_forward.1} parent=1 // pred_check
      _
    $region83: #{graph_neural_network_forward.1} parent=1 // pred_check_branch
      %72 = sbr.rel (0) target = $region85
    $region84: #{graph_neural_network_forward.1} parent=1 // pred_region
      _
    $region85: #{graph_neural_network_forward.1} parent=1 // pred_fallthru
      _
    // Predicated region
    $region86: #{graph_neural_network_forward.1} parent=1 // pred_check
      _
    $region87: #{graph_neural_network_forward.1} parent=1 // pred_check_branch
      %74 = sbr.rel (0) target = $region89
    $region88: #{graph_neural_network_forward.1} parent=1 // pred_region
      _
    $region89: #{graph_neural_network_forward.1} parent=1 // pred_fallthru
      _
    // Predicated region
    $region90: #{graph_neural_network_forward.1} parent=1 // pred_check
      _
    $region91: #{graph_neural_network_forward.1} parent=1 // pred_check_branch
      %76 = sbr.rel (0) target = $region93
    $region92: #{graph_neural_network_forward.1} parent=1 // pred_region
      _
    $region93: #{graph_neural_network_forward.1} parent=1 // pred_fallthru
      _
    // Predicated region
    $region94: #{graph_neural_network_forward.1} parent=1 // pred_check
      _
    $region95: #{graph_neural_network_forward.1} parent=1 // pred_check_branch
      %78 = sbr.rel (0) target = $region97
    $region96: #{graph_neural_network_forward.1} parent=1 // pred_region
      _
    $region97: #{graph_neural_network_forward.1} parent=1 // pred_fallthru
      _
    // Predicated region
    $region98: #{graph_neural_network_forward.1} parent=1 // pred_check
      _
    $region99: #{graph_neural_network_forward.1} parent=1 // pred_check_branch
      %80 = sbr.rel (0) target = $region101
    $region100: #{graph_neural_network_forward.1} parent=1 // pred_region
      _
    $region101: #{graph_neural_network_forward.1} parent=1 // pred_fallthru
      _
    %v82 = vld [vmem:[%s0] sm:$0xff]
    %v83 = vld [vmem:[%s0 + $0x8] sm:$0xff]
    %v84 = vpack.c.bf16 %v83, %v82
    %v85 = vld [vmem:[%s1] sm:$0xff]
    %v86 = vld [vmem:[%s1 + $0x8] sm:$0xff]
    %v87 = vld [vmem:[%s1 + $0x10] sm:$0xff]
    %v88 = vld [vmem:[%s1 + $0x18] sm:$0xff]
    %v89 = vld [vmem:[%s1 + $0x20] sm:$0xff]
    %v90 = vld [vmem:[%s1 + $0x28] sm:$0xff]
    %v91 = vld [vmem:[%s1 + $0x30] sm:$0xff]
    %v92 = vld [vmem:[%s1 + $0x38] sm:$0xff]
    %v93 = vld [vmem:[%s1 + $0x40] sm:$0xff]
    %v94 = vld [vmem:[%s1 + $0x48] sm:$0xff]
    %v95 = vld [vmem:[%s1 + $0x50] sm:$0xff]
    %v96 = vld [vmem:[%s1 + $0x58] sm:$0xff]
    %v97 = vld [vmem:[%s1 + $0x60] sm:$0xff]
    %v98 = vld [vmem:[%s1 + $0x68] sm:$0xff]
    %v99 = vld [vmem:[%s1 + $0x70] sm:$0xff]
    %v100 = vld [vmem:[%s1 + $0x78] sm:$0xff]
    %v101 = vld [vmem:[%s1 + $0x80] sm:$0xff]
    %v102 = vld [vmem:[%s1 + $0x88] sm:$0xff]
    %v103 = vld [vmem:[%s1 + $0x90] sm:$0xff]
    %v104 = vld [vmem:[%s1 + $0x98] sm:$0xff]
    %v105 = vld [vmem:[%s1 + $0xa0] sm:$0xff]
    %v106 = vld [vmem:[%s1 + $0xa8] sm:$0xff]
    %v107 = vld [vmem:[%s1 + $0xb0] sm:$0xff]
    %v108 = vld [vmem:[%s1 + $0xb8] sm:$0xff]
    %v109 = vld [vmem:[%s1 + $0xc0] sm:$0xff]
    %v110 = vld [vmem:[%s1 + $0xc8] sm:$0xff]
    %v111 = vld [vmem:[%s1 + $0xd0] sm:$0xff]
    %v112 = vld [vmem:[%s1 + $0xd8] sm:$0xff]
    %v113 = vld [vmem:[%s1 + $0xe0] sm:$0xff]
    %v114 = vld [vmem:[%s1 + $0xe8] sm:$0xff]
    %v115 = vld [vmem:[%s1 + $0xf0] sm:$0xff]
    %v116 = vld [vmem:[%s1 + $0xf8] sm:$0xff]
    %v149 = vunpack.c.l.b16 %v85
    %v150 = vunpack.c.h.b16 %v85
    %v151 = vunpack.c.l.b16 %v86
    %v152 = vunpack.c.h.b16 %v86
    %v153 = vunpack.c.l.b16 %v87
    %v154 = vunpack.c.h.b16 %v87
    %v155 = vunpack.c.l.b16 %v88
    %v156 = vunpack.c.h.b16 %v88
    %v157 = vunpack.c.l.b16 %v89
    %v158 = vunpack.c.h.b16 %v89
    %v159 = vunpack.c.l.b16 %v90
    %v160 = vunpack.c.h.b16 %v90
    %v161 = vunpack.c.l.b16 %v91
    %v162 = vunpack.c.h.b16 %v91
    %v163 = vunpack.c.l.b16 %v92
    %v164 = vunpack.c.h.b16 %v92
    %v165 = vunpack.c.l.b16 %v93
    %v166 = vunpack.c.h.b16 %v93
    %v167 = vunpack.c.l.b16 %v94
    %v168 = vunpack.c.h.b16 %v94
    %v169 = vunpack.c.l.b16 %v95
    %v170 = vunpack.c.h.b16 %v95
    %v171 = vunpack.c.l.b16 %v96
    %v172 = vunpack.c.h.b16 %v96
    %v173 = vunpack.c.l.b16 %v97
    %v174 = vunpack.c.h.b16 %v97
    %v175 = vunpack.c.l.b16 %v98
    %v176 = vunpack.c.h.b16 %v98
    %v177 = vunpack.c.l.b16 %v99
    %v178 = vunpack.c.h.b16 %v99
    %v179 = vunpack.c.l.b16 %v100
    %v180 = vunpack.c.h.b16 %v100
    %v181 = vunpack.c.l.b16 %v101
    %v182 = vunpack.c.h.b16 %v101
    %v183 = vunpack.c.l.b16 %v102
    %v184 = vunpack.c.h.b16 %v102
    %v185 = vunpack.c.l.b16 %v103
    %v186 = vunpack.c.h.b16 %v103
    %v187 = vunpack.c.l.b16 %v104
    %v188 = vunpack.c.h.b16 %v104
    %v189 = vunpack.c.l.b16 %v105
    %v190 = vunpack.c.h.b16 %v105
    %v191 = vunpack.c.l.b16 %v106
    %v192 = vunpack.c.h.b16 %v106
    %v193 = vunpack.c.l.b16 %v107
    %v194 = vunpack.c.h.b16 %v107
    %v195 = vunpack.c.l.b16 %v108
    %v196 = vunpack.c.h.b16 %v108
    %v197 = vunpack.c.l.b16 %v109
    %v198 = vunpack.c.h.b16 %v109
    %v199 = vunpack.c.l.b16 %v110
    %v200 = vunpack.c.h.b16 %v110
    %v201 = vunpack.c.l.b16 %v111
    %v202 = vunpack.c.h.b16 %v111
    %v203 = vunpack.c.l.b16 %v112
    %v204 = vunpack.c.h.b16 %v112
    %v205 = vunpack.c.l.b16 %v113
    %v206 = vunpack.c.h.b16 %v113
    %v207 = vunpack.c.l.b16 %v114
    %v208 = vunpack.c.h.b16 %v114
    %v209 = vunpack.c.l.b16 %v115
    %v210 = vunpack.c.h.b16 %v115
    %v211 = vunpack.c.l.b16 %v116
    %v212 = vunpack.c.h.b16 %v116
    %v213 = vpack.c.b16 %v153, %v149
    %v214 = vpack.c.b16 %v154, %v150
    %v215 = vpack.c.b16 %v155, %v151
    %v216 = vpack.c.b16 %v156, %v152
    %v217 = vpack.c.b16 %v161, %v157
    %v218 = vpack.c.b16 %v162, %v158
    %v219 = vpack.c.b16 %v163, %v159
    %v220 = vpack.c.b16 %v164, %v160
    %v221 = vpack.c.b16 %v169, %v165
    %v222 = vpack.c.b16 %v170, %v166
    %v223 = vpack.c.b16 %v171, %v167
    %v224 = vpack.c.b16 %v172, %v168
    %v225 = vpack.c.b16 %v177, %v173
    %v226 = vpack.c.b16 %v178, %v174
    %v227 = vpack.c.b16 %v179, %v175
    %v228 = vpack.c.b16 %v180, %v176
    %v229 = vpack.c.b16 %v185, %v181
    %v230 = vpack.c.b16 %v186, %v182
    %v231 = vpack.c.b16 %v187, %v183
    %v232 = vpack.c.b16 %v188, %v184
    %v233 = vpack.c.b16 %v193, %v189
    %v234 = vpack.c.b16 %v194, %v190
    %v235 = vpack.c.b16 %v195, %v191
    %v236 = vpack.c.b16 %v196, %v192
    %v237 = vpack.c.b16 %v201, %v197
    %v238 = vpack.c.b16 %v202, %v198
    %v239 = vpack.c.b16 %v203, %v199
    %v240 = vpack.c.b16 %v204, %v200
    %v241 = vpack.c.b16 %v209, %v205
    %v242 = vpack.c.b16 %v210, %v206
    %v243 = vpack.c.b16 %v211, %v207
    %v244 = vpack.c.b16 %v212, %v208
    %277 = vmatprep.subr.bf16.mxu0 %v214
    %278 = vmatpush1.bf16.msra.mxu0 %v213
    %279 = vmatprep.subr.bf16.mxu0 %v218
    %280 = vmatpush1.bf16.msra.mxu0 %v217
    %281 = vmatprep.subr.bf16.mxu0 %v222
    %282 = vmatpush1.bf16.msra.mxu0 %v221
    %283 = vmatprep.subr.bf16.mxu0 %v226
    %284 = vmatpush1.bf16.msra.mxu0 %v225
    %285 = vmatprep.subr.bf16.mxu0 %v230
    %286 = vmatpush1.bf16.msra.mxu0 %v229
    %287 = vmatprep.subr.bf16.mxu0 %v234
    %288 = vmatpush1.bf16.msra.mxu0 %v233
    %289 = vmatprep.subr.bf16.mxu0 %v238
    %290 = vmatpush1.bf16.msra.mxu0 %v237
    %291 = vmatprep.subr.bf16.mxu0 %v242
    %292 = vmatpush1.bf16.msra.mxu0 %v241
    %293 = vmatprep.subr.bf16.mxu0 0
    %294 = vmatpush1.bf16.msra.mxu0 0
    %295 = vmatprep.subr.bf16.mxu0 0
    %296 = vmatpush1.bf16.msra.mxu0 0
    %297 = vmatprep.subr.bf16.mxu0 0
    %298 = vmatpush1.bf16.msra.mxu0 0
    %299 = vmatprep.subr.bf16.mxu0 0
    %300 = vmatpush1.bf16.msra.mxu0 0
    %301 = vmatprep.subr.bf16.mxu0 0
    %302 = vmatpush1.bf16.msra.mxu0 0
    %303 = vmatprep.subr.bf16.mxu0 0
    %304 = vmatpush1.bf16.msra.mxu0 0
    %305 = vmatprep.subr.bf16.mxu0 0
    %306 = vmatpush1.bf16.msra.mxu0 0
    %307 = vmatprep.subr.bf16.mxu0 0
    %308 = vmatpush1.bf16.msra.mxu0 0
    %309 = vmatprep.mubr.bf16.mxu0 0
    %310 = vmatmul.mubr.bf16.gmra.mrb[0].mxu0 %v84
    %v311 = vpop.f32.mrb[0].mxu0
    %v312 = vadd.f32 0.0, %v311
    %v313 = vpop.f32.mrb[0].mxu0
    %v314 = vadd.f32 0.0, %v313
    %v315 = vpop.f32.mrb[0].mxu0
    %v316 = vadd.f32 0.0, %v315
    %v317 = vpop.f32.mrb[0].mxu0
    %v318 = vadd.f32 0.0, %v317
    %319 = vdwg.mxu0
    %320 = vmatprep.subr.bf16.mxu0 %v216
    %321 = vmatpush1.bf16.msra.mxu0 %v215
    %322 = vmatprep.subr.bf16.mxu0 %v220
    %323 = vmatpush1.bf16.msra.mxu0 %v219
    %324 = vmatprep.subr.bf16.mxu0 %v224
    %325 = vmatpush1.bf16.msra.mxu0 %v223
    %326 = vmatprep.subr.bf16.mxu0 %v228
    %327 = vmatpush1.bf16.msra.mxu0 %v227
    %328 = vmatprep.subr.bf16.mxu0 %v232
    %329 = vmatpush1.bf16.msra.mxu0 %v231
    %330 = vmatprep.subr.bf16.mxu0 %v236
    %331 = vmatpush1.bf16.msra.mxu0 %v235
    %332 = vmatprep.subr.bf16.mxu0 %v240
    %333 = vmatpush1.bf16.msra.mxu0 %v239
    %334 = vmatprep.subr.bf16.mxu0 %v244
    %335 = vmatpush1.bf16.msra.mxu0 %v243
    %336 = vmatprep.subr.bf16.mxu0 0
    %337 = vmatpush1.bf16.msra.mxu0 0
    %338 = vmatprep.subr.bf16.mxu0 0
    %339 = vmatpush1.bf16.msra.mxu0 0
    %340 = vmatprep.subr.bf16.mxu0 0
    %341 = vmatpush1.bf16.msra.mxu0 0
    %342 = vmatprep.subr.bf16.mxu0 0
    %343 = vmatpush1.bf16.msra.mxu0 0
    %344 = vmatprep.subr.bf16.mxu0 0
    %345 = vmatpush1.bf16.msra.mxu0 0
    %346 = vmatprep.subr.bf16.mxu0 0
    %347 = vmatpush1.bf16.msra.mxu0 0
    %348 = vmatprep.subr.bf16.mxu0 0
    %349 = vmatpush1.bf16.msra.mxu0 0
    %350 = vmatprep.subr.bf16.mxu0 0
    %351 = vmatpush1.bf16.msra.mxu0 0
    %352 = vmatprep.mubr.bf16.mxu0 0
    %353 = vmatmul.mubr.bf16.gmra.mrb[0].mxu0 %v84
    %v354 = vpop.f32.mrb[0].mxu0
    %v355 = vadd.f32 0.0, %v354
    %v356 = vpop.f32.mrb[0].mxu0
    %v357 = vadd.f32 0.0, %v356
    %v358 = vpop.f32.mrb[0].mxu0
    %v359 = vadd.f32 0.0, %v358
    %v360 = vpop.f32.mrb[0].mxu0
    %v361 = vadd.f32 0.0, %v360
    %362 = vdwg.mxu0
    %v363 = vld [vmem:[%s2] sm:$0xff]
    %v364 = vld [vmem:[%s2 + $0x8] sm:$0xff]
    %v365 = vld [vmem:[%s2 + $0x10] sm:$0xff]
    %v366 = vld [vmem:[%s2 + $0x18] sm:$0xff]
    %v367 = vld [vmem:[%s2 + $0x20] sm:$0xff]
    %v368 = vld [vmem:[%s2 + $0x28] sm:$0xff]
    %v369 = vld [vmem:[%s2 + $0x30] sm:$0xff]
    %v370 = vld [vmem:[%s2 + $0x38] sm:$0xff]
    %v371 = vld [vmem:[%s2 + $0x40] sm:$0xff]
    %v372 = vld [vmem:[%s2 + $0x48] sm:$0xff]
    %v373 = vld [vmem:[%s2 + $0x50] sm:$0xff]
    %v374 = vld [vmem:[%s2 + $0x58] sm:$0xff]
    %v375 = vld [vmem:[%s2 + $0x60] sm:$0xff]
    %v376 = vld [vmem:[%s2 + $0x68] sm:$0xff]
    %v377 = vld [vmem:[%s2 + $0x70] sm:$0xff]
    %v378 = vld [vmem:[%s2 + $0x78] sm:$0xff]
    %v379 = vld [vmem:[%s2 + $0x80] sm:$0xff]
    %v380 = vld [vmem:[%s2 + $0x88] sm:$0xff]
    %v381 = vld [vmem:[%s2 + $0x90] sm:$0xff]
    %v382 = vld [vmem:[%s2 + $0x98] sm:$0xff]
    %v383 = vld [vmem:[%s2 + $0xa0] sm:$0xff]
    %v384 = vld [vmem:[%s2 + $0xa8] sm:$0xff]
    %v385 = vld [vmem:[%s2 + $0xb0] sm:$0xff]
    %v386 = vld [vmem:[%s2 + $0xb8] sm:$0xff]
    %v387 = vld [vmem:[%s2 + $0xc0] sm:$0xff]
    %v388 = vld [vmem:[%s2 + $0xc8] sm:$0xff]
    %v389 = vld [vmem:[%s2 + $0xd0] sm:$0xff]
    %v390 = vld [vmem:[%s2 + $0xd8] sm:$0xff]
    %v391 = vld [vmem:[%s2 + $0xe0] sm:$0xff]
    %v392 = vld [vmem:[%s2 + $0xe8] sm:$0xff]
    %v393 = vld [vmem:[%s2 + $0xf0] sm:$0xff]
    %v394 = vld [vmem:[%s2 + $0xf8] sm:$0xff]
    %v395 = vld [vmem:[%s2 + $0x100] sm:$0xff]
    %v396 = vld [vmem:[%s2 + $0x108] sm:$0xff]
    %v397 = vld [vmem:[%s2 + $0x110] sm:$0xff]
    %v398 = vld [vmem:[%s2 + $0x118] sm:$0xff]
    %v399 = vld [vmem:[%s2 + $0x120] sm:$0xff]
    %v400 = vld [vmem:[%s2 + $0x128] sm:$0xff]
    %v401 = vld [vmem:[%s2 + $0x130] sm:$0xff]
    %v402 = vld [vmem:[%s2 + $0x138] sm:$0xff]
    %v403 = vld [vmem:[%s2 + $0x140] sm:$0xff]
    %v404 = vld [vmem:[%s2 + $0x148] sm:$0xff]
    %v405 = vld [vmem:[%s2 + $0x150] sm:$0xff]
    %v406 = vld [vmem:[%s2 + $0x158] sm:$0xff]
    %v407 = vld [vmem:[%s2 + $0x160] sm:$0xff]
    %v408 = vld [vmem:[%s2 + $0x168] sm:$0xff]
    %v409 = vld [vmem:[%s2 + $0x170] sm:$0xff]
    %v410 = vld [vmem:[%s2 + $0x178] sm:$0xff]
    %v411 = vld [vmem:[%s2 + $0x180] sm:$0xff]
    %v412 = vld [vmem:[%s2 + $0x188] sm:$0xff]
    %v413 = vld [vmem:[%s2 + $0x190] sm:$0xff]
    %v414 = vld [vmem:[%s2 + $0x198] sm:$0xff]
    %v415 = vld [vmem:[%s2 + $0x1a0] sm:$0xff]
    %v416 = vld [vmem:[%s2 + $0x1a8] sm:$0xff]
    %v417 = vld [vmem:[%s2 + $0x1b0] sm:$0xff]
    %v418 = vld [vmem:[%s2 + $0x1b8] sm:$0xff]
    %v419 = vld [vmem:[%s2 + $0x1c0] sm:$0xff]
    %v420 = vld [vmem:[%s2 + $0x1c8] sm:$0xff]
    %v421 = vld [vmem:[%s2 + $0x1d0] sm:$0xff]
    %v422 = vld [vmem:[%s2 + $0x1d8] sm:$0xff]
    %v423 = vld [vmem:[%s2 + $0x1e0] sm:$0xff]
    %v424 = vld [vmem:[%s2 + $0x1e8] sm:$0xff]
    %v425 = vld [vmem:[%s2 + $0x1f0] sm:$0xff]
    %v426 = vld [vmem:[%s2 + $0x1f8] sm:$0xff]
    %427 = vmatprep.subr.mxu0 0.0
    %428 = vmatpush1.msra.mxu0 %v363
    %429 = vmatprep.subr.mxu0 0.0
    %430 = vmatpush1.msra.mxu0 %v364
    %431 = vmatprep.subr.mxu0 0.0
    %432 = vmatpush1.msra.mxu0 %v365
    %433 = vmatprep.subr.mxu0 0.0
    %434 = vmatpush1.msra.mxu0 %v366
    %435 = vmatprep.subr.mxu0 0.0
    %436 = vmatpush1.msra.mxu0 %v367
    %437 = vmatprep.subr.mxu0 0.0
    %438 = vmatpush1.msra.mxu0 %v368
    %439 = vmatprep.subr.mxu0 0.0
    %440 = vmatpush1.msra.mxu0 %v369
    %441 = vmatprep.subr.mxu0 0.0
    %442 = vmatpush1.msra.mxu0 %v370
    %443 = vmatprep.subr.mxu0 0.0
    %444 = vmatpush1.msra.mxu0 %v371
    %445 = vmatprep.subr.mxu0 0.0
    %446 = vmatpush1.msra.mxu0 %v372
    %447 = vmatprep.subr.mxu0 0.0
    %448 = vmatpush1.msra.mxu0 %v373
    %449 = vmatprep.subr.mxu0 0.0
    %450 = vmatpush1.msra.mxu0 %v374
    %451 = vmatprep.subr.mxu0 0.0
    %452 = vmatpush1.msra.mxu0 %v375
    %453 = vmatprep.subr.mxu0 0.0
    %454 = vmatpush1.msra.mxu0 %v376
    %455 = vmatprep.subr.mxu0 0.0
    %456 = vmatpush1.msra.mxu0 %v377
    %457 = vmatprep.subr.mxu0 0.0
    %458 = vmatpush1.msra.mxu0 %v378
    %459 = vmatprep.subr.mxu0 0.0
    %460 = vmatpush1.msra.mxu0 %v379
    %461 = vmatprep.subr.mxu0 0.0
    %462 = vmatpush1.msra.mxu0 %v380
    %463 = vmatprep.subr.mxu0 0.0
    %464 = vmatpush1.msra.mxu0 %v381
    %465 = vmatprep.subr.mxu0 0.0
    %466 = vmatpush1.msra.mxu0 %v382
    %467 = vmatprep.subr.mxu0 0.0
    %468 = vmatpush1.msra.mxu0 %v383
    %469 = vmatprep.subr.mxu0 0.0
    %470 = vmatpush1.msra.mxu0 %v384
    %471 = vmatprep.subr.mxu0 0.0
    %472 = vmatpush1.msra.mxu0 %v385
    %473 = vmatprep.subr.mxu0 0.0
    %474 = vmatpush1.msra.mxu0 %v386
    %475 = vmatprep.subr.mxu0 0.0
    %476 = vmatpush1.msra.mxu0 %v387
    %477 = vmatprep.subr.mxu0 0.0
    %478 = vmatpush1.msra.mxu0 %v388
    %479 = vmatprep.subr.mxu0 0.0
    %480 = vmatpush1.msra.mxu0 %v389
    %481 = vmatprep.subr.mxu0 0.0
    %482 = vmatpush1.msra.mxu0 %v390
    %483 = vmatprep.subr.mxu0 0.0
    %484 = vmatpush1.msra.mxu0 %v391
    %485 = vmatprep.subr.mxu0 0.0
    %486 = vmatpush1.msra.mxu0 %v392
    %487 = vmatprep.subr.mxu0 0.0
    %488 = vmatpush1.msra.mxu0 %v393
    %489 = vmatprep.subr.mxu0 0.0
    %490 = vmatpush1.msra.mxu0 %v394
    %491 = vmatprep.mubr.f32.mxu0 %v314
    %492 = vmatmul.mubr.f32.gmra.mrb[0].mxu0 %v312
    %v493 = vpop.f32.mrb[0].mxu0
    %v494 = vadd.f32 0.0, %v493
    %v495 = vpop.f32.mrb[0].mxu0
    %496 = vmatprep.mubr.f32.mxu0 %v318
    %497 = vmatmul.mubr.f32.gmra.mrb[0].mxu0 %v316
    %v498 = vpop.f32.mrb[0].mxu0
    %v499 = vadd.f32 0.0, %v498
    %v500 = vpop.f32.mrb[0].mxu0
    %501 = vdwg.mxu0
    %502 = vmatprep.subr.mxu0 0.0
    %503 = vmatpush1.msra.mxu0 %v395
    %504 = vmatprep.subr.mxu0 0.0
    %505 = vmatpush1.msra.mxu0 %v396
    %506 = vmatprep.subr.mxu0 0.0
    %507 = vmatpush1.msra.mxu0 %v397
    %508 = vmatprep.subr.mxu0 0.0
    %509 = vmatpush1.msra.mxu0 %v398
    %510 = vmatprep.subr.mxu0 0.0
    %511 = vmatpush1.msra.mxu0 %v399
    %512 = vmatprep.subr.mxu0 0.0
    %513 = vmatpush1.msra.mxu0 %v400
    %514 = vmatprep.subr.mxu0 0.0
    %515 = vmatpush1.msra.mxu0 %v401
    %516 = vmatprep.subr.mxu0 0.0
    %517 = vmatpush1.msra.mxu0 %v402
    %518 = vmatprep.subr.mxu0 0.0
    %519 = vmatpush1.msra.mxu0 %v403
    %520 = vmatprep.subr.mxu0 0.0
    %521 = vmatpush1.msra.mxu0 %v404
    %522 = vmatprep.subr.mxu0 0.0
    %523 = vmatpush1.msra.mxu0 %v405
    %524 = vmatprep.subr.mxu0 0.0
    %525 = vmatpush1.msra.mxu0 %v406
    %526 = vmatprep.subr.mxu0 0.0
    %527 = vmatpush1.msra.mxu0 %v407
    %528 = vmatprep.subr.mxu0 0.0
    %529 = vmatpush1.msra.mxu0 %v408
    %530 = vmatprep.subr.mxu0 0.0
    %531 = vmatpush1.msra.mxu0 %v409
    %532 = vmatprep.subr.mxu0 0.0
    %533 = vmatpush1.msra.mxu0 %v410
    %534 = vmatprep.subr.mxu0 0.0
    %535 = vmatpush1.msra.mxu0 %v411
    %536 = vmatprep.subr.mxu0 0.0
    %537 = vmatpush1.msra.mxu0 %v412
    %538 = vmatprep.subr.mxu0 0.0
    %539 = vmatpush1.msra.mxu0 %v413
    %540 = vmatprep.subr.mxu0 0.0
    %541 = vmatpush1.msra.mxu0 %v414
    %542 = vmatprep.subr.mxu0 0.0
    %543 = vmatpush1.msra.mxu0 %v415
    %544 = vmatprep.subr.mxu0 0.0
    %545 = vmatpush1.msra.mxu0 %v416
    %546 = vmatprep.subr.mxu0 0.0
    %547 = vmatpush1.msra.mxu0 %v417
    %548 = vmatprep.subr.mxu0 0.0
    %549 = vmatpush1.msra.mxu0 %v418
    %550 = vmatprep.subr.mxu0 0.0
    %551 = vmatpush1.msra.mxu0 %v419
    %552 = vmatprep.subr.mxu0 0.0
    %553 = vmatpush1.msra.mxu0 %v420
    %554 = vmatprep.subr.mxu0 0.0
    %555 = vmatpush1.msra.mxu0 %v421
    %556 = vmatprep.subr.mxu0 0.0
    %557 = vmatpush1.msra.mxu0 %v422
    %558 = vmatprep.subr.mxu0 0.0
    %559 = vmatpush1.msra.mxu0 %v423
    %560 = vmatprep.subr.mxu0 0.0
    %561 = vmatpush1.msra.mxu0 %v424
    %562 = vmatprep.subr.mxu0 0.0
    %563 = vmatpush1.msra.mxu0 %v425
    %564 = vmatprep.subr.mxu0 0.0
    %565 = vmatpush1.msra.mxu0 %v426
    %566 = vmatprep.mubr.f32.mxu0 %v357
    %567 = vmatmul.mubr.f32.gmra.mrb[0].mxu0 %v355
    %v568 = vpop.f32.mrb[0].mxu0
    %v569 = vadd.f32 %v494, %v568
    %v570 = vpop.f32.mrb[0].mxu0
    %571 = vmatprep.mubr.f32.mxu0 %v361
    %572 = vmatmul.mubr.f32.gmra.mrb[0].mxu0 %v359
    %v573 = vpop.f32.mrb[0].mxu0
    %v574 = vadd.f32 %v499, %v573
    %v575 = vpop.f32.mrb[0].mxu0
    %576 = vdwg.mxu0
    %v577 = vld [vmem:[%s3] sm:$0xf]
    %v578 = vld [vmem:[%s5] sm:$0xff]
    %v579 = vld [vmem:[%s5 + $0x8] sm:$0xff]
    %vm580 = vcmask 31744
    %v582 = vsel %vm580, %v569, 0
    %v585 = vsel %vm580, %v574, 0
    %vm587 = vcmask 1043456
    %v589 = vsel %vm587, %v577, 0
    %591 = vmatprep.subr.mxu0 0.0
    %592 = vmatpush1.msra.mxu0 %v589
    %593 = vmatprep.subr.mxu0 0.0
    %594 = vmatpush1.msra.mxu0 0.0
    %595 = vmatprep.subr.mxu0 0.0
    %596 = vmatpush1.msra.mxu0 0.0
    %597 = vmatprep.subr.mxu0 0.0
    %598 = vmatpush1.msra.mxu0 0.0
    %599 = vmatprep.subr.mxu0 0.0
    %600 = vmatpush1.msra.mxu0 0.0
    %601 = vmatprep.subr.mxu0 0.0
    %602 = vmatpush1.msra.mxu0 0.0
    %603 = vmatprep.subr.mxu0 0.0
    %604 = vmatpush1.msra.mxu0 0.0
    %605 = vmatprep.subr.mxu0 0.0
    %606 = vmatpush1.msra.mxu0 0.0
    %607 = vmatprep.subr.mxu0 0.0
    %608 = vmatpush1.msra.mxu0 0.0
    %609 = vmatprep.subr.mxu0 0.0
    %610 = vmatpush1.msra.mxu0 0.0
    %611 = vmatprep.subr.mxu0 0.0
    %612 = vmatpush1.msra.mxu0 0.0
    %613 = vmatprep.subr.mxu0 0.0
    %614 = vmatpush1.msra.mxu0 0.0
    %615 = vmatprep.subr.mxu0 0.0
    %616 = vmatpush1.msra.mxu0 0.0
    %617 = vmatprep.subr.mxu0 0.0
    %618 = vmatpush1.msra.mxu0 0.0
    %619 = vmatprep.subr.mxu0 0.0
    %620 = vmatpush1.msra.mxu0 0.0
    %621 = vmatprep.subr.mxu0 0.0
    %622 = vmatpush1.msra.mxu0 0.0
    %623 = vmatprep.subr.mxu0 0.0
    %624 = vmatpush1.msra.mxu0 0.0
    %625 = vmatprep.subr.mxu0 0.0
    %626 = vmatpush1.msra.mxu0 0.0
    %627 = vmatprep.subr.mxu0 0.0
    %628 = vmatpush1.msra.mxu0 0.0
    %629 = vmatprep.subr.mxu0 0.0
    %630 = vmatpush1.msra.mxu0 0.0
    %631 = vmatprep.subr.mxu0 0.0
    %632 = vmatpush1.msra.mxu0 0.0
    %633 = vmatprep.subr.mxu0 0.0
    %634 = vmatpush1.msra.mxu0 0.0
    %635 = vmatprep.subr.mxu0 0.0
    %636 = vmatpush1.msra.mxu0 0.0
    %637 = vmatprep.subr.mxu0 0.0
    %638 = vmatpush1.msra.mxu0 0.0
    %639 = vmatprep.subr.mxu0 0.0
    %640 = vmatpush1.msra.mxu0 0.0
    %641 = vmatprep.subr.mxu0 0.0
    %642 = vmatpush1.msra.mxu0 0.0
    %643 = vmatprep.subr.mxu0 0.0
    %644 = vmatpush1.msra.mxu0 0.0
    %645 = vmatprep.subr.mxu0 0.0
    %646 = vmatpush1.msra.mxu0 0.0
    %647 = vmatprep.subr.mxu0 0.0
    %648 = vmatpush1.msra.mxu0 0.0
    %649 = vmatprep.subr.mxu0 0.0
    %650 = vmatpush1.msra.mxu0 0.0
    %651 = vmatprep.subr.mxu0 0.0
    %652 = vmatpush1.msra.mxu0 0.0
    %653 = vmatprep.subr.mxu0 0.0
    %654 = vmatpush1.msra.mxu0 0.0
    %655 = vmatprep.mubr.f32.mxu0 0.0
    %656 = vmatmul.mubr.f32.gmra.mrb[0].mxu0 %v582
    %v657 = vpop.f32.mrb[0].mxu0
    %v658 = vadd.f32 0.0, %v657
    %v659 = vpop.f32.mrb[0].mxu0
    %660 = vmatprep.mubr.f32.mxu0 0.0
    %661 = vmatmul.mubr.f32.gmra.mrb[0].mxu0 %v585
    %v662 = vpop.f32.mrb[0].mxu0
    %v663 = vadd.f32 0.0, %v662
    %v664 = vpop.f32.mrb[0].mxu0
    %665 = vdwg.mxu0
    %v666 = vmul.f32 %v578, %v658
    %v667 = vmul.f32 %v579, %v663
    %vm668 = vcmask 130048
    %v670 = vsel %vm668, 1.0, 0
    %672 = vmatprep.subr.mxu0 0.0
    %673 = vmatpush1.msra.mxu0 %v666
    %674 = vmatprep.subr.mxu0 0.0
    %675 = vmatpush1.msra.mxu0 %v667
    %676 = vmatprep.subr.mxu0 0.0
    %677 = vmatpush1.msra.mxu0 0.0
    %678 = vmatprep.subr.mxu0 0.0
    %679 = vmatpush1.msra.mxu0 0.0
    %680 = vmatprep.subr.mxu0 0.0
    %681 = vmatpush1.msra.mxu0 0.0
    %682 = vmatprep.subr.mxu0 0.0
    %683 = vmatpush1.msra.mxu0 0.0
    %684 = vmatprep.subr.mxu0 0.0
    %685 = vmatpush1.msra.mxu0 0.0
    %686 = vmatprep.subr.mxu0 0.0
    %687 = vmatpush1.msra.mxu0 0.0
    %688 = vmatprep.subr.mxu0 0.0
    %689 = vmatpush1.msra.mxu0 0.0
    %690 = vmatprep.subr.mxu0 0.0
    %691 = vmatpush1.msra.mxu0 0.0
    %692 = vmatprep.subr.mxu0 0.0
    %693 = vmatpush1.msra.mxu0 0.0
    %694 = vmatprep.subr.mxu0 0.0
    %695 = vmatpush1.msra.mxu0 0.0
    %696 = vmatprep.subr.mxu0 0.0
    %697 = vmatpush1.msra.mxu0 0.0
    %698 = vmatprep.subr.mxu0 0.0
    %699 = vmatpush1.msra.mxu0 0.0
    %700 = vmatprep.subr.mxu0 0.0
    %701 = vmatpush1.msra.mxu0 0.0
    %702 = vmatprep.subr.mxu0 0.0
    %703 = vmatpush1.msra.mxu0 0.0
    %704 = vmatprep.subr.mxu0 0.0
    %705 = vmatpush1.msra.mxu0 0.0
    %706 = vmatprep.subr.mxu0 0.0
    %707 = vmatpush1.msra.mxu0 0.0
    %708 = vmatprep.subr.mxu0 0.0
    %709 = vmatpush1.msra.mxu0 0.0
    %710 = vmatprep.subr.mxu0 0.0
    %711 = vmatpush1.msra.mxu0 0.0
    %712 = vmatprep.subr.mxu0 0.0
    %713 = vmatpush1.msra.mxu0 0.0
    %714 = vmatprep.subr.mxu0 0.0
    %715 = vmatpush1.msra.mxu0 0.0
    %716 = vmatprep.subr.mxu0 0.0
    %717 = vmatpush1.msra.mxu0 0.0
    %718 = vmatprep.subr.mxu0 0.0
    %719 = vmatpush1.msra.mxu0 0.0
    %720 = vmatprep.subr.mxu0 0.0
    %721 = vmatpush1.msra.mxu0 0.0
    %722 = vmatprep.subr.mxu0 0.0
    %723 = vmatpush1.msra.mxu0 0.0
    %724 = vmatprep.subr.mxu0 0.0
    %725 = vmatpush1.msra.mxu0 0.0
    %726 = vmatprep.subr.mxu0 0.0
    %727 = vmatpush1.msra.mxu0 0.0
    %728 = vmatprep.subr.mxu0 0.0
    %729 = vmatpush1.msra.mxu0 0.0
    %730 = vmatprep.subr.mxu0 0.0
    %731 = vmatpush1.msra.mxu0 0.0
    %732 = vmatprep.subr.mxu0 0.0
    %733 = vmatpush1.msra.mxu0 0.0
    %734 = vmatprep.subr.mxu0 0.0
    %735 = vmatpush1.msra.mxu0 0.0
    %736 = vmatprep.mubr.f32.mxu0 0.0
    %737 = vmatmul.mubr.f32.gmra.mrb[0].mxu0 %v670
    %v738 = vpop.f32.mrb[0].mxu0
    %v739 = vadd.f32 0.0, %v738
    %v740 = vpop.f32.mrb[0].mxu0
    %741 = vdwg.mxu0
    %v742 = vlaneseq
    %v743 = vshrl.u32 %v742, 7
    %v744 = vsub.s32 0, %v743
    %v745 = vrot.slane %v739, %v744
    %746 = vrot.lane.b32.xlu0 %v569, 124
    %v747 = vpop.permute.xlu0 %746
    %748 = vrot.lane.b32.xlu0 %v574, 124
    %v749 = vpop.permute.xlu0 %748
    %v750 = vsel %vm580, %v747, 0
    %v752 = vsel %vm580, %v749, 0
    %754 = vmatprep.subr.mxu0 0.0
    %755 = vmatpush1.msra.mxu0 %v589
    %756 = vmatprep.subr.mxu0 0.0
    %757 = vmatpush1.msra.mxu0 0.0
    %758 = vmatprep.subr.mxu0 0.0
    %759 = vmatpush1.msra.mxu0 0.0
    %760 = vmatprep.subr.mxu0 0.0
    %761 = vmatpush1.msra.mxu0 0.0
    %762 = vmatprep.subr.mxu0 0.0
    %763 = vmatpush1.msra.mxu0 0.0
    %764 = vmatprep.subr.mxu0 0.0
    %765 = vmatpush1.msra.mxu0 0.0
    %766 = vmatprep.subr.mxu0 0.0
    %767 = vmatpush1.msra.mxu0 0.0
    %768 = vmatprep.subr.mxu0 0.0
    %769 = vmatpush1.msra.mxu0 0.0
    %770 = vmatprep.subr.mxu0 0.0
    %771 = vmatpush1.msra.mxu0 0.0
    %772 = vmatprep.subr.mxu0 0.0
    %773 = vmatpush1.msra.mxu0 0.0
    %774 = vmatprep.subr.mxu0 0.0
    %775 = vmatpush1.msra.mxu0 0.0
    %776 = vmatprep.subr.mxu0 0.0
    %777 = vmatpush1.msra.mxu0 0.0
    %778 = vmatprep.subr.mxu0 0.0
    %779 = vmatpush1.msra.mxu0 0.0
    %780 = vmatprep.subr.mxu0 0.0
    %781 = vmatpush1.msra.mxu0 0.0
    %782 = vmatprep.subr.mxu0 0.0
    %783 = vmatpush1.msra.mxu0 0.0
    %784 = vmatprep.subr.mxu0 0.0
    %785 = vmatpush1.msra.mxu0 0.0
    %786 = vmatprep.subr.mxu0 0.0
    %787 = vmatpush1.msra.mxu0 0.0
    %788 = vmatprep.subr.mxu0 0.0
    %789 = vmatpush1.msra.mxu0 0.0
    %790 = vmatprep.subr.mxu0 0.0
    %791 = vmatpush1.msra.mxu0 0.0
    %792 = vmatprep.subr.mxu0 0.0
    %793 = vmatpush1.msra.mxu0 0.0
    %794 = vmatprep.subr.mxu0 0.0
    %795 = vmatpush1.msra.mxu0 0.0
    %796 = vmatprep.subr.mxu0 0.0
    %797 = vmatpush1.msra.mxu0 0.0
    %798 = vmatprep.subr.mxu0 0.0
    %799 = vmatpush1.msra.mxu0 0.0
    %800 = vmatprep.subr.mxu0 0.0
    %801 = vmatpush1.msra.mxu0 0.0
    %802 = vmatprep.subr.mxu0 0.0
    %803 = vmatpush1.msra.mxu0 0.0
    %804 = vmatprep.subr.mxu0 0.0
    %805 = vmatpush1.msra.mxu0 0.0
    %806 = vmatprep.subr.mxu0 0.0
    %807 = vmatpush1.msra.mxu0 0.0
    %808 = vmatprep.subr.mxu0 0.0
    %809 = vmatpush1.msra.mxu0 0.0
    %810 = vmatprep.subr.mxu0 0.0
    %811 = vmatpush1.msra.mxu0 0.0
    %812 = vmatprep.subr.mxu0 0.0
    %813 = vmatpush1.msra.mxu0 0.0
    %814 = vmatprep.subr.mxu0 0.0
    %815 = vmatpush1.msra.mxu0 0.0
    %816 = vmatprep.subr.mxu0 0.0
    %817 = vmatpush1.msra.mxu0 0.0
    %818 = vmatprep.mubr.f32.mxu0 0.0
    %819 = vmatmul.mubr.f32.gmra.mrb[0].mxu0 %v750
    %v820 = vpop.f32.mrb[0].mxu0
    %v821 = vadd.f32 %v745, %v820
    %v822 = vpop.f32.mrb[0].mxu0
    %823 = vmatprep.mubr.f32.mxu0 0.0
    %824 = vmatmul.mubr.f32.gmra.mrb[0].mxu0 %v752
    %v825 = vpop.f32.mrb[0].mxu0
    %v826 = vadd.f32 %v745, %v825
    %v827 = vpop.f32.mrb[0].mxu0
    %828 = vdwg.mxu0
    %vm829 = vcmp.gt.f32.partialorder %v821, 0.0
    %vm830 = vcmp.gt.f32.partialorder %v826, 0.0
    %v831 = vmul.f32 %v821, 0.2
    %v832 = vmul.f32 %v826, 0.2
    %v833 = vsel %vm829, %v821, %v831
    %v834 = vsel %vm830, %v826, %v832
    %vm835 = vcmask 523264
    %v836 = vsel %vm835, %v833, -inf
    %837 = vmax.xlane.f32.xlu0 %v836
    %v838 = vpop.xlane.xlu0 %837
    %v839 = vsel %vm835, %v834, -inf
    %840 = vmax.xlane.f32.xlu0 %v839
    %v841 = vpop.xlane.xlu0 %840
    %v842 = vsub.f32 %v833, %v838
    %v843 = vsub.f32 %v834, %v841
    %v844 = vld [vmem:[%s6] sm:$0xff]
    %v845 = vld [vmem:[%s6 + $0x8] sm:$0xff]
    %v846 = vmul.f32 %v842, 1.442695
    %v847 = vpow.pop %v846
    %v848 = vmul.f32 %v843, 1.442695
    %v849 = vpow.pop %v848
    %v850 = vmul.f32 %v844, %v847
    %v851 = vmul.f32 %v845, %v849
    %v852 = vld [vmem:[%s4] sm:$0xff]
    %v853 = vld [vmem:[%s4 + $0x8] sm:$0xff]
    %v854 = vld [vmem:[%s4 + $0x10] sm:$0xff]
    %v855 = vld [vmem:[%s4 + $0x18] sm:$0xff]
    %v856 = vld [vmem:[%s4 + $0x20] sm:$0xff]
    %v857 = vld [vmem:[%s4 + $0x28] sm:$0xff]
    %v858 = vld [vmem:[%s4 + $0x30] sm:$0xff]
    %v859 = vld [vmem:[%s4 + $0x38] sm:$0xff]
    %v861 = vsel %vm835, %v850, 0
    %v864 = vsel %vm835, %v851, 0
    %866 = vmatprep.subr.mxu0 0.0
    %867 = vmatpush1.msra.mxu0 %v852
    %868 = vmatprep.subr.mxu0 0.0
    %869 = vmatpush1.msra.mxu0 %v853
    %870 = vmatprep.subr.mxu0 0.0
    %871 = vmatpush1.msra.mxu0 %v854
    %872 = vmatprep.subr.mxu0 0.0
    %873 = vmatpush1.msra.mxu0 %v855
    %874 = vmatprep.subr.mxu0 0.0
    %875 = vmatpush1.msra.mxu0 %v856
    %876 = vmatprep.subr.mxu0 0.0
    %877 = vmatpush1.msra.mxu0 %v857
    %878 = vmatprep.subr.mxu0 0.0
    %879 = vmatpush1.msra.mxu0 %v858
    %880 = vmatprep.subr.mxu0 0.0
    %881 = vmatpush1.msra.mxu0 %v859
    %882 = vmatprep.subr.mxu0 0.0
    %883 = vmatpush1.msra.mxu0 0.0
    %884 = vmatprep.subr.mxu0 0.0
    %885 = vmatpush1.msra.mxu0 0.0
    %886 = vmatprep.subr.mxu0 0.0
    %887 = vmatpush1.msra.mxu0 0.0
    %888 = vmatprep.subr.mxu0 0.0
    %889 = vmatpush1.msra.mxu0 0.0
    %890 = vmatprep.subr.mxu0 0.0
    %891 = vmatpush1.msra.mxu0 0.0
    %892 = vmatprep.subr.mxu0 0.0
    %893 = vmatpush1.msra.mxu0 0.0
    %894 = vmatprep.subr.mxu0 0.0
    %895 = vmatpush1.msra.mxu0 0.0
    %896 = vmatprep.subr.mxu0 0.0
    %897 = vmatpush1.msra.mxu0 0.0
    %898 = vmatprep.subr.mxu0 0.0
    %899 = vmatpush1.msra.mxu0 0.0
    %900 = vmatprep.subr.mxu0 0.0
    %901 = vmatpush1.msra.mxu0 0.0
    %902 = vmatprep.subr.mxu0 0.0
    %903 = vmatpush1.msra.mxu0 0.0
    %904 = vmatprep.subr.mxu0 0.0
    %905 = vmatpush1.msra.mxu0 0.0
    %906 = vmatprep.subr.mxu0 0.0
    %907 = vmatpush1.msra.mxu0 0.0
    %908 = vmatprep.subr.mxu0 0.0
    %909 = vmatpush1.msra.mxu0 0.0
    %910 = vmatprep.subr.mxu0 0.0
    %911 = vmatpush1.msra.mxu0 0.0
    %912 = vmatprep.subr.mxu0 0.0
    %913 = vmatpush1.msra.mxu0 0.0
    %914 = vmatprep.subr.mxu0 0.0
    %915 = vmatpush1.msra.mxu0 0.0
    %916 = vmatprep.subr.mxu0 0.0
    %917 = vmatpush1.msra.mxu0 0.0
    %918 = vmatprep.subr.mxu0 0.0
    %919 = vmatpush1.msra.mxu0 0.0
    %920 = vmatprep.subr.mxu0 0.0
    %921 = vmatpush1.msra.mxu0 0.0
    %922 = vmatprep.subr.mxu0 0.0
    %923 = vmatpush1.msra.mxu0 0.0
    %924 = vmatprep.subr.mxu0 0.0
    %925 = vmatpush1.msra.mxu0 0.0
    %926 = vmatprep.subr.mxu0 0.0
    %927 = vmatpush1.msra.mxu0 0.0
    %928 = vmatprep.subr.mxu0 0.0
    %929 = vmatpush1.msra.mxu0 0.0
    %930 = vmatprep.mubr.f32.mxu0 0.0
    %931 = vmatmul.mubr.f32.gmra.mrb[0].mxu0 %v861
    %v932 = vpop.f32.mrb[0].mxu0
    %v933 = vadd.f32 0.0, %v932
    %v934 = vpop.f32.mrb[0].mxu0
    %935 = vmatprep.mubr.f32.mxu0 0.0
    %936 = vmatmul.mubr.f32.gmra.mrb[0].mxu0 %v864
    %v937 = vpop.f32.mrb[0].mxu0
    %v938 = vadd.f32 0.0, %v937
    %v939 = vpop.f32.mrb[0].mxu0
    %940 = vdwg.mxu0
    %v941 = vrcp.pop %v933
    %v942 = vrcp.pop %v938
    %v944 = vsel %vm580, %v941, 0
    %v947 = vsel %vm580, %v942, 0
    %949 = vmatprep.subr.mxu0 0.0
    %950 = vmatpush1.msra.mxu0 %v589
    %951 = vmatprep.subr.mxu0 0.0
    %952 = vmatpush1.msra.mxu0 0.0
    %953 = vmatprep.subr.mxu0 0.0
    %954 = vmatpush1.msra.mxu0 0.0
    %955 = vmatprep.subr.mxu0 0.0
    %956 = vmatpush1.msra.mxu0 0.0
    %957 = vmatprep.subr.mxu0 0.0
    %958 = vmatpush1.msra.mxu0 0.0
    %959 = vmatprep.subr.mxu0 0.0
    %960 = vmatpush1.msra.mxu0 0.0
    %961 = vmatprep.subr.mxu0 0.0
    %962 = vmatpush1.msra.mxu0 0.0
    %963 = vmatprep.subr.mxu0 0.0
    %964 = vmatpush1.msra.mxu0 0.0
    %965 = vmatprep.subr.mxu0 0.0
    %966 = vmatpush1.msra.mxu0 0.0
    %967 = vmatprep.subr.mxu0 0.0
    %968 = vmatpush1.msra.mxu0 0.0
    %969 = vmatprep.subr.mxu0 0.0
    %970 = vmatpush1.msra.mxu0 0.0
    %971 = vmatprep.subr.mxu0 0.0
    %972 = vmatpush1.msra.mxu0 0.0
    %973 = vmatprep.subr.mxu0 0.0
    %974 = vmatpush1.msra.mxu0 0.0
    %975 = vmatprep.subr.mxu0 0.0
    %976 = vmatpush1.msra.mxu0 0.0
    %977 = vmatprep.subr.mxu0 0.0
    %978 = vmatpush1.msra.mxu0 0.0
    %979 = vmatprep.subr.mxu0 0.0
    %980 = vmatpush1.msra.mxu0 0.0
    %981 = vmatprep.subr.mxu0 0.0
    %982 = vmatpush1.msra.mxu0 0.0
    %983 = vmatprep.subr.mxu0 0.0
    %984 = vmatpush1.msra.mxu0 0.0
    %985 = vmatprep.subr.mxu0 0.0
    %986 = vmatpush1.msra.mxu0 0.0
    %987 = vmatprep.subr.mxu0 0.0
    %988 = vmatpush1.msra.mxu0 0.0
    %989 = vmatprep.subr.mxu0 0.0
    %990 = vmatpush1.msra.mxu0 0.0
    %991 = vmatprep.subr.mxu0 0.0
    %992 = vmatpush1.msra.mxu0 0.0
    %993 = vmatprep.subr.mxu0 0.0
    %994 = vmatpush1.msra.mxu0 0.0
    %995 = vmatprep.subr.mxu0 0.0
    %996 = vmatpush1.msra.mxu0 0.0
    %997 = vmatprep.subr.mxu0 0.0
    %998 = vmatpush1.msra.mxu0 0.0
    %999 = vmatprep.subr.mxu0 0.0
    %1000 = vmatpush1.msra.mxu0 0.0
    %1001 = vmatprep.subr.mxu0 0.0
    %1002 = vmatpush1.msra.mxu0 0.0
    %1003 = vmatprep.subr.mxu0 0.0
    %1004 = vmatpush1.msra.mxu0 0.0
    %1005 = vmatprep.subr.mxu0 0.0
    %1006 = vmatpush1.msra.mxu0 0.0
    %1007 = vmatprep.subr.mxu0 0.0
    %1008 = vmatpush1.msra.mxu0 0.0
    %1009 = vmatprep.subr.mxu0 0.0
    %1010 = vmatpush1.msra.mxu0 0.0
    %1011 = vmatprep.subr.mxu0 0.0
    %1012 = vmatpush1.msra.mxu0 0.0
    %1013 = vmatprep.mubr.f32.mxu0 0.0
    %1014 = vmatmul.mubr.f32.gmra.mrb[0].mxu0 %v944
    %v1015 = vpop.f32.mrb[0].mxu0
    %v1016 = vadd.f32 0.0, %v1015
    %v1017 = vpop.f32.mrb[0].mxu0
    %1018 = vmatprep.mubr.f32.mxu0 0.0
    %1019 = vmatmul.mubr.f32.gmra.mrb[0].mxu0 %v947
    %v1020 = vpop.f32.mrb[0].mxu0
    %v1021 = vadd.f32 0.0, %v1020
    %v1022 = vpop.f32.mrb[0].mxu0
    %1023 = vdwg.mxu0
    %v1024 = vmul.f32 %v850, %v1016
    %v1025 = vmul.f32 %v851, %v1021
    %v1026 = vpack.c.bf16 %v1025, %v1024
    %v1027 = vpack.c.bf16 %v316, %v312
    %v1028 = vpack.c.bf16 %v318, %v314
    %v1029 = vpack.c.bf16 %v359, %v355
    %v1030 = vpack.c.bf16 %v361, %v357
    %v1032 = vsel %vm835, %v1026, 0
    %1034 = vmatprep.subr.bf16.mxu0 0
    %1035 = vmatpush1.bf16.msra.mxu0 %v1027
    %1036 = vmatprep.subr.bf16.mxu0 0
    %1037 = vmatpush1.bf16.msra.mxu0 %v1028
    %1038 = vmatprep.subr.bf16.mxu0 0
    %1039 = vmatpush1.bf16.msra.mxu0 %v1029
    %1040 = vmatprep.subr.bf16.mxu0 0
    %1041 = vmatpush1.bf16.msra.mxu0 %v1030
    %1042 = vmatprep.subr.bf16.mxu0 0
    %1043 = vmatpush1.bf16.msra.mxu0 0
    %1044 = vmatprep.subr.bf16.mxu0 0
    %1045 = vmatpush1.bf16.msra.mxu0 0
    %1046 = vmatprep.subr.bf16.mxu0 0
    %1047 = vmatpush1.bf16.msra.mxu0 0
    %1048 = vmatprep.subr.bf16.mxu0 0
    %1049 = vmatpush1.bf16.msra.mxu0 0
    %1050 = vmatprep.subr.bf16.mxu0 0
    %1051 = vmatpush1.bf16.msra.mxu0 0
    %1052 = vmatprep.subr.bf16.mxu0 0
    %1053 = vmatpush1.bf16.msra.mxu0 0
    %1054 = vmatprep.subr.bf16.mxu0 0
    %1055 = vmatpush1.bf16.msra.mxu0 0
    %1056 = vmatprep.subr.bf16.mxu0 0
    %1057 = vmatpush1.bf16.msra.mxu0 0
    %1058 = vmatprep.subr.bf16.mxu0 0
    %1059 = vmatpush1.bf16.msra.mxu0 0
    %1060 = vmatprep.subr.bf16.mxu0 0
    %1061 = vmatpush1.bf16.msra.mxu0 0
    %1062 = vmatprep.subr.bf16.mxu0 0
    %1063 = vmatpush1.bf16.msra.mxu0 0
    %1064 = vmatprep.subr.bf16.mxu0 0
    %1065 = vmatpush1.bf16.msra.mxu0 0
    %1066 = vmatprep.mubr.bf16.mxu0 0
    %1067 = vmatmul.mubr.bf16.gmra.mrb[0].mxu0 %v1032
    %v1068 = vpop.f32.mrb[0].mxu0
    %v1069 = vadd.f32 0.0, %v1068
    %v1070 = vpop.f32.mrb[0].mxu0
    %v1071 = vpop.f32.mrb[0].mxu0
    %v1072 = vadd.f32 0.0, %v1071
    %v1073 = vpop.f32.mrb[0].mxu0
    %1074 = vdwg.mxu0
    %v1075 = vld [vmem:[%s7] sm:$0x1]
    %v1077 = vlaneseq
    %v1078 = vshrl.u32 %v1077, 7
    %v1079 = vsub.s32 0, %v1078
    %v1080 = vrot.slane %v1075, %v1079
    %v1082 = vmul.f32 %v1069, %v1080
    %v1083 = vmul.f32 %v1072, %v1080
    %v1084 = vld [vmem:[%s8] sm:$0x1]
    %v1086 = vlaneseq
    %v1087 = vshrl.u32 %v1086, 7
    %v1088 = vsub.s32 0, %v1087
    %v1089 = vrot.slane %v1084, %v1088
    %v1091 = vadd.f32 %v1082, %v1089
    %v1092 = vadd.f32 %v1083, %v1089
    %v1093 = vmax.f32 %v1091, 0.0
    %v1094 = vmax.f32 %v1092, 0.0
    %v1095 = vpack.c.bf16 %v1094, %v1093
    %v1096 = vld [vmem:[%s9] sm:$0xff]
    %v1097 = vld [vmem:[%s9 + $0x8] sm:$0xff]
    %v1098 = vld [vmem:[%s9 + $0x10] sm:$0xff]
    %v1099 = vld [vmem:[%s9 + $0x18] sm:$0xff]
    %v1100 = vld [vmem:[%s9 + $0x20] sm:$0xff]
    %v1101 = vld [vmem:[%s9 + $0x28] sm:$0xff]
    %v1102 = vld [vmem:[%s9 + $0x30] sm:$0xff]
    %v1103 = vld [vmem:[%s9 + $0x38] sm:$0xff]
    %v1104 = vld [vmem:[%s9 + $0x40] sm:$0xff]
    %v1105 = vld [vmem:[%s9 + $0x48] sm:$0xff]
    %v1106 = vld [vmem:[%s9 + $0x50] sm:$0xff]
    %v1107 = vld [vmem:[%s9 + $0x58] sm:$0xff]
    %v1108 = vld [vmem:[%s9 + $0x60] sm:$0xff]
    %v1109 = vld [vmem:[%s9 + $0x68] sm:$0xff]
    %v1110 = vld [vmem:[%s9 + $0x70] sm:$0xff]
    %v1111 = vld [vmem:[%s9 + $0x78] sm:$0xff]
    %v1112 = vld [vmem:[%s9 + $0x80] sm:$0xff]
    %v1113 = vld [vmem:[%s9 + $0x88] sm:$0xff]
    %v1114 = vld [vmem:[%s9 + $0x90] sm:$0xff]
    %v1115 = vld [vmem:[%s9 + $0x98] sm:$0xff]
    %v1116 = vld [vmem:[%s9 + $0xa0] sm:$0xff]
    %v1117 = vld [vmem:[%s9 + $0xa8] sm:$0xff]
    %v1118 = vld [vmem:[%s9 + $0xb0] sm:$0xff]
    %v1119 = vld [vmem:[%s9 + $0xb8] sm:$0xff]
    %v1120 = vld [vmem:[%s9 + $0xc0] sm:$0xff]
    %v1121 = vld [vmem:[%s9 + $0xc8] sm:$0xff]
    %v1122 = vld [vmem:[%s9 + $0xd0] sm:$0xff]
    %v1123 = vld [vmem:[%s9 + $0xd8] sm:$0xff]
    %v1124 = vld [vmem:[%s9 + $0xe0] sm:$0xff]
    %v1125 = vld [vmem:[%s9 + $0xe8] sm:$0xff]
    %v1126 = vld [vmem:[%s9 + $0xf0] sm:$0xff]
    %v1127 = vld [vmem:[%s9 + $0xf8] sm:$0xff]
    %v1160 = vunpack.c.l.b16 %v1096
    %v1161 = vunpack.c.h.b16 %v1096
    %v1162 = vunpack.c.l.b16 %v1097
    %v1163 = vunpack.c.h.b16 %v1097
    %v1164 = vunpack.c.l.b16 %v1098
    %v1165 = vunpack.c.h.b16 %v1098
    %v1166 = vunpack.c.l.b16 %v1099
    %v1167 = vunpack.c.h.b16 %v1099
    %v1168 = vunpack.c.l.b16 %v1100
    %v1169 = vunpack.c.h.b16 %v1100
    %v1170 = vunpack.c.l.b16 %v1101
    %v1171 = vunpack.c.h.b16 %v1101
    %v1172 = vunpack.c.l.b16 %v1102
    %v1173 = vunpack.c.h.b16 %v1102
    %v1174 = vunpack.c.l.b16 %v1103
    %v1175 = vunpack.c.h.b16 %v1103
    %v1176 = vunpack.c.l.b16 %v1104
    %v1177 = vunpack.c.h.b16 %v1104
    %v1178 = vunpack.c.l.b16 %v1105
    %v1179 = vunpack.c.h.b16 %v1105
    %v1180 = vunpack.c.l.b16 %v1106
    %v1181 = vunpack.c.h.b16 %v1106
    %v1182 = vunpack.c.l.b16 %v1107
    %v1183 = vunpack.c.h.b16 %v1107
    %v1184 = vunpack.c.l.b16 %v1108
    %v1185 = vunpack.c.h.b16 %v1108
    %v1186 = vunpack.c.l.b16 %v1109
    %v1187 = vunpack.c.h.b16 %v1109
    %v1188 = vunpack.c.l.b16 %v1110
    %v1189 = vunpack.c.h.b16 %v1110
    %v1190 = vunpack.c.l.b16 %v1111
    %v1191 = vunpack.c.h.b16 %v1111
    %v1192 = vunpack.c.l.b16 %v1112
    %v1193 = vunpack.c.h.b16 %v1112
    %v1194 = vunpack.c.l.b16 %v1113
    %v1195 = vunpack.c.h.b16 %v1113
    %v1196 = vunpack.c.l.b16 %v1114
    %v1197 = vunpack.c.h.b16 %v1114
    %v1198 = vunpack.c.l.b16 %v1115
    %v1199 = vunpack.c.h.b16 %v1115
    %v1200 = vunpack.c.l.b16 %v1116
    %v1201 = vunpack.c.h.b16 %v1116
    %v1202 = vunpack.c.l.b16 %v1117
    %v1203 = vunpack.c.h.b16 %v1117
    %v1204 = vunpack.c.l.b16 %v1118
    %v1205 = vunpack.c.h.b16 %v1118
    %v1206 = vunpack.c.l.b16 %v1119
    %v1207 = vunpack.c.h.b16 %v1119
    %v1208 = vunpack.c.l.b16 %v1120
    %v1209 = vunpack.c.h.b16 %v1120
    %v1210 = vunpack.c.l.b16 %v1121
    %v1211 = vunpack.c.h.b16 %v1121
    %v1212 = vunpack.c.l.b16 %v1122
    %v1213 = vunpack.c.h.b16 %v1122
    %v1214 = vunpack.c.l.b16 %v1123
    %v1215 = vunpack.c.h.b16 %v1123
    %v1216 = vunpack.c.l.b16 %v1124
    %v1217 = vunpack.c.h.b16 %v1124
    %v1218 = vunpack.c.l.b16 %v1125
    %v1219 = vunpack.c.h.b16 %v1125
    %v1220 = vunpack.c.l.b16 %v1126
    %v1221 = vunpack.c.h.b16 %v1126
    %v1222 = vunpack.c.l.b16 %v1127
    %v1223 = vunpack.c.h.b16 %v1127
    %v1224 = vpack.c.b16 %v1164, %v1160
    %v1225 = vpack.c.b16 %v1165, %v1161
    %v1226 = vpack.c.b16 %v1166, %v1162
    %v1227 = vpack.c.b16 %v1167, %v1163
    %v1228 = vpack.c.b16 %v1172, %v1168
    %v1229 = vpack.c.b16 %v1173, %v1169
    %v1230 = vpack.c.b16 %v1174, %v1170
    %v1231 = vpack.c.b16 %v1175, %v1171
    %v1232 = vpack.c.b16 %v1180, %v1176
    %v1233 = vpack.c.b16 %v1181, %v1177
    %v1234 = vpack.c.b16 %v1182, %v1178
    %v1235 = vpack.c.b16 %v1183, %v1179
    %v1236 = vpack.c.b16 %v1188, %v1184
    %v1237 = vpack.c.b16 %v1189, %v1185
    %v1238 = vpack.c.b16 %v1190, %v1186
    %v1239 = vpack.c.b16 %v1191, %v1187
    %v1240 = vpack.c.b16 %v1196, %v1192
    %v1241 = vpack.c.b16 %v1197, %v1193
    %v1242 = vpack.c.b16 %v1198, %v1194
    %v1243 = vpack.c.b16 %v1199, %v1195
    %v1244 = vpack.c.b16 %v1204, %v1200
    %v1245 = vpack.c.b16 %v1205, %v1201
    %v1246 = vpack.c.b16 %v1206, %v1202
    %v1247 = vpack.c.b16 %v1207, %v1203
    %v1248 = vpack.c.b16 %v1212, %v1208
    %v1249 = vpack.c.b16 %v1213, %v1209
    %v1250 = vpack.c.b16 %v1214, %v1210
    %v1251 = vpack.c.b16 %v1215, %v1211
    %v1252 = vpack.c.b16 %v1220, %v1216
    %v1253 = vpack.c.b16 %v1221, %v1217
    %v1254 = vpack.c.b16 %v1222, %v1218
    %v1255 = vpack.c.b16 %v1223, %v1219
    %1288 = vmatprep.subr.bf16.mxu0 %v1225
    %1289 = vmatpush1.bf16.msra.mxu0 %v1224
    %1290 = vmatprep.subr.bf16.mxu0 %v1229
    %1291 = vmatpush1.bf16.msra.mxu0 %v1228
    %1292 = vmatprep.subr.bf16.mxu0 %v1233
    %1293 = vmatpush1.bf16.msra.mxu0 %v1232
    %1294 = vmatprep.subr.bf16.mxu0 %v1237
    %1295 = vmatpush1.bf16.msra.mxu0 %v1236
    %1296 = vmatprep.subr.bf16.mxu0 %v1241
    %1297 = vmatpush1.bf16.msra.mxu0 %v1240
    %1298 = vmatprep.subr.bf16.mxu0 %v1245
    %1299 = vmatpush1.bf16.msra.mxu0 %v1244
    %1300 = vmatprep.subr.bf16.mxu0 %v1249
    %1301 = vmatpush1.bf16.msra.mxu0 %v1248
    %1302 = vmatprep.subr.bf16.mxu0 %v1253
    %1303 = vmatpush1.bf16.msra.mxu0 %v1252
    %1304 = vmatprep.subr.bf16.mxu0 0
    %1305 = vmatpush1.bf16.msra.mxu0 0
    %1306 = vmatprep.subr.bf16.mxu0 0
    %1307 = vmatpush1.bf16.msra.mxu0 0
    %1308 = vmatprep.subr.bf16.mxu0 0
    %1309 = vmatpush1.bf16.msra.mxu0 0
    %1310 = vmatprep.subr.bf16.mxu0 0
    %1311 = vmatpush1.bf16.msra.mxu0 0
    %1312 = vmatprep.subr.bf16.mxu0 0
    %1313 = vmatpush1.bf16.msra.mxu0 0
    %1314 = vmatprep.subr.bf16.mxu0 0
    %1315 = vmatpush1.bf16.msra.mxu0 0
    %1316 = vmatprep.subr.bf16.mxu0 0
    %1317 = vmatpush1.bf16.msra.mxu0 0
    %1318 = vmatprep.subr.bf16.mxu0 0
    %1319 = vmatpush1.bf16.msra.mxu0 0
    %1320 = vmatprep.mubr.bf16.mxu0 0
    %1321 = vmatmul.mubr.bf16.gmra.mrb[0].mxu0 %v1095
    %v1322 = vpop.f32.mrb[0].mxu0
    %v1323 = vadd.f32 0.0, %v1322
    %v1324 = vpop.f32.mrb[0].mxu0
    %v1325 = vadd.f32 0.0, %v1324
    %v1326 = vpop.f32.mrb[0].mxu0
    %v1327 = vadd.f32 0.0, %v1326
    %v1328 = vpop.f32.mrb[0].mxu0
    %v1329 = vadd.f32 0.0, %v1328
    %1330 = vdwg.mxu0
    %1331 = vmatprep.subr.bf16.mxu0 %v1227
    %1332 = vmatpush1.bf16.msra.mxu0 %v1226
    %1333 = vmatprep.subr.bf16.mxu0 %v1231
    %1334 = vmatpush1.bf16.msra.mxu0 %v1230
    %1335 = vmatprep.subr.bf16.mxu0 %v1235
    %1336 = vmatpush1.bf16.msra.mxu0 %v1234
    %1337 = vmatprep.subr.bf16.mxu0 %v1239
    %1338 = vmatpush1.bf16.msra.mxu0 %v1238
    %1339 = vmatprep.subr.bf16.mxu0 %v1243
    %1340 = vmatpush1.bf16.msra.mxu0 %v1242
    %1341 = vmatprep.subr.bf16.mxu0 %v1247
    %1342 = vmatpush1.bf16.msra.mxu0 %v1246
    %1343 = vmatprep.subr.bf16.mxu0 %v1251
    %1344 = vmatpush1.bf16.msra.mxu0 %v1250
    %1345 = vmatprep.subr.bf16.mxu0 %v1255
    %1346 = vmatpush1.bf16.msra.mxu0 %v1254
    %1347 = vmatprep.subr.bf16.mxu0 0
    %1348 = vmatpush1.bf16.msra.mxu0 0
    %1349 = vmatprep.subr.bf16.mxu0 0
    %1350 = vmatpush1.bf16.msra.mxu0 0
    %1351 = vmatprep.subr.bf16.mxu0 0
    %1352 = vmatpush1.bf16.msra.mxu0 0
    %1353 = vmatprep.subr.bf16.mxu0 0
    %1354 = vmatpush1.bf16.msra.mxu0 0
    %1355 = vmatprep.subr.bf16.mxu0 0
    %1356 = vmatpush1.bf16.msra.mxu0 0
    %1357 = vmatprep.subr.bf16.mxu0 0
    %1358 = vmatpush1.bf16.msra.mxu0 0
    %1359 = vmatprep.subr.bf16.mxu0 0
    %1360 = vmatpush1.bf16.msra.mxu0 0
    %1361 = vmatprep.subr.bf16.mxu0 0
    %1362 = vmatpush1.bf16.msra.mxu0 0
    %1363 = vmatprep.mubr.bf16.mxu0 0
    %1364 = vmatmul.mubr.bf16.gmra.mrb[0].mxu0 %v1095
    %v1365 = vpop.f32.mrb[0].mxu0
    %v1366 = vadd.f32 0.0, %v1365
    %v1367 = vpop.f32.mrb[0].mxu0
    %v1368 = vadd.f32 0.0, %v1367
    %v1369 = vpop.f32.mrb[0].mxu0
    %v1370 = vadd.f32 0.0, %v1369
    %v1371 = vpop.f32.mrb[0].mxu0
    %v1372 = vadd.f32 0.0, %v1371
    %1373 = vdwg.mxu0
    %v1374 = vld [vmem:[%s10] sm:$0xff]
    %v1375 = vld [vmem:[%s10 + $0x8] sm:$0xff]
    %v1376 = vld [vmem:[%s10 + $0x10] sm:$0xff]
    %v1377 = vld [vmem:[%s10 + $0x18] sm:$0xff]
    %v1378 = vld [vmem:[%s10 + $0x20] sm:$0xff]
    %v1379 = vld [vmem:[%s10 + $0x28] sm:$0xff]
    %v1380 = vld [vmem:[%s10 + $0x30] sm:$0xff]
    %v1381 = vld [vmem:[%s10 + $0x38] sm:$0xff]
    %v1382 = vld [vmem:[%s10 + $0x40] sm:$0xff]
    %v1383 = vld [vmem:[%s10 + $0x48] sm:$0xff]
    %v1384 = vld [vmem:[%s10 + $0x50] sm:$0xff]
    %v1385 = vld [vmem:[%s10 + $0x58] sm:$0xff]
    %v1386 = vld [vmem:[%s10 + $0x60] sm:$0xff]
    %v1387 = vld [vmem:[%s10 + $0x68] sm:$0xff]
    %v1388 = vld [vmem:[%s10 + $0x70] sm:$0xff]
    %v1389 = vld [vmem:[%s10 + $0x78] sm:$0xff]
    %v1390 = vld [vmem:[%s10 + $0x80] sm:$0xff]
    %v1391 = vld [vmem:[%s10 + $0x88] sm:$0xff]
    %v1392 = vld [vmem:[%s10 + $0x90] sm:$0xff]
    %v1393 = vld [vmem:[%s10 + $0x98] sm:$0xff]
    %v1394 = vld [vmem:[%s10 + $0xa0] sm:$0xff]
    %v1395 = vld [vmem:[%s10 + $0xa8] sm:$0xff]
    %v1396 = vld [vmem:[%s10 + $0xb0] sm:$0xff]
    %v1397 = vld [vmem:[%s10 + $0xb8] sm:$0xff]
    %v1398 = vld [vmem:[%s10 + $0xc0] sm:$0xff]
    %v1399 = vld [vmem:[%s10 + $0xc8] sm:$0xff]
    %v1400 = vld [vmem:[%s10 + $0xd0] sm:$0xff]
    %v1401 = vld [vmem:[%s10 + $0xd8] sm:$0xff]
    %v1402 = vld [vmem:[%s10 + $0xe0] sm:$0xff]
    %v1403 = vld [vmem:[%s10 + $0xe8] sm:$0xff]
    %v1404 = vld [vmem:[%s10 + $0xf0] sm:$0xff]
    %v1405 = vld [vmem:[%s10 + $0xf8] sm:$0xff]
    %v1406 = vld [vmem:[%s10 + $0x100] sm:$0xff]
    %v1407 = vld [vmem:[%s10 + $0x108] sm:$0xff]
    %v1408 = vld [vmem:[%s10 + $0x110] sm:$0xff]
    %v1409 = vld [vmem:[%s10 + $0x118] sm:$0xff]
    %v1410 = vld [vmem:[%s10 + $0x120] sm:$0xff]
    %v1411 = vld [vmem:[%s10 + $0x128] sm:$0xff]
    %v1412 = vld [vmem:[%s10 + $0x130] sm:$0xff]
    %v1413 = vld [vmem:[%s10 + $0x138] sm:$0xff]
    %v1414 = vld [vmem:[%s10 + $0x140] sm:$0xff]
    %v1415 = vld [vmem:[%s10 + $0x148] sm:$0xff]
    %v1416 = vld [vmem:[%s10 + $0x150] sm:$0xff]
    %v1417 = vld [vmem:[%s10 + $0x158] sm:$0xff]
    %v1418 = vld [vmem:[%s10 + $0x160] sm:$0xff]
    %v1419 = vld [vmem:[%s10 + $0x168] sm:$0xff]
    %v1420 = vld [vmem:[%s10 + $0x170] sm:$0xff]
    %v1421 = vld [vmem:[%s10 + $0x178] sm:$0xff]
    %v1422 = vld [vmem:[%s10 + $0x180] sm:$0xff]
    %v1423 = vld [vmem:[%s10 + $0x188] sm:$0xff]
    %v1424 = vld [vmem:[%s10 + $0x190] sm:$0xff]
    %v1425 = vld [vmem:[%s10 + $0x198] sm:$0xff]
    %v1426 = vld [vmem:[%s10 + $0x1a0] sm:$0xff]
    %v1427 = vld [vmem:[%s10 + $0x1a8] sm:$0xff]
    %v1428 = vld [vmem:[%s10 + $0x1b0] sm:$0xff]
    %v1429 = vld [vmem:[%s10 + $0x1b8] sm:$0xff]
    %v1430 = vld [vmem:[%s10 + $0x1c0] sm:$0xff]
    %v1431 = vld [vmem:[%s10 + $0x1c8] sm:$0xff]
    %v1432 = vld [vmem:[%s10 + $0x1d0] sm:$0xff]
    %v1433 = vld [vmem:[%s10 + $0x1d8] sm:$0xff]
    %v1434 = vld [vmem:[%s10 + $0x1e0] sm:$0xff]
    %v1435 = vld [vmem:[%s10 + $0x1e8] sm:$0xff]
    %v1436 = vld [vmem:[%s10 + $0x1f0] sm:$0xff]
    %v1437 = vld [vmem:[%s10 + $0x1f8] sm:$0xff]
    %1438 = vmatprep.subr.mxu0 0.0
    %1439 = vmatpush1.msra.mxu0 %v1374
    %1440 = vmatprep.subr.mxu0 0.0
    %1441 = vmatpush1.msra.mxu0 %v1375
    %1442 = vmatprep.subr.mxu0 0.0
    %1443 = vmatpush1.msra.mxu0 %v1376
    %1444 = vmatprep.subr.mxu0 0.0
    %1445 = vmatpush1.msra.mxu0 %v1377
    %1446 = vmatprep.subr.mxu0 0.0
    %1447 = vmatpush1.msra.mxu0 %v1378
    %1448 = vmatprep.subr.mxu0 0.0
    %1449 = vmatpush1.msra.mxu0 %v1379
    %1450 = vmatprep.subr.mxu0 0.0
    %1451 = vmatpush1.msra.mxu0 %v1380
    %1452 = vmatprep.subr.mxu0 0.0
    %1453 = vmatpush1.msra.mxu0 %v1381
    %1454 = vmatprep.subr.mxu0 0.0
    %1455 = vmatpush1.msra.mxu0 %v1382
    %1456 = vmatprep.subr.mxu0 0.0
    %1457 = vmatpush1.msra.mxu0 %v1383
    %1458 = vmatprep.subr.mxu0 0.0
    %1459 = vmatpush1.msra.mxu0 %v1384
    %1460 = vmatprep.subr.mxu0 0.0
    %1461 = vmatpush1.msra.mxu0 %v1385
    %1462 = vmatprep.subr.mxu0 0.0
    %1463 = vmatpush1.msra.mxu0 %v1386
    %1464 = vmatprep.subr.mxu0 0.0
    %1465 = vmatpush1.msra.mxu0 %v1387
    %1466 = vmatprep.subr.mxu0 0.0
    %1467 = vmatpush1.msra.mxu0 %v1388
    %1468 = vmatprep.subr.mxu0 0.0
    %1469 = vmatpush1.msra.mxu0 %v1389
    %1470 = vmatprep.subr.mxu0 0.0
    %1471 = vmatpush1.msra.mxu0 %v1390
    %1472 = vmatprep.subr.mxu0 0.0
    %1473 = vmatpush1.msra.mxu0 %v1391
    %1474 = vmatprep.subr.mxu0 0.0
    %1475 = vmatpush1.msra.mxu0 %v1392
    %1476 = vmatprep.subr.mxu0 0.0
    %1477 = vmatpush1.msra.mxu0 %v1393
    %1478 = vmatprep.subr.mxu0 0.0
    %1479 = vmatpush1.msra.mxu0 %v1394
    %1480 = vmatprep.subr.mxu0 0.0
    %1481 = vmatpush1.msra.mxu0 %v1395
    %1482 = vmatprep.subr.mxu0 0.0
    %1483 = vmatpush1.msra.mxu0 %v1396
    %1484 = vmatprep.subr.mxu0 0.0
    %1485 = vmatpush1.msra.mxu0 %v1397
    %1486 = vmatprep.subr.mxu0 0.0
    %1487 = vmatpush1.msra.mxu0 %v1398
    %1488 = vmatprep.subr.mxu0 0.0
    %1489 = vmatpush1.msra.mxu0 %v1399
    %1490 = vmatprep.subr.mxu0 0.0
    %1491 = vmatpush1.msra.mxu0 %v1400
    %1492 = vmatprep.subr.mxu0 0.0
    %1493 = vmatpush1.msra.mxu0 %v1401
    %1494 = vmatprep.subr.mxu0 0.0
    %1495 = vmatpush1.msra.mxu0 %v1402
    %1496 = vmatprep.subr.mxu0 0.0
    %1497 = vmatpush1.msra.mxu0 %v1403
    %1498 = vmatprep.subr.mxu0 0.0
    %1499 = vmatpush1.msra.mxu0 %v1404
    %1500 = vmatprep.subr.mxu0 0.0
    %1501 = vmatpush1.msra.mxu0 %v1405
    %1502 = vmatprep.mubr.f32.mxu0 %v1325
    %1503 = vmatmul.mubr.f32.gmra.mrb[0].mxu0 %v1323
    %v1504 = vpop.f32.mrb[0].mxu0
    %v1505 = vadd.f32 0.0, %v1504
    %v1506 = vpop.f32.mrb[0].mxu0
    %1507 = vmatprep.mubr.f32.mxu0 %v1329
    %1508 = vmatmul.mubr.f32.gmra.mrb[0].mxu0 %v1327
    %v1509 = vpop.f32.mrb[0].mxu0
    %v1510 = vadd.f32 0.0, %v1509
    %v1511 = vpop.f32.mrb[0].mxu0
    %1512 = vdwg.mxu0
    %1513 = vmatprep.subr.mxu0 0.0
    %1514 = vmatpush1.msra.mxu0 %v1406
    %1515 = vmatprep.subr.mxu0 0.0
    %1516 = vmatpush1.msra.mxu0 %v1407
    %1517 = vmatprep.subr.mxu0 0.0
    %1518 = vmatpush1.msra.mxu0 %v1408
    %1519 = vmatprep.subr.mxu0 0.0
    %1520 = vmatpush1.msra.mxu0 %v1409
    %1521 = vmatprep.subr.mxu0 0.0
    %1522 = vmatpush1.msra.mxu0 %v1410
    %1523 = vmatprep.subr.mxu0 0.0
    %1524 = vmatpush1.msra.mxu0 %v1411
    %1525 = vmatprep.subr.mxu0 0.0
    %1526 = vmatpush1.msra.mxu0 %v1412
    %1527 = vmatprep.subr.mxu0 0.0
    %1528 = vmatpush1.msra.mxu0 %v1413
    %1529 = vmatprep.subr.mxu0 0.0
    %1530 = vmatpush1.msra.mxu0 %v1414
    %1531 = vmatprep.subr.mxu0 0.0
    %1532 = vmatpush1.msra.mxu0 %v1415
    %1533 = vmatprep.subr.mxu0 0.0
    %1534 = vmatpush1.msra.mxu0 %v1416
    %1535 = vmatprep.subr.mxu0 0.0
    %1536 = vmatpush1.msra.mxu0 %v1417
    %1537 = vmatprep.subr.mxu0 0.0
    %1538 = vmatpush1.msra.mxu0 %v1418
    %1539 = vmatprep.subr.mxu0 0.0
    %1540 = vmatpush1.msra.mxu0 %v1419
    %1541 = vmatprep.subr.mxu0 0.0
    %1542 = vmatpush1.msra.mxu0 %v1420
    %1543 = vmatprep.subr.mxu0 0.0
    %1544 = vmatpush1.msra.mxu0 %v1421
    %1545 = vmatprep.subr.mxu0 0.0
    %1546 = vmatpush1.msra.mxu0 %v1422
    %1547 = vmatprep.subr.mxu0 0.0
    %1548 = vmatpush1.msra.mxu0 %v1423
    %1549 = vmatprep.subr.mxu0 0.0
    %1550 = vmatpush1.msra.mxu0 %v1424
    %1551 = vmatprep.subr.mxu0 0.0
    %1552 = vmatpush1.msra.mxu0 %v1425
    %1553 = vmatprep.subr.mxu0 0.0
    %1554 = vmatpush1.msra.mxu0 %v1426
    %1555 = vmatprep.subr.mxu0 0.0
    %1556 = vmatpush1.msra.mxu0 %v1427
    %1557 = vmatprep.subr.mxu0 0.0
    %1558 = vmatpush1.msra.mxu0 %v1428
    %1559 = vmatprep.subr.mxu0 0.0
    %1560 = vmatpush1.msra.mxu0 %v1429
    %1561 = vmatprep.subr.mxu0 0.0
    %1562 = vmatpush1.msra.mxu0 %v1430
    %1563 = vmatprep.subr.mxu0 0.0
    %1564 = vmatpush1.msra.mxu0 %v1431
    %1565 = vmatprep.subr.mxu0 0.0
    %1566 = vmatpush1.msra.mxu0 %v1432
    %1567 = vmatprep.subr.mxu0 0.0
    %1568 = vmatpush1.msra.mxu0 %v1433
    %1569 = vmatprep.subr.mxu0 0.0
    %1570 = vmatpush1.msra.mxu0 %v1434
    %1571 = vmatprep.subr.mxu0 0.0
    %1572 = vmatpush1.msra.mxu0 %v1435
    %1573 = vmatprep.subr.mxu0 0.0
    %1574 = vmatpush1.msra.mxu0 %v1436
    %1575 = vmatprep.subr.mxu0 0.0
    %1576 = vmatpush1.msra.mxu0 %v1437
    %1577 = vmatprep.mubr.f32.mxu0 %v1368
    %1578 = vmatmul.mubr.f32.gmra.mrb[0].mxu0 %v1366
    %v1579 = vpop.f32.mrb[0].mxu0
    %v1580 = vadd.f32 %v1505, %v1579
    %v1581 = vpop.f32.mrb[0].mxu0
    %1582 = vmatprep.mubr.f32.mxu0 %v1372
    %1583 = vmatmul.mubr.f32.gmra.mrb[0].mxu0 %v1370
    %v1584 = vpop.f32.mrb[0].mxu0
    %v1585 = vadd.f32 %v1510, %v1584
    %v1586 = vpop.f32.mrb[0].mxu0
    %1587 = vdwg.mxu0
    %v1588 = vld [vmem:[%s11] sm:$0xf]
    %v1589 = vld [vmem:[%s13] sm:$0xff]
    %v1590 = vld [vmem:[%s13 + $0x8] sm:$0xff]
    %v1592 = vsel %vm580, %v1580, 0
    %v1595 = vsel %vm580, %v1585, 0
    %v1598 = vsel %vm587, %v1588, 0
    %1600 = vmatprep.subr.mxu0 0.0
    %1601 = vmatpush1.msra.mxu0 %v1598
    %1602 = vmatprep.subr.mxu0 0.0
    %1603 = vmatpush1.msra.mxu0 0.0
    %1604 = vmatprep.subr.mxu0 0.0
    %1605 = vmatpush1.msra.mxu0 0.0
    %1606 = vmatprep.subr.mxu0 0.0
    %1607 = vmatpush1.msra.mxu0 0.0
    %1608 = vmatprep.subr.mxu0 0.0
    %1609 = vmatpush1.msra.mxu0 0.0
    %1610 = vmatprep.subr.mxu0 0.0
    %1611 = vmatpush1.msra.mxu0 0.0
    %1612 = vmatprep.subr.mxu0 0.0
    %1613 = vmatpush1.msra.mxu0 0.0
    %1614 = vmatprep.subr.mxu0 0.0
    %1615 = vmatpush1.msra.mxu0 0.0
    %1616 = vmatprep.subr.mxu0 0.0
    %1617 = vmatpush1.msra.mxu0 0.0
    %1618 = vmatprep.subr.mxu0 0.0
    %1619 = vmatpush1.msra.mxu0 0.0
    %1620 = vmatprep.subr.mxu0 0.0
    %1621 = vmatpush1.msra.mxu0 0.0
    %1622 = vmatprep.subr.mxu0 0.0
    %1623 = vmatpush1.msra.mxu0 0.0
    %1624 = vmatprep.subr.mxu0 0.0
    %1625 = vmatpush1.msra.mxu0 0.0
    %1626 = vmatprep.subr.mxu0 0.0
    %1627 = vmatpush1.msra.mxu0 0.0
    %1628 = vmatprep.subr.mxu0 0.0
    %1629 = vmatpush1.msra.mxu0 0.0
    %1630 = vmatprep.subr.mxu0 0.0
    %1631 = vmatpush1.msra.mxu0 0.0
    %1632 = vmatprep.subr.mxu0 0.0
    %1633 = vmatpush1.msra.mxu0 0.0
    %1634 = vmatprep.subr.mxu0 0.0
    %1635 = vmatpush1.msra.mxu0 0.0
    %1636 = vmatprep.subr.mxu0 0.0
    %1637 = vmatpush1.msra.mxu0 0.0
    %1638 = vmatprep.subr.mxu0 0.0
    %1639 = vmatpush1.msra.mxu0 0.0
    %1640 = vmatprep.subr.mxu0 0.0
    %1641 = vmatpush1.msra.mxu0 0.0
    %1642 = vmatprep.subr.mxu0 0.0
    %1643 = vmatpush1.msra.mxu0 0.0
    %1644 = vmatprep.subr.mxu0 0.0
    %1645 = vmatpush1.msra.mxu0 0.0
    %1646 = vmatprep.subr.mxu0 0.0
    %1647 = vmatpush1.msra.mxu0 0.0
    %1648 = vmatprep.subr.mxu0 0.0
    %1649 = vmatpush1.msra.mxu0 0.0
    %1650 = vmatprep.subr.mxu0 0.0
    %1651 = vmatpush1.msra.mxu0 0.0
    %1652 = vmatprep.subr.mxu0 0.0
    %1653 = vmatpush1.msra.mxu0 0.0
    %1654 = vmatprep.subr.mxu0 0.0
    %1655 = vmatpush1.msra.mxu0 0.0
    %1656 = vmatprep.subr.mxu0 0.0
    %1657 = vmatpush1.msra.mxu0 0.0
    %1658 = vmatprep.subr.mxu0 0.0
    %1659 = vmatpush1.msra.mxu0 0.0
    %1660 = vmatprep.subr.mxu0 0.0
    %1661 = vmatpush1.msra.mxu0 0.0
    %1662 = vmatprep.subr.mxu0 0.0
    %1663 = vmatpush1.msra.mxu0 0.0
    %1664 = vmatprep.mubr.f32.mxu0 0.0
    %1665 = vmatmul.mubr.f32.gmra.mrb[0].mxu0 %v1592
    %v1666 = vpop.f32.mrb[0].mxu0
    %v1667 = vadd.f32 0.0, %v1666
    %v1668 = vpop.f32.mrb[0].mxu0
    %1669 = vmatprep.mubr.f32.mxu0 0.0
    %1670 = vmatmul.mubr.f32.gmra.mrb[0].mxu0 %v1595
    %v1671 = vpop.f32.mrb[0].mxu0
    %v1672 = vadd.f32 0.0, %v1671
    %v1673 = vpop.f32.mrb[0].mxu0
    %1674 = vdwg.mxu0
    %v1675 = vmul.f32 %v1589, %v1667
    %v1676 = vmul.f32 %v1590, %v1672
    %1677 = vmatprep.subr.mxu0 0.0
    %1678 = vmatpush1.msra.mxu0 %v1675
    %1679 = vmatprep.subr.mxu0 0.0
    %1680 = vmatpush1.msra.mxu0 %v1676
    %1681 = vmatprep.subr.mxu0 0.0
    %1682 = vmatpush1.msra.mxu0 0.0
    %1683 = vmatprep.subr.mxu0 0.0
    %1684 = vmatpush1.msra.mxu0 0.0
    %1685 = vmatprep.subr.mxu0 0.0
    %1686 = vmatpush1.msra.mxu0 0.0
    %1687 = vmatprep.subr.mxu0 0.0
    %1688 = vmatpush1.msra.mxu0 0.0
    %1689 = vmatprep.subr.mxu0 0.0
    %1690 = vmatpush1.msra.mxu0 0.0
    %1691 = vmatprep.subr.mxu0 0.0
    %1692 = vmatpush1.msra.mxu0 0.0
    %1693 = vmatprep.subr.mxu0 0.0
    %1694 = vmatpush1.msra.mxu0 0.0
    %1695 = vmatprep.subr.mxu0 0.0
    %1696 = vmatpush1.msra.mxu0 0.0
    %1697 = vmatprep.subr.mxu0 0.0
    %1698 = vmatpush1.msra.mxu0 0.0
    %1699 = vmatprep.subr.mxu0 0.0
    %1700 = vmatpush1.msra.mxu0 0.0
    %1701 = vmatprep.subr.mxu0 0.0
    %1702 = vmatpush1.msra.mxu0 0.0
    %1703 = vmatprep.subr.mxu0 0.0
    %1704 = vmatpush1.msra.mxu0 0.0
    %1705 = vmatprep.subr.mxu0 0.0
    %1706 = vmatpush1.msra.mxu0 0.0
    %1707 = vmatprep.subr.mxu0 0.0
    %1708 = vmatpush1.msra.mxu0 0.0
    %1709 = vmatprep.subr.mxu0 0.0
    %1710 = vmatpush1.msra.mxu0 0.0
    %1711 = vmatprep.subr.mxu0 0.0
    %1712 = vmatpush1.msra.mxu0 0.0
    %1713 = vmatprep.subr.mxu0 0.0
    %1714 = vmatpush1.msra.mxu0 0.0
    %1715 = vmatprep.subr.mxu0 0.0
    %1716 = vmatpush1.msra.mxu0 0.0
    %1717 = vmatprep.subr.mxu0 0.0
    %1718 = vmatpush1.msra.mxu0 0.0
    %1719 = vmatprep.subr.mxu0 0.0
    %1720 = vmatpush1.msra.mxu0 0.0
    %1721 = vmatprep.subr.mxu0 0.0
    %1722 = vmatpush1.msra.mxu0 0.0
    %1723 = vmatprep.subr.mxu0 0.0
    %1724 = vmatpush1.msra.mxu0 0.0
    %1725 = vmatprep.subr.mxu0 0.0
    %1726 = vmatpush1.msra.mxu0 0.0
    %1727 = vmatprep.subr.mxu0 0.0
    %1728 = vmatpush1.msra.mxu0 0.0
    %1729 = vmatprep.subr.mxu0 0.0
    %1730 = vmatpush1.msra.mxu0 0.0
    %1731 = vmatprep.subr.mxu0 0.0
    %1732 = vmatpush1.msra.mxu0 0.0
    %1733 = vmatprep.subr.mxu0 0.0
    %1734 = vmatpush1.msra.mxu0 0.0
    %1735 = vmatprep.subr.mxu0 0.0
    %1736 = vmatpush1.msra.mxu0 0.0
    %1737 = vmatprep.subr.mxu0 0.0
    %1738 = vmatpush1.msra.mxu0 0.0
    %1739 = vmatprep.subr.mxu0 0.0
    %1740 = vmatpush1.msra.mxu0 0.0
    %1741 = vmatprep.mubr.f32.mxu0 0.0
    %1742 = vmatmul.mubr.f32.gmra.mrb[0].mxu0 %v670
    %v1743 = vpop.f32.mrb[0].mxu0
    %v1744 = vadd.f32 0.0, %v1743
    %v1745 = vpop.f32.mrb[0].mxu0
    %1746 = vdwg.mxu0
    %v1747 = vlaneseq
    %v1748 = vshrl.u32 %v1747, 7
    %v1749 = vsub.s32 0, %v1748
    %v1750 = vrot.slane %v1744, %v1749
    %1751 = vrot.lane.b32.xlu0 %v1580, 124
    %v1752 = vpop.permute.xlu0 %1751
    %1753 = vrot.lane.b32.xlu0 %v1585, 124
    %v1754 = vpop.permute.xlu0 %1753
    %v1755 = vsel %vm580, %v1752, 0
    %v1757 = vsel %vm580, %v1754, 0
    %1759 = vmatprep.subr.mxu0 0.0
    %1760 = vmatpush1.msra.mxu0 %v1598
    %1761 = vmatprep.subr.mxu0 0.0
    %1762 = vmatpush1.msra.mxu0 0.0
    %1763 = vmatprep.subr.mxu0 0.0
    %1764 = vmatpush1.msra.mxu0 0.0
    %1765 = vmatprep.subr.mxu0 0.0
    %1766 = vmatpush1.msra.mxu0 0.0
    %1767 = vmatprep.subr.mxu0 0.0
    %1768 = vmatpush1.msra.mxu0 0.0
    %1769 = vmatprep.subr.mxu0 0.0
    %1770 = vmatpush1.msra.mxu0 0.0
    %1771 = vmatprep.subr.mxu0 0.0
    %1772 = vmatpush1.msra.mxu0 0.0
    %1773 = vmatprep.subr.mxu0 0.0
    %1774 = vmatpush1.msra.mxu0 0.0
    %1775 = vmatprep.subr.mxu0 0.0
    %1776 = vmatpush1.msra.mxu0 0.0
    %1777 = vmatprep.subr.mxu0 0.0
    %1778 = vmatpush1.msra.mxu0 0.0
    %1779 = vmatprep.subr.mxu0 0.0
    %1780 = vmatpush1.msra.mxu0 0.0
    %1781 = vmatprep.subr.mxu0 0.0
    %1782 = vmatpush1.msra.mxu0 0.0
    %1783 = vmatprep.subr.mxu0 0.0
    %1784 = vmatpush1.msra.mxu0 0.0
    %1785 = vmatprep.subr.mxu0 0.0
    %1786 = vmatpush1.msra.mxu0 0.0
    %1787 = vmatprep.subr.mxu0 0.0
    %1788 = vmatpush1.msra.mxu0 0.0
    %1789 = vmatprep.subr.mxu0 0.0
    %1790 = vmatpush1.msra.mxu0 0.0
    %1791 = vmatprep.subr.mxu0 0.0
    %1792 = vmatpush1.msra.mxu0 0.0
    %1793 = vmatprep.subr.mxu0 0.0
    %1794 = vmatpush1.msra.mxu0 0.0
    %1795 = vmatprep.subr.mxu0 0.0
    %1796 = vmatpush1.msra.mxu0 0.0
    %1797 = vmatprep.subr.mxu0 0.0
    %1798 = vmatpush1.msra.mxu0 0.0
    %1799 = vmatprep.subr.mxu0 0.0
    %1800 = vmatpush1.msra.mxu0 0.0
    %1801 = vmatprep.subr.mxu0 0.0
    %1802 = vmatpush1.msra.mxu0 0.0
    %1803 = vmatprep.subr.mxu0 0.0
    %1804 = vmatpush1.msra.mxu0 0.0
    %1805 = vmatprep.subr.mxu0 0.0
    %1806 = vmatpush1.msra.mxu0 0.0
    %1807 = vmatprep.subr.mxu0 0.0
    %1808 = vmatpush1.msra.mxu0 0.0
    %1809 = vmatprep.subr.mxu0 0.0
    %1810 = vmatpush1.msra.mxu0 0.0
    %1811 = vmatprep.subr.mxu0 0.0
    %1812 = vmatpush1.msra.mxu0 0.0
    %1813 = vmatprep.subr.mxu0 0.0
    %1814 = vmatpush1.msra.mxu0 0.0
    %1815 = vmatprep.subr.mxu0 0.0
    %1816 = vmatpush1.msra.mxu0 0.0
    %1817 = vmatprep.subr.mxu0 0.0
    %1818 = vmatpush1.msra.mxu0 0.0
    %1819 = vmatprep.subr.mxu0 0.0
    %1820 = vmatpush1.msra.mxu0 0.0
    %1821 = vmatprep.subr.mxu0 0.0
    %1822 = vmatpush1.msra.mxu0 0.0
    %1823 = vmatprep.mubr.f32.mxu0 0.0
    %1824 = vmatmul.mubr.f32.gmra.mrb[0].mxu0 %v1755
    %v1825 = vpop.f32.mrb[0].mxu0
    %v1826 = vadd.f32 %v1750, %v1825
    %v1827 = vpop.f32.mrb[0].mxu0
    %1828 = vmatprep.mubr.f32.mxu0 0.0
    %1829 = vmatmul.mubr.f32.gmra.mrb[0].mxu0 %v1757
    %v1830 = vpop.f32.mrb[0].mxu0
    %v1831 = vadd.f32 %v1750, %v1830
    %v1832 = vpop.f32.mrb[0].mxu0
    %1833 = vdwg.mxu0
    %vm1834 = vcmp.gt.f32.partialorder %v1826, 0.0
    %vm1835 = vcmp.gt.f32.partialorder %v1831, 0.0
    %v1836 = vmul.f32 %v1826, 0.2
    %v1837 = vmul.f32 %v1831, 0.2
    %v1838 = vsel %vm1834, %v1826, %v1836
    %v1839 = vsel %vm1835, %v1831, %v1837
    %v1840 = vsel %vm835, %v1838, -inf
    %1841 = vmax.xlane.f32.xlu0 %v1840
    %v1842 = vpop.xlane.xlu0 %1841
    %v1843 = vsel %vm835, %v1839, -inf
    %1844 = vmax.xlane.f32.xlu0 %v1843
    %v1845 = vpop.xlane.xlu0 %1844
    %v1846 = vsub.f32 %v1838, %v1842
    %v1847 = vsub.f32 %v1839, %v1845
    %v1848 = vld [vmem:[%s14] sm:$0xff]
    %v1849 = vld [vmem:[%s14 + $0x8] sm:$0xff]
    %v1850 = vmul.f32 %v1846, 1.442695
    %v1851 = vpow.pop %v1850
    %v1852 = vmul.f32 %v1847, 1.442695
    %v1853 = vpow.pop %v1852
    %v1854 = vmul.f32 %v1848, %v1851
    %v1855 = vmul.f32 %v1849, %v1853
    %v1856 = vld [vmem:[%s12] sm:$0xff]
    %v1857 = vld [vmem:[%s12 + $0x8] sm:$0xff]
    %v1858 = vld [vmem:[%s12 + $0x10] sm:$0xff]
    %v1859 = vld [vmem:[%s12 + $0x18] sm:$0xff]
    %v1860 = vld [vmem:[%s12 + $0x20] sm:$0xff]
    %v1861 = vld [vmem:[%s12 + $0x28] sm:$0xff]
    %v1862 = vld [vmem:[%s12 + $0x30] sm:$0xff]
    %v1863 = vld [vmem:[%s12 + $0x38] sm:$0xff]
    %v1865 = vsel %vm835, %v1854, 0
    %v1868 = vsel %vm835, %v1855, 0
    %1870 = vmatprep.subr.mxu0 0.0
    %1871 = vmatpush1.msra.mxu0 %v1856
    %1872 = vmatprep.subr.mxu0 0.0
    %1873 = vmatpush1.msra.mxu0 %v1857
    %1874 = vmatprep.subr.mxu0 0.0
    %1875 = vmatpush1.msra.mxu0 %v1858
    %1876 = vmatprep.subr.mxu0 0.0
    %1877 = vmatpush1.msra.mxu0 %v1859
    %1878 = vmatprep.subr.mxu0 0.0
    %1879 = vmatpush1.msra.mxu0 %v1860
    %1880 = vmatprep.subr.mxu0 0.0
    %1881 = vmatpush1.msra.mxu0 %v1861
    %1882 = vmatprep.subr.mxu0 0.0
    %1883 = vmatpush1.msra.mxu0 %v1862
    %1884 = vmatprep.subr.mxu0 0.0
    %1885 = vmatpush1.msra.mxu0 %v1863
    %1886 = vmatprep.subr.mxu0 0.0
    %1887 = vmatpush1.msra.mxu0 0.0
    %1888 = vmatprep.subr.mxu0 0.0
    %1889 = vmatpush1.msra.mxu0 0.0
    %1890 = vmatprep.subr.mxu0 0.0
    %1891 = vmatpush1.msra.mxu0 0.0
    %1892 = vmatprep.subr.mxu0 0.0
    %1893 = vmatpush1.msra.mxu0 0.0
    %1894 = vmatprep.subr.mxu0 0.0
    %1895 = vmatpush1.msra.mxu0 0.0
    %1896 = vmatprep.subr.mxu0 0.0
    %1897 = vmatpush1.msra.mxu0 0.0
    %1898 = vmatprep.subr.mxu0 0.0
    %1899 = vmatpush1.msra.mxu0 0.0
    %1900 = vmatprep.subr.mxu0 0.0
    %1901 = vmatpush1.msra.mxu0 0.0
    %1902 = vmatprep.subr.mxu0 0.0
    %1903 = vmatpush1.msra.mxu0 0.0
    %1904 = vmatprep.subr.mxu0 0.0
    %1905 = vmatpush1.msra.mxu0 0.0
    %1906 = vmatprep.subr.mxu0 0.0
    %1907 = vmatpush1.msra.mxu0 0.0
    %1908 = vmatprep.subr.mxu0 0.0
    %1909 = vmatpush1.msra.mxu0 0.0
    %1910 = vmatprep.subr.mxu0 0.0
    %1911 = vmatpush1.msra.mxu0 0.0
    %1912 = vmatprep.subr.mxu0 0.0
    %1913 = vmatpush1.msra.mxu0 0.0
    %1914 = vmatprep.subr.mxu0 0.0
    %1915 = vmatpush1.msra.mxu0 0.0
    %1916 = vmatprep.subr.mxu0 0.0
    %1917 = vmatpush1.msra.mxu0 0.0
    %1918 = vmatprep.subr.mxu0 0.0
    %1919 = vmatpush1.msra.mxu0 0.0
    %1920 = vmatprep.subr.mxu0 0.0
    %1921 = vmatpush1.msra.mxu0 0.0
    %1922 = vmatprep.subr.mxu0 0.0
    %1923 = vmatpush1.msra.mxu0 0.0
    %1924 = vmatprep.subr.mxu0 0.0
    %1925 = vmatpush1.msra.mxu0 0.0
    %1926 = vmatprep.subr.mxu0 0.0
    %1927 = vmatpush1.msra.mxu0 0.0
    %1928 = vmatprep.subr.mxu0 0.0
    %1929 = vmatpush1.msra.mxu0 0.0
    %1930 = vmatprep.subr.mxu0 0.0
    %1931 = vmatpush1.msra.mxu0 0.0
    %1932 = vmatprep.subr.mxu0 0.0
    %1933 = vmatpush1.msra.mxu0 0.0
    %1934 = vmatprep.mubr.f32.mxu0 0.0
    %1935 = vmatmul.mubr.f32.gmra.mrb[0].mxu0 %v1865
    %v1936 = vpop.f32.mrb[0].mxu0
    %v1937 = vadd.f32 0.0, %v1936
    %v1938 = vpop.f32.mrb[0].mxu0
    %1939 = vmatprep.mubr.f32.mxu0 0.0
    %1940 = vmatmul.mubr.f32.gmra.mrb[0].mxu0 %v1868
    %v1941 = vpop.f32.mrb[0].mxu0
    %v1942 = vadd.f32 0.0, %v1941
    %v1943 = vpop.f32.mrb[0].mxu0
    %1944 = vdwg.mxu0
    %v1945 = vrcp.pop %v1937
    %v1946 = vrcp.pop %v1942
    %v1948 = vsel %vm580, %v1945, 0
    %v1951 = vsel %vm580, %v1946, 0
    %1953 = vmatprep.subr.mxu0 0.0
    %1954 = vmatpush1.msra.mxu0 %v1598
    %1955 = vmatprep.subr.mxu0 0.0
    %1956 = vmatpush1.msra.mxu0 0.0
    %1957 = vmatprep.subr.mxu0 0.0
    %1958 = vmatpush1.msra.mxu0 0.0
    %1959 = vmatprep.subr.mxu0 0.0
    %1960 = vmatpush1.msra.mxu0 0.0
    %1961 = vmatprep.subr.mxu0 0.0
    %1962 = vmatpush1.msra.mxu0 0.0
    %1963 = vmatprep.subr.mxu0 0.0
    %1964 = vmatpush1.msra.mxu0 0.0
    %1965 = vmatprep.subr.mxu0 0.0
    %1966 = vmatpush1.msra.mxu0 0.0
    %1967 = vmatprep.subr.mxu0 0.0
    %1968 = vmatpush1.msra.mxu0 0.0
    %1969 = vmatprep.subr.mxu0 0.0
    %1970 = vmatpush1.msra.mxu0 0.0
    %1971 = vmatprep.subr.mxu0 0.0
    %1972 = vmatpush1.msra.mxu0 0.0
    %1973 = vmatprep.subr.mxu0 0.0
    %1974 = vmatpush1.msra.mxu0 0.0
    %1975 = vmatprep.subr.mxu0 0.0
    %1976 = vmatpush1.msra.mxu0 0.0
    %1977 = vmatprep.subr.mxu0 0.0
    %1978 = vmatpush1.msra.mxu0 0.0
    %1979 = vmatprep.subr.mxu0 0.0
    %1980 = vmatpush1.msra.mxu0 0.0
    %1981 = vmatprep.subr.mxu0 0.0
    %1982 = vmatpush1.msra.mxu0 0.0
    %1983 = vmatprep.subr.mxu0 0.0
    %1984 = vmatpush1.msra.mxu0 0.0
    %1985 = vmatprep.subr.mxu0 0.0
    %1986 = vmatpush1.msra.mxu0 0.0
    %1987 = vmatprep.subr.mxu0 0.0
    %1988 = vmatpush1.msra.mxu0 0.0
    %1989 = vmatprep.subr.mxu0 0.0
    %1990 = vmatpush1.msra.mxu0 0.0
    %1991 = vmatprep.subr.mxu0 0.0
    %1992 = vmatpush1.msra.mxu0 0.0
    %1993 = vmatprep.subr.mxu0 0.0
    %1994 = vmatpush1.msra.mxu0 0.0
    %1995 = vmatprep.subr.mxu0 0.0
    %1996 = vmatpush1.msra.mxu0 0.0
    %1997 = vmatprep.subr.mxu0 0.0
    %1998 = vmatpush1.msra.mxu0 0.0
    %1999 = vmatprep.subr.mxu0 0.0
    %2000 = vmatpush1.msra.mxu0 0.0
    %2001 = vmatprep.subr.mxu0 0.0
    %2002 = vmatpush1.msra.mxu0 0.0
    %2003 = vmatprep.subr.mxu0 0.0
    %2004 = vmatpush1.msra.mxu0 0.0
    %2005 = vmatprep.subr.mxu0 0.0
    %2006 = vmatpush1.msra.mxu0 0.0
    %2007 = vmatprep.subr.mxu0 0.0
    %2008 = vmatpush1.msra.mxu0 0.0
    %2009 = vmatprep.subr.mxu0 0.0
    %2010 = vmatpush1.msra.mxu0 0.0
    %2011 = vmatprep.subr.mxu0 0.0
    %2012 = vmatpush1.msra.mxu0 0.0
    %2013 = vmatprep.subr.mxu0 0.0
    %2014 = vmatpush1.msra.mxu0 0.0
    %2015 = vmatprep.subr.mxu0 0.0
    %2016 = vmatpush1.msra.mxu0 0.0
    %2017 = vmatprep.mubr.f32.mxu0 0.0
    %2018 = vmatmul.mubr.f32.gmra.mrb[0].mxu0 %v1948
    %v2019 = vpop.f32.mrb[0].mxu0
    %v2020 = vadd.f32 0.0, %v2019
    %v2021 = vpop.f32.mrb[0].mxu0
    %2022 = vmatprep.mubr.f32.mxu0 0.0
    %2023 = vmatmul.mubr.f32.gmra.mrb[0].mxu0 %v1951
    %v2024 = vpop.f32.mrb[0].mxu0
    %v2025 = vadd.f32 0.0, %v2024
    %v2026 = vpop.f32.mrb[0].mxu0
    %2027 = vdwg.mxu0
    %v2028 = vmul.f32 %v1854, %v2020
    %v2029 = vmul.f32 %v1855, %v2025
    %v2030 = vpack.c.bf16 %v2029, %v2028
    %v2031 = vpack.c.bf16 %v1327, %v1323
    %v2032 = vpack.c.bf16 %v1329, %v1325
    %v2033 = vpack.c.bf16 %v1370, %v1366
    %v2034 = vpack.c.bf16 %v1372, %v1368
    %v2036 = vsel %vm835, %v2030, 0
    %2038 = vmatprep.subr.bf16.mxu0 0
    %2039 = vmatpush1.bf16.msra.mxu0 %v2031
    %2040 = vmatprep.subr.bf16.mxu0 0
    %2041 = vmatpush1.bf16.msra.mxu0 %v2032
    %2042 = vmatprep.subr.bf16.mxu0 0
    %2043 = vmatpush1.bf16.msra.mxu0 %v2033
    %2044 = vmatprep.subr.bf16.mxu0 0
    %2045 = vmatpush1.bf16.msra.mxu0 %v2034
    %2046 = vmatprep.subr.bf16.mxu0 0
    %2047 = vmatpush1.bf16.msra.mxu0 0
    %2048 = vmatprep.subr.bf16.mxu0 0
    %2049 = vmatpush1.bf16.msra.mxu0 0
    %2050 = vmatprep.subr.bf16.mxu0 0
    %2051 = vmatpush1.bf16.msra.mxu0 0
    %2052 = vmatprep.subr.bf16.mxu0 0
    %2053 = vmatpush1.bf16.msra.mxu0 0
    %2054 = vmatprep.subr.bf16.mxu0 0
    %2055 = vmatpush1.bf16.msra.mxu0 0
    %2056 = vmatprep.subr.bf16.mxu0 0
    %2057 = vmatpush1.bf16.msra.mxu0 0
    %2058 = vmatprep.subr.bf16.mxu0 0
    %2059 = vmatpush1.bf16.msra.mxu0 0
    %2060 = vmatprep.subr.bf16.mxu0 0
    %2061 = vmatpush1.bf16.msra.mxu0 0
    %2062 = vmatprep.subr.bf16.mxu0 0
    %2063 = vmatpush1.bf16.msra.mxu0 0
    %2064 = vmatprep.subr.bf16.mxu0 0
    %2065 = vmatpush1.bf16.msra.mxu0 0
    %2066 = vmatprep.subr.bf16.mxu0 0
    %2067 = vmatpush1.bf16.msra.mxu0 0
    %2068 = vmatprep.subr.bf16.mxu0 0
    %2069 = vmatpush1.bf16.msra.mxu0 0
    %2070 = vmatprep.mubr.bf16.mxu0 0
    %2071 = vmatmul.mubr.bf16.gmra.mrb[0].mxu0 %v2036
    %v2072 = vpop.f32.mrb[0].mxu0
    %v2073 = vadd.f32 0.0, %v2072
    %v2074 = vpop.f32.mrb[0].mxu0
    %v2075 = vpop.f32.mrb[0].mxu0
    %v2076 = vadd.f32 0.0, %v2075
    %v2077 = vpop.f32.mrb[0].mxu0
    %2078 = vdwg.mxu0
    %v2079 = vld [vmem:[%s15] sm:$0x1]
    %v2081 = vlaneseq
    %v2082 = vshrl.u32 %v2081, 7
    %v2083 = vsub.s32 0, %v2082
    %v2084 = vrot.slane %v2079, %v2083
    %v2086 = vmul.f32 %v2073, %v2084
    %v2087 = vmul.f32 %v2076, %v2084
    %v2088 = vld [vmem:[%s16] sm:$0x1]
    %v2090 = vlaneseq
    %v2091 = vshrl.u32 %v2090, 7
    %v2092 = vsub.s32 0, %v2091
    %v2093 = vrot.slane %v2088, %v2092
    %v2095 = vadd.f32 %v2086, %v2093
    %v2096 = vadd.f32 %v2087, %v2093
    %v2097 = vmax.f32 %v2095, 0.0
    %v2098 = vmax.f32 %v2096, 0.0
    %v2099 = vpack.c.bf16 %v2098, %v2097
    %v2100 = vld [vmem:[%s17] sm:$0xf]
    %v2101 = vld [vmem:[%s17 + $0x4] sm:$0xf]
    %v2102 = vld [vmem:[%s17 + $0x8] sm:$0xf]
    %v2103 = vld [vmem:[%s17 + $0xc] sm:$0xf]
    %v2104 = vld [vmem:[%s17 + $0x10] sm:$0xf]
    %v2105 = vld [vmem:[%s17 + $0x14] sm:$0xf]
    %v2106 = vld [vmem:[%s17 + $0x18] sm:$0xf]
    %v2107 = vld [vmem:[%s17 + $0x1c] sm:$0xf]
    %v2108 = vld [vmem:[%s17 + $0x20] sm:$0xf]
    %v2109 = vld [vmem:[%s17 + $0x24] sm:$0xf]
    %v2110 = vld [vmem:[%s17 + $0x28] sm:$0xf]
    %v2111 = vld [vmem:[%s17 + $0x2c] sm:$0xf]
    %v2112 = vld [vmem:[%s17 + $0x30] sm:$0xf]
    %v2113 = vld [vmem:[%s17 + $0x34] sm:$0xf]
    %v2114 = vld [vmem:[%s17 + $0x38] sm:$0xf]
    %v2115 = vld [vmem:[%s17 + $0x3c] sm:$0xf]
    %v2132 = vunpack.c.l.b16 %v2100
    %v2133 = vunpack.c.l.b16 %v2101
    %v2134 = vunpack.c.l.b16 %v2102
    %v2135 = vunpack.c.l.b16 %v2103
    %v2136 = vunpack.c.l.b16 %v2104
    %v2137 = vunpack.c.l.b16 %v2105
    %v2138 = vunpack.c.l.b16 %v2106
    %v2139 = vunpack.c.l.b16 %v2107
    %v2140 = vunpack.c.l.b16 %v2108
    %v2141 = vunpack.c.l.b16 %v2109
    %v2142 = vunpack.c.l.b16 %v2110
    %v2143 = vunpack.c.l.b16 %v2111
    %v2144 = vunpack.c.l.b16 %v2112
    %v2145 = vunpack.c.l.b16 %v2113
    %v2146 = vunpack.c.l.b16 %v2114
    %v2147 = vunpack.c.l.b16 %v2115
    %v2148 = vpack.c.b16 %v2133, %v2132
    %v2149 = vpack.c.b16 %v2135, %v2134
    %v2150 = vpack.c.b16 %v2137, %v2136
    %v2151 = vpack.c.b16 %v2139, %v2138
    %v2152 = vpack.c.b16 %v2141, %v2140
    %v2153 = vpack.c.b16 %v2143, %v2142
    %v2154 = vpack.c.b16 %v2145, %v2144
    %v2155 = vpack.c.b16 %v2147, %v2146
    %2164 = vmatprep.subr.bf16.mxu0 0
    %2165 = vmatpush1.bf16.msra.mxu0 %v2148
    %2166 = vmatprep.subr.bf16.mxu0 0
    %2167 = vmatpush1.bf16.msra.mxu0 %v2149
    %2168 = vmatprep.subr.bf16.mxu0 0
    %2169 = vmatpush1.bf16.msra.mxu0 %v2150
    %2170 = vmatprep.subr.bf16.mxu0 0
    %2171 = vmatpush1.bf16.msra.mxu0 %v2151
    %2172 = vmatprep.subr.bf16.mxu0 0
    %2173 = vmatpush1.bf16.msra.mxu0 %v2152
    %2174 = vmatprep.subr.bf16.mxu0 0
    %2175 = vmatpush1.bf16.msra.mxu0 %v2153
    %2176 = vmatprep.subr.bf16.mxu0 0
    %2177 = vmatpush1.bf16.msra.mxu0 %v2154
    %2178 = vmatprep.subr.bf16.mxu0 0
    %2179 = vmatpush1.bf16.msra.mxu0 %v2155
    %2180 = vmatprep.subr.bf16.mxu0 0
    %2181 = vmatpush1.bf16.msra.mxu0 0
    %2182 = vmatprep.subr.bf16.mxu0 0
    %2183 = vmatpush1.bf16.msra.mxu0 0
    %2184 = vmatprep.subr.bf16.mxu0 0
    %2185 = vmatpush1.bf16.msra.mxu0 0
    %2186 = vmatprep.subr.bf16.mxu0 0
    %2187 = vmatpush1.bf16.msra.mxu0 0
    %2188 = vmatprep.subr.bf16.mxu0 0
    %2189 = vmatpush1.bf16.msra.mxu0 0
    %2190 = vmatprep.subr.bf16.mxu0 0
    %2191 = vmatpush1.bf16.msra.mxu0 0
    %2192 = vmatprep.subr.bf16.mxu0 0
    %2193 = vmatpush1.bf16.msra.mxu0 0
    %2194 = vmatprep.subr.bf16.mxu0 0
    %2195 = vmatpush1.bf16.msra.mxu0 0
    %2196 = vmatprep.mubr.bf16.mxu0 0
    %2197 = vmatmul.mubr.bf16.gmra.mrb[0].mxu0 %v2099
    %v2198 = vpop.f32.mrb[0].mxu0
    %v2199 = vadd.f32 0.0, %v2198
    %v2200 = vpop.f32.mrb[0].mxu0
    %v2201 = vpop.f32.mrb[0].mxu0
    %v2202 = vadd.f32 0.0, %v2201
    %v2203 = vpop.f32.mrb[0].mxu0
    %2204 = vdwg.mxu0
    %v2205 = vld [vmem:[%s18] sm:$0xff]
    %v2206 = vld [vmem:[%s18 + $0x8] sm:$0xff]
    %v2207 = vld [vmem:[%s18 + $0x10] sm:$0xff]
    %v2208 = vld [vmem:[%s18 + $0x18] sm:$0xff]
    %v2209 = vld [vmem:[%s18 + $0x20] sm:$0xff]
    %v2210 = vld [vmem:[%s18 + $0x28] sm:$0xff]
    %v2211 = vld [vmem:[%s18 + $0x30] sm:$0xff]
    %v2212 = vld [vmem:[%s18 + $0x38] sm:$0xff]
    %v2213 = vld [vmem:[%s18 + $0x40] sm:$0xff]
    %v2214 = vld [vmem:[%s18 + $0x48] sm:$0xff]
    %v2215 = vld [vmem:[%s18 + $0x50] sm:$0xff]
    %v2216 = vld [vmem:[%s18 + $0x58] sm:$0xff]
    %v2217 = vld [vmem:[%s18 + $0x60] sm:$0xff]
    %v2218 = vld [vmem:[%s18 + $0x68] sm:$0xff]
    %v2219 = vld [vmem:[%s18 + $0x70] sm:$0xff]
    %v2220 = vld [vmem:[%s18 + $0x78] sm:$0xff]
    %2221 = vmatprep.subr.mxu0 0.0
    %2222 = vmatpush1.msra.mxu0 %v2205
    %2223 = vmatprep.subr.mxu0 0.0
    %2224 = vmatpush1.msra.mxu0 %v2206
    %2225 = vmatprep.subr.mxu0 0.0
    %2226 = vmatpush1.msra.mxu0 %v2207
    %2227 = vmatprep.subr.mxu0 0.0
    %2228 = vmatpush1.msra.mxu0 %v2208
    %2229 = vmatprep.subr.mxu0 0.0
    %2230 = vmatpush1.msra.mxu0 %v2209
    %2231 = vmatprep.subr.mxu0 0.0
    %2232 = vmatpush1.msra.mxu0 %v2210
    %2233 = vmatprep.subr.mxu0 0.0
    %2234 = vmatpush1.msra.mxu0 %v2211
    %2235 = vmatprep.subr.mxu0 0.0
    %2236 = vmatpush1.msra.mxu0 %v2212
    %2237 = vmatprep.subr.mxu0 0.0
    %2238 = vmatpush1.msra.mxu0 %v2213
    %2239 = vmatprep.subr.mxu0 0.0
    %2240 = vmatpush1.msra.mxu0 %v2214
    %2241 = vmatprep.subr.mxu0 0.0
    %2242 = vmatpush1.msra.mxu0 %v2215
    %2243 = vmatprep.subr.mxu0 0.0
    %2244 = vmatpush1.msra.mxu0 %v2216
    %2245 = vmatprep.subr.mxu0 0.0
    %2246 = vmatpush1.msra.mxu0 %v2217
    %2247 = vmatprep.subr.mxu0 0.0
    %2248 = vmatpush1.msra.mxu0 %v2218
    %2249 = vmatprep.subr.mxu0 0.0
    %2250 = vmatpush1.msra.mxu0 %v2219
    %2251 = vmatprep.subr.mxu0 0.0
    %2252 = vmatpush1.msra.mxu0 %v2220
    %2253 = vmatprep.subr.mxu0 0.0
    %2254 = vmatpush1.msra.mxu0 0.0
    %2255 = vmatprep.subr.mxu0 0.0
    %2256 = vmatpush1.msra.mxu0 0.0
    %2257 = vmatprep.subr.mxu0 0.0
    %2258 = vmatpush1.msra.mxu0 0.0
    %2259 = vmatprep.subr.mxu0 0.0
    %2260 = vmatpush1.msra.mxu0 0.0
    %2261 = vmatprep.subr.mxu0 0.0
    %2262 = vmatpush1.msra.mxu0 0.0
    %2263 = vmatprep.subr.mxu0 0.0
    %2264 = vmatpush1.msra.mxu0 0.0
    %2265 = vmatprep.subr.mxu0 0.0
    %2266 = vmatpush1.msra.mxu0 0.0
    %2267 = vmatprep.subr.mxu0 0.0
    %2268 = vmatpush1.msra.mxu0 0.0
    %2269 = vmatprep.subr.mxu0 0.0
    %2270 = vmatpush1.msra.mxu0 0.0
    %2271 = vmatprep.subr.mxu0 0.0
    %2272 = vmatpush1.msra.mxu0 0.0
    %2273 = vmatprep.subr.mxu0 0.0
    %2274 = vmatpush1.msra.mxu0 0.0
    %2275 = vmatprep.subr.mxu0 0.0
    %2276 = vmatpush1.msra.mxu0 0.0
    %2277 = vmatprep.subr.mxu0 0.0
    %2278 = vmatpush1.msra.mxu0 0.0
    %2279 = vmatprep.subr.mxu0 0.0
    %2280 = vmatpush1.msra.mxu0 0.0
    %2281 = vmatprep.subr.mxu0 0.0
    %2282 = vmatpush1.msra.mxu0 0.0
    %2283 = vmatprep.subr.mxu0 0.0
    %2284 = vmatpush1.msra.mxu0 0.0
    %2285 = vmatprep.mubr.f32.mxu0 0.0
    %2286 = vmatmul.mubr.f32.gmra.mrb[0].mxu0 %v2199
    %v2287 = vpop.f32.mrb[0].mxu0
    %v2288 = vadd.f32 0.0, %v2287
    %v2289 = vpop.f32.mrb[0].mxu0
    %2290 = vmatprep.mubr.f32.mxu0 0.0
    %2291 = vmatmul.mubr.f32.gmra.mrb[0].mxu0 %v2202
    %v2292 = vpop.f32.mrb[0].mxu0
    %v2293 = vadd.f32 0.0, %v2292
    %v2294 = vpop.f32.mrb[0].mxu0
    %2295 = vdwg.mxu0
    %v2296 = vld [vmem:[%s19] sm:$0x1]
    %v2297 = vld [vmem:[%s21] sm:$0xff]
    %v2298 = vld [vmem:[%s21 + $0x8] sm:$0xff]
    %vm2299 = vcmask 7168
    %v2301 = vsel %vm2299, %v2288, 0
    %v2304 = vsel %vm2299, %v2293, 0
    %vm2306 = vcmask 1040384
    %v2308 = vsel %vm2306, %v2296, 0
    %2310 = vmatprep.subr.mxu0 0.0
    %2311 = vmatpush1.msra.mxu0 %v2308
    %2312 = vmatprep.subr.mxu0 0.0
    %2313 = vmatpush1.msra.mxu0 0.0
    %2314 = vmatprep.subr.mxu0 0.0
    %2315 = vmatpush1.msra.mxu0 0.0
    %2316 = vmatprep.subr.mxu0 0.0
    %2317 = vmatpush1.msra.mxu0 0.0
    %2318 = vmatprep.subr.mxu0 0.0
    %2319 = vmatpush1.msra.mxu0 0.0
    %2320 = vmatprep.subr.mxu0 0.0
    %2321 = vmatpush1.msra.mxu0 0.0
    %2322 = vmatprep.subr.mxu0 0.0
    %2323 = vmatpush1.msra.mxu0 0.0
    %2324 = vmatprep.subr.mxu0 0.0
    %2325 = vmatpush1.msra.mxu0 0.0
    %2326 = vmatprep.subr.mxu0 0.0
    %2327 = vmatpush1.msra.mxu0 0.0
    %2328 = vmatprep.subr.mxu0 0.0
    %2329 = vmatpush1.msra.mxu0 0.0
    %2330 = vmatprep.subr.mxu0 0.0
    %2331 = vmatpush1.msra.mxu0 0.0
    %2332 = vmatprep.subr.mxu0 0.0
    %2333 = vmatpush1.msra.mxu0 0.0
    %2334 = vmatprep.subr.mxu0 0.0
    %2335 = vmatpush1.msra.mxu0 0.0
    %2336 = vmatprep.subr.mxu0 0.0
    %2337 = vmatpush1.msra.mxu0 0.0
    %2338 = vmatprep.subr.mxu0 0.0
    %2339 = vmatpush1.msra.mxu0 0.0
    %2340 = vmatprep.subr.mxu0 0.0
    %2341 = vmatpush1.msra.mxu0 0.0
    %2342 = vmatprep.subr.mxu0 0.0
    %2343 = vmatpush1.msra.mxu0 0.0
    %2344 = vmatprep.subr.mxu0 0.0
    %2345 = vmatpush1.msra.mxu0 0.0
    %2346 = vmatprep.subr.mxu0 0.0
    %2347 = vmatpush1.msra.mxu0 0.0
    %2348 = vmatprep.subr.mxu0 0.0
    %2349 = vmatpush1.msra.mxu0 0.0
    %2350 = vmatprep.subr.mxu0 0.0
    %2351 = vmatpush1.msra.mxu0 0.0
    %2352 = vmatprep.subr.mxu0 0.0
    %2353 = vmatpush1.msra.mxu0 0.0
    %2354 = vmatprep.subr.mxu0 0.0
    %2355 = vmatpush1.msra.mxu0 0.0
    %2356 = vmatprep.subr.mxu0 0.0
    %2357 = vmatpush1.msra.mxu0 0.0
    %2358 = vmatprep.subr.mxu0 0.0
    %2359 = vmatpush1.msra.mxu0 0.0
    %2360 = vmatprep.subr.mxu0 0.0
    %2361 = vmatpush1.msra.mxu0 0.0
    %2362 = vmatprep.subr.mxu0 0.0
    %2363 = vmatpush1.msra.mxu0 0.0
    %2364 = vmatprep.subr.mxu0 0.0
    %2365 = vmatpush1.msra.mxu0 0.0
    %2366 = vmatprep.subr.mxu0 0.0
    %2367 = vmatpush1.msra.mxu0 0.0
    %2368 = vmatprep.subr.mxu0 0.0
    %2369 = vmatpush1.msra.mxu0 0.0
    %2370 = vmatprep.subr.mxu0 0.0
    %2371 = vmatpush1.msra.mxu0 0.0
    %2372 = vmatprep.subr.mxu0 0.0
    %2373 = vmatpush1.msra.mxu0 0.0
    %2374 = vmatprep.mubr.f32.mxu0 0.0
    %2375 = vmatmul.mubr.f32.gmra.mrb[0].mxu0 %v2301
    %v2376 = vpop.f32.mrb[0].mxu0
    %v2377 = vadd.f32 0.0, %v2376
    %v2378 = vpop.f32.mrb[0].mxu0
    %2379 = vmatprep.mubr.f32.mxu0 0.0
    %2380 = vmatmul.mubr.f32.gmra.mrb[0].mxu0 %v2304
    %v2381 = vpop.f32.mrb[0].mxu0
    %v2382 = vadd.f32 0.0, %v2381
    %v2383 = vpop.f32.mrb[0].mxu0
    %2384 = vdwg.mxu0
    %v2385 = vmul.f32 %v2297, %v2377
    %v2386 = vmul.f32 %v2298, %v2382
    %2387 = vmatprep.subr.mxu0 0.0
    %2388 = vmatpush1.msra.mxu0 %v2385
    %2389 = vmatprep.subr.mxu0 0.0
    %2390 = vmatpush1.msra.mxu0 %v2386
    %2391 = vmatprep.subr.mxu0 0.0
    %2392 = vmatpush1.msra.mxu0 0.0
    %2393 = vmatprep.subr.mxu0 0.0
    %2394 = vmatpush1.msra.mxu0 0.0
    %2395 = vmatprep.subr.mxu0 0.0
    %2396 = vmatpush1.msra.mxu0 0.0
    %2397 = vmatprep.subr.mxu0 0.0
    %2398 = vmatpush1.msra.mxu0 0.0
    %2399 = vmatprep.subr.mxu0 0.0
    %2400 = vmatpush1.msra.mxu0 0.0
    %2401 = vmatprep.subr.mxu0 0.0
    %2402 = vmatpush1.msra.mxu0 0.0
    %2403 = vmatprep.subr.mxu0 0.0
    %2404 = vmatpush1.msra.mxu0 0.0
    %2405 = vmatprep.subr.mxu0 0.0
    %2406 = vmatpush1.msra.mxu0 0.0
    %2407 = vmatprep.subr.mxu0 0.0
    %2408 = vmatpush1.msra.mxu0 0.0
    %2409 = vmatprep.subr.mxu0 0.0
    %2410 = vmatpush1.msra.mxu0 0.0
    %2411 = vmatprep.subr.mxu0 0.0
    %2412 = vmatpush1.msra.mxu0 0.0
    %2413 = vmatprep.subr.mxu0 0.0
    %2414 = vmatpush1.msra.mxu0 0.0
    %2415 = vmatprep.subr.mxu0 0.0
    %2416 = vmatpush1.msra.mxu0 0.0
    %2417 = vmatprep.subr.mxu0 0.0
    %2418 = vmatpush1.msra.mxu0 0.0
    %2419 = vmatprep.subr.mxu0 0.0
    %2420 = vmatpush1.msra.mxu0 0.0
    %2421 = vmatprep.subr.mxu0 0.0
    %2422 = vmatpush1.msra.mxu0 0.0
    %2423 = vmatprep.subr.mxu0 0.0
    %2424 = vmatpush1.msra.mxu0 0.0
    %2425 = vmatprep.subr.mxu0 0.0
    %2426 = vmatpush1.msra.mxu0 0.0
    %2427 = vmatprep.subr.mxu0 0.0
    %2428 = vmatpush1.msra.mxu0 0.0
    %2429 = vmatprep.subr.mxu0 0.0
    %2430 = vmatpush1.msra.mxu0 0.0
    %2431 = vmatprep.subr.mxu0 0.0
    %2432 = vmatpush1.msra.mxu0 0.0
    %2433 = vmatprep.subr.mxu0 0.0
    %2434 = vmatpush1.msra.mxu0 0.0
    %2435 = vmatprep.subr.mxu0 0.0
    %2436 = vmatpush1.msra.mxu0 0.0
    %2437 = vmatprep.subr.mxu0 0.0
    %2438 = vmatpush1.msra.mxu0 0.0
    %2439 = vmatprep.subr.mxu0 0.0
    %2440 = vmatpush1.msra.mxu0 0.0
    %2441 = vmatprep.subr.mxu0 0.0
    %2442 = vmatpush1.msra.mxu0 0.0
    %2443 = vmatprep.subr.mxu0 0.0
    %2444 = vmatpush1.msra.mxu0 0.0
    %2445 = vmatprep.subr.mxu0 0.0
    %2446 = vmatpush1.msra.mxu0 0.0
    %2447 = vmatprep.subr.mxu0 0.0
    %2448 = vmatpush1.msra.mxu0 0.0
    %2449 = vmatprep.subr.mxu0 0.0
    %2450 = vmatpush1.msra.mxu0 0.0
    %2451 = vmatprep.mubr.f32.mxu0 0.0
    %2452 = vmatmul.mubr.f32.gmra.mrb[0].mxu0 %v670
    %v2453 = vpop.f32.mrb[0].mxu0
    %v2454 = vadd.f32 0.0, %v2453
    %v2455 = vpop.f32.mrb[0].mxu0
    %2456 = vdwg.mxu0
    %v2457 = vlaneseq
    %v2458 = vshrl.u32 %v2457, 7
    %v2459 = vsub.s32 0, %v2458
    %v2460 = vrot.slane %v2454, %v2459
    %2461 = vrot.lane.b32.xlu0 %v2288, 127
    %v2462 = vpop.permute.xlu0 %2461
    %2463 = vrot.lane.b32.xlu0 %v2293, 127
    %v2464 = vpop.permute.xlu0 %2463
    %v2465 = vsel %vm2299, %v2462, 0
    %v2467 = vsel %vm2299, %v2464, 0
    %2469 = vmatprep.subr.mxu0 0.0
    %2470 = vmatpush1.msra.mxu0 %v2308
    %2471 = vmatprep.subr.mxu0 0.0
    %2472 = vmatpush1.msra.mxu0 0.0
    %2473 = vmatprep.subr.mxu0 0.0
    %2474 = vmatpush1.msra.mxu0 0.0
    %2475 = vmatprep.subr.mxu0 0.0
    %2476 = vmatpush1.msra.mxu0 0.0
    %2477 = vmatprep.subr.mxu0 0.0
    %2478 = vmatpush1.msra.mxu0 0.0
    %2479 = vmatprep.subr.mxu0 0.0
    %2480 = vmatpush1.msra.mxu0 0.0
    %2481 = vmatprep.subr.mxu0 0.0
    %2482 = vmatpush1.msra.mxu0 0.0
    %2483 = vmatprep.subr.mxu0 0.0
    %2484 = vmatpush1.msra.mxu0 0.0
    %2485 = vmatprep.subr.mxu0 0.0
    %2486 = vmatpush1.msra.mxu0 0.0
    %2487 = vmatprep.subr.mxu0 0.0
    %2488 = vmatpush1.msra.mxu0 0.0
    %2489 = vmatprep.subr.mxu0 0.0
    %2490 = vmatpush1.msra.mxu0 0.0
    %2491 = vmatprep.subr.mxu0 0.0
    %2492 = vmatpush1.msra.mxu0 0.0
    %2493 = vmatprep.subr.mxu0 0.0
    %2494 = vmatpush1.msra.mxu0 0.0
    %2495 = vmatprep.subr.mxu0 0.0
    %2496 = vmatpush1.msra.mxu0 0.0
    %2497 = vmatprep.subr.mxu0 0.0
    %2498 = vmatpush1.msra.mxu0 0.0
    %2499 = vmatprep.subr.mxu0 0.0
    %2500 = vmatpush1.msra.mxu0 0.0
    %2501 = vmatprep.subr.mxu0 0.0
    %2502 = vmatpush1.msra.mxu0 0.0
    %2503 = vmatprep.subr.mxu0 0.0
    %2504 = vmatpush1.msra.mxu0 0.0
    %2505 = vmatprep.subr.mxu0 0.0
    %2506 = vmatpush1.msra.mxu0 0.0
    %2507 = vmatprep.subr.mxu0 0.0
    %2508 = vmatpush1.msra.mxu0 0.0
    %2509 = vmatprep.subr.mxu0 0.0
    %2510 = vmatpush1.msra.mxu0 0.0
    %2511 = vmatprep.subr.mxu0 0.0
    %2512 = vmatpush1.msra.mxu0 0.0
    %2513 = vmatprep.subr.mxu0 0.0
    %2514 = vmatpush1.msra.mxu0 0.0
    %2515 = vmatprep.subr.mxu0 0.0
    %2516 = vmatpush1.msra.mxu0 0.0
    %2517 = vmatprep.subr.mxu0 0.0
    %2518 = vmatpush1.msra.mxu0 0.0
    %2519 = vmatprep.subr.mxu0 0.0
    %2520 = vmatpush1.msra.mxu0 0.0
    %2521 = vmatprep.subr.mxu0 0.0
    %2522 = vmatpush1.msra.mxu0 0.0
    %2523 = vmatprep.subr.mxu0 0.0
    %2524 = vmatpush1.msra.mxu0 0.0
    %2525 = vmatprep.subr.mxu0 0.0
    %2526 = vmatpush1.msra.mxu0 0.0
    %2527 = vmatprep.subr.mxu0 0.0
    %2528 = vmatpush1.msra.mxu0 0.0
    %2529 = vmatprep.subr.mxu0 0.0
    %2530 = vmatpush1.msra.mxu0 0.0
    %2531 = vmatprep.subr.mxu0 0.0
    %2532 = vmatpush1.msra.mxu0 0.0
    %2533 = vmatprep.mubr.f32.mxu0 0.0
    %2534 = vmatmul.mubr.f32.gmra.mrb[0].mxu0 %v2465
    %v2535 = vpop.f32.mrb[0].mxu0
    %v2536 = vadd.f32 %v2460, %v2535
    %v2537 = vpop.f32.mrb[0].mxu0
    %2538 = vmatprep.mubr.f32.mxu0 0.0
    %2539 = vmatmul.mubr.f32.gmra.mrb[0].mxu0 %v2467
    %v2540 = vpop.f32.mrb[0].mxu0
    %v2541 = vadd.f32 %v2460, %v2540
    %v2542 = vpop.f32.mrb[0].mxu0
    %2543 = vdwg.mxu0
    %vm2544 = vcmp.gt.f32.partialorder %v2536, 0.0
    %vm2545 = vcmp.gt.f32.partialorder %v2541, 0.0
    %v2546 = vmul.f32 %v2536, 0.2
    %v2547 = vmul.f32 %v2541, 0.2
    %v2548 = vsel %vm2544, %v2536, %v2546
    %v2549 = vsel %vm2545, %v2541, %v2547
    %v2550 = vsel %vm668, %v2548, -inf
    %2551 = vmax.xlane.f32.xlu0 %v2550
    %v2552 = vpop.xlane.xlu0 %2551
    %v2553 = vsel %vm668, %v2549, -inf
    %2554 = vmax.xlane.f32.xlu0 %v2553
    %v2555 = vpop.xlane.xlu0 %2554
    %v2556 = vsub.f32 %v2548, %v2552
    %v2557 = vsub.f32 %v2549, %v2555
    %v2558 = vld [vmem:[%s22] sm:$0xff]
    %v2559 = vld [vmem:[%s22 + $0x8] sm:$0xff]
    %v2560 = vmul.f32 %v2556, 1.442695
    %v2561 = vpow.pop %v2560
    %v2562 = vmul.f32 %v2557, 1.442695
    %v2563 = vpow.pop %v2562
    %v2564 = vmul.f32 %v2558, %v2561
    %v2565 = vmul.f32 %v2559, %v2563
    %v2566 = vld [vmem:[%s20] sm:$0xff]
    %v2567 = vld [vmem:[%s20 + $0x8] sm:$0xff]
    %v2569 = vsel %vm668, %v2564, 0
    %v2572 = vsel %vm668, %v2565, 0
    %2574 = vmatprep.subr.mxu0 0.0
    %2575 = vmatpush1.msra.mxu0 %v2566
    %2576 = vmatprep.subr.mxu0 0.0
    %2577 = vmatpush1.msra.mxu0 %v2567
    %2578 = vmatprep.subr.mxu0 0.0
    %2579 = vmatpush1.msra.mxu0 0.0
    %2580 = vmatprep.subr.mxu0 0.0
    %2581 = vmatpush1.msra.mxu0 0.0
    %2582 = vmatprep.subr.mxu0 0.0
    %2583 = vmatpush1.msra.mxu0 0.0
    %2584 = vmatprep.subr.mxu0 0.0
    %2585 = vmatpush1.msra.mxu0 0.0
    %2586 = vmatprep.subr.mxu0 0.0
    %2587 = vmatpush1.msra.mxu0 0.0
    %2588 = vmatprep.subr.mxu0 0.0
    %2589 = vmatpush1.msra.mxu0 0.0
    %2590 = vmatprep.subr.mxu0 0.0
    %2591 = vmatpush1.msra.mxu0 0.0
    %2592 = vmatprep.subr.mxu0 0.0
    %2593 = vmatpush1.msra.mxu0 0.0
    %2594 = vmatprep.subr.mxu0 0.0
    %2595 = vmatpush1.msra.mxu0 0.0
    %2596 = vmatprep.subr.mxu0 0.0
    %2597 = vmatpush1.msra.mxu0 0.0
    %2598 = vmatprep.subr.mxu0 0.0
    %2599 = vmatpush1.msra.mxu0 0.0
    %2600 = vmatprep.subr.mxu0 0.0
    %2601 = vmatpush1.msra.mxu0 0.0
    %2602 = vmatprep.subr.mxu0 0.0
    %2603 = vmatpush1.msra.mxu0 0.0
    %2604 = vmatprep.subr.mxu0 0.0
    %2605 = vmatpush1.msra.mxu0 0.0
    %2606 = vmatprep.subr.mxu0 0.0
    %2607 = vmatpush1.msra.mxu0 0.0
    %2608 = vmatprep.subr.mxu0 0.0
    %2609 = vmatpush1.msra.mxu0 0.0
    %2610 = vmatprep.subr.mxu0 0.0
    %2611 = vmatpush1.msra.mxu0 0.0
    %2612 = vmatprep.subr.mxu0 0.0
    %2613 = vmatpush1.msra.mxu0 0.0
    %2614 = vmatprep.subr.mxu0 0.0
    %2615 = vmatpush1.msra.mxu0 0.0
    %2616 = vmatprep.subr.mxu0 0.0
    %2617 = vmatpush1.msra.mxu0 0.0
    %2618 = vmatprep.subr.mxu0 0.0
    %2619 = vmatpush1.msra.mxu0 0.0
    %2620 = vmatprep.subr.mxu0 0.0
    %2621 = vmatpush1.msra.mxu0 0.0
    %2622 = vmatprep.subr.mxu0 0.0
    %2623 = vmatpush1.msra.mxu0 0.0
    %2624 = vmatprep.subr.mxu0 0.0
    %2625 = vmatpush1.msra.mxu0 0.0
    %2626 = vmatprep.subr.mxu0 0.0
    %2627 = vmatpush1.msra.mxu0 0.0
    %2628 = vmatprep.subr.mxu0 0.0
    %2629 = vmatpush1.msra.mxu0 0.0
    %2630 = vmatprep.subr.mxu0 0.0
    %2631 = vmatpush1.msra.mxu0 0.0
    %2632 = vmatprep.subr.mxu0 0.0
    %2633 = vmatpush1.msra.mxu0 0.0
    %2634 = vmatprep.subr.mxu0 0.0
    %2635 = vmatpush1.msra.mxu0 0.0
    %2636 = vmatprep.subr.mxu0 0.0
    %2637 = vmatpush1.msra.mxu0 0.0
    %2638 = vmatprep.mubr.f32.mxu0 0.0
    %2639 = vmatmul.mubr.f32.gmra.mrb[0].mxu0 %v2569
    %v2640 = vpop.f32.mrb[0].mxu0
    %v2641 = vadd.f32 0.0, %v2640
    %v2642 = vpop.f32.mrb[0].mxu0
    %2643 = vmatprep.mubr.f32.mxu0 0.0
    %2644 = vmatmul.mubr.f32.gmra.mrb[0].mxu0 %v2572
    %v2645 = vpop.f32.mrb[0].mxu0
    %v2646 = vadd.f32 0.0, %v2645
    %v2647 = vpop.f32.mrb[0].mxu0
    %2648 = vdwg.mxu0
    %v2649 = vrcp.pop %v2641
    %v2650 = vrcp.pop %v2646
    %v2652 = vsel %vm2299, %v2649, 0
    %v2655 = vsel %vm2299, %v2650, 0
    %2657 = vmatprep.subr.mxu0 0.0
    %2658 = vmatpush1.msra.mxu0 %v2308
    %2659 = vmatprep.subr.mxu0 0.0
    %2660 = vmatpush1.msra.mxu0 0.0
    %2661 = vmatprep.subr.mxu0 0.0
    %2662 = vmatpush1.msra.mxu0 0.0
    %2663 = vmatprep.subr.mxu0 0.0
    %2664 = vmatpush1.msra.mxu0 0.0
    %2665 = vmatprep.subr.mxu0 0.0
    %2666 = vmatpush1.msra.mxu0 0.0
    %2667 = vmatprep.subr.mxu0 0.0
    %2668 = vmatpush1.msra.mxu0 0.0
    %2669 = vmatprep.subr.mxu0 0.0
    %2670 = vmatpush1.msra.mxu0 0.0
    %2671 = vmatprep.subr.mxu0 0.0
    %2672 = vmatpush1.msra.mxu0 0.0
    %2673 = vmatprep.subr.mxu0 0.0
    %2674 = vmatpush1.msra.mxu0 0.0
    %2675 = vmatprep.subr.mxu0 0.0
    %2676 = vmatpush1.msra.mxu0 0.0
    %2677 = vmatprep.subr.mxu0 0.0
    %2678 = vmatpush1.msra.mxu0 0.0
    %2679 = vmatprep.subr.mxu0 0.0
    %2680 = vmatpush1.msra.mxu0 0.0
    %2681 = vmatprep.subr.mxu0 0.0
    %2682 = vmatpush1.msra.mxu0 0.0
    %2683 = vmatprep.subr.mxu0 0.0
    %2684 = vmatpush1.msra.mxu0 0.0
    %2685 = vmatprep.subr.mxu0 0.0
    %2686 = vmatpush1.msra.mxu0 0.0
    %2687 = vmatprep.subr.mxu0 0.0
    %2688 = vmatpush1.msra.mxu0 0.0
    %2689 = vmatprep.subr.mxu0 0.0
    %2690 = vmatpush1.msra.mxu0 0.0
    %2691 = vmatprep.subr.mxu0 0.0
    %2692 = vmatpush1.msra.mxu0 0.0
    %2693 = vmatprep.subr.mxu0 0.0
    %2694 = vmatpush1.msra.mxu0 0.0
    %2695 = vmatprep.subr.mxu0 0.0
    %2696 = vmatpush1.msra.mxu0 0.0
    %2697 = vmatprep.subr.mxu0 0.0
    %2698 = vmatpush1.msra.mxu0 0.0
    %2699 = vmatprep.subr.mxu0 0.0
    %2700 = vmatpush1.msra.mxu0 0.0
    %2701 = vmatprep.subr.mxu0 0.0
    %2702 = vmatpush1.msra.mxu0 0.0
    %2703 = vmatprep.subr.mxu0 0.0
    %2704 = vmatpush1.msra.mxu0 0.0
    %2705 = vmatprep.subr.mxu0 0.0
    %2706 = vmatpush1.msra.mxu0 0.0
    %2707 = vmatprep.subr.mxu0 0.0
    %2708 = vmatpush1.msra.mxu0 0.0
    %2709 = vmatprep.subr.mxu0 0.0
    %2710 = vmatpush1.msra.mxu0 0.0
    %2711 = vmatprep.subr.mxu0 0.0
    %2712 = vmatpush1.msra.mxu0 0.0
    %2713 = vmatprep.subr.mxu0 0.0
    %2714 = vmatpush1.msra.mxu0 0.0
    %2715 = vmatprep.subr.mxu0 0.0
    %2716 = vmatpush1.msra.mxu0 0.0
    %2717 = vmatprep.subr.mxu0 0.0
    %2718 = vmatpush1.msra.mxu0 0.0
    %2719 = vmatprep.subr.mxu0 0.0
    %2720 = vmatpush1.msra.mxu0 0.0
    %2721 = vmatprep.mubr.f32.mxu0 0.0
    %2722 = vmatmul.mubr.f32.gmra.mrb[0].mxu0 %v2652
    %v2723 = vpop.f32.mrb[0].mxu0
    %v2724 = vadd.f32 0.0, %v2723
    %v2725 = vpop.f32.mrb[0].mxu0
    %2726 = vmatprep.mubr.f32.mxu0 0.0
    %2727 = vmatmul.mubr.f32.gmra.mrb[0].mxu0 %v2655
    %v2728 = vpop.f32.mrb[0].mxu0
    %v2729 = vadd.f32 0.0, %v2728
    %v2730 = vpop.f32.mrb[0].mxu0
    %2731 = vdwg.mxu0
    %v2732 = vmul.f32 %v2564, %v2724
    %v2733 = vmul.f32 %v2565, %v2729
    %v2734 = vpack.c.bf16 %v2733, %v2732
    %v2735 = vpack.c.bf16 %v2202, %v2199
    %v2737 = vsel %vm668, %v2734, 0
    %2739 = vmatprep.subr.bf16.mxu0 0
    %2740 = vmatpush1.bf16.msra.mxu0 %v2735
    %2741 = vmatprep.subr.bf16.mxu0 0
    %2742 = vmatpush1.bf16.msra.mxu0 0
    %2743 = vmatprep.subr.bf16.mxu0 0
    %2744 = vmatpush1.bf16.msra.mxu0 0
    %2745 = vmatprep.subr.bf16.mxu0 0
    %2746 = vmatpush1.bf16.msra.mxu0 0
    %2747 = vmatprep.subr.bf16.mxu0 0
    %2748 = vmatpush1.bf16.msra.mxu0 0
    %2749 = vmatprep.subr.bf16.mxu0 0
    %2750 = vmatpush1.bf16.msra.mxu0 0
    %2751 = vmatprep.subr.bf16.mxu0 0
    %2752 = vmatpush1.bf16.msra.mxu0 0
    %2753 = vmatprep.subr.bf16.mxu0 0
    %2754 = vmatpush1.bf16.msra.mxu0 0
    %2755 = vmatprep.subr.bf16.mxu0 0
    %2756 = vmatpush1.bf16.msra.mxu0 0
    %2757 = vmatprep.subr.bf16.mxu0 0
    %2758 = vmatpush1.bf16.msra.mxu0 0
    %2759 = vmatprep.subr.bf16.mxu0 0
    %2760 = vmatpush1.bf16.msra.mxu0 0
    %2761 = vmatprep.subr.bf16.mxu0 0
    %2762 = vmatpush1.bf16.msra.mxu0 0
    %2763 = vmatprep.subr.bf16.mxu0 0
    %2764 = vmatpush1.bf16.msra.mxu0 0
    %2765 = vmatprep.subr.bf16.mxu0 0
    %2766 = vmatpush1.bf16.msra.mxu0 0
    %2767 = vmatprep.subr.bf16.mxu0 0
    %2768 = vmatpush1.bf16.msra.mxu0 0
    %2769 = vmatprep.subr.bf16.mxu0 0
    %2770 = vmatpush1.bf16.msra.mxu0 0
    %2771 = vmatprep.mubr.bf16.mxu0 0
    %2772 = vmatmul.mubr.bf16.gmra.mrb[0].mxu0 %v2737
    %v2773 = vpop.f32.mrb[0].mxu0
    %v2774 = vadd.f32 0.0, %v2773
    %v2775 = vpop.f32.mrb[0].mxu0
    %v2776 = vpop.f32.mrb[0].mxu0
    %v2777 = vadd.f32 0.0, %v2776
    %v2778 = vpop.f32.mrb[0].mxu0
    %2779 = vdwg.mxu0
    %v2780 = vld [vmem:[%s23] sm:$0x1]
    %v2782 = vlaneseq
    %v2783 = vshrl.u32 %v2782, 7
    %v2784 = vsub.s32 0, %v2783
    %v2785 = vrot.slane %v2780, %v2784
    %v2787 = vmul.f32 %v2774, %v2785
    %v2788 = vmul.f32 %v2777, %v2785
    %v2789 = vld [vmem:[%s24] sm:$0x1]
    %v2791 = vlaneseq
    %v2792 = vshrl.u32 %v2791, 7
    %v2793 = vsub.s32 0, %v2792
    %v2794 = vrot.slane %v2789, %v2793
    %v2796 = vadd.f32 %v2787, %v2794
    %v2797 = vadd.f32 %v2788, %v2794
    %2798 = vst [vmem:[#allocation2] sm:$0xff] %v2796
    %2799 = vst [vmem:[#allocation2 + $0x8] sm:$0xff] %v2797
    // Predicated region
    $region102: #{graph_neural_network_forward.1} parent=1 // pred_check
      _
    $region103: #{graph_neural_network_forward.1} parent=1 // pred_check_branch
      %2801 = sbr.rel (0) target = $region105
    $region104: #{graph_neural_network_forward.1} parent=1 // pred_region
      %s2803 = ssub.s32 256, 256
      %2804 = vsyncadd [#allocation3], %s2803
      %s2805 = sshll.u32 [#allocation2], 4
      %s2806 = int_to_ptr.vmem [resolvable:$true] %s2805
      %2811 = dma.vmem_to_hbm [thread:$0]  %s2806, 256, %s25, [#allocation3], 128, 128, 8
    $region105: #{graph_neural_network_forward.1} parent=1 // pred_fallthru
      _
    // Predicated region
    $region106: #{graph_neural_network_forward.1} parent=1 // pred_check
      _
    $region107: #{graph_neural_network_forward.1} parent=1 // pred_check_branch
      %2813 = sbr.rel (0) target = $region109
    $region108: #{graph_neural_network_forward.1} parent=1 // pred_region
      %2814 = dma.done [#allocation3], 256
    $region109: #{graph_neural_network_forward.1} parent=1 // pred_fallthru
      _
    %2815 = vsyncpa [#allocation3], 1

</llo_original>
